<compile_context>
chip_gen: v7x
topology: tpu7x:2x2x1
jax: 0.10.0
libtpu: 0.0.40
codegen_flags: <defaults>
</compile_context>

<pallas_src>
import functools
import math

import jax
import jax.numpy as jnp
from jax.experimental import pallas as pl
from jax.experimental.pallas import tpu as pltpu

LN_EPS = 1e-12          # DistilBERT LayerNorm eps
CLS_PAD = 128           # lane-dense classifier output width
MASK_NEG = -1e9


def _gelu_tanh(x):
    # TODO(synk): HF DistilBERT uses exact erf-GELU; the tanh approximation is
    # kept for a guaranteed Mosaic lowering (EUP tanh).  Error is ~1e-3.
    c = math.sqrt(2.0 / math.pi)
    return 0.5 * x * (1.0 + jnp.tanh(c * (x + 0.044715 * x * x * x)))


def _layernorm(h, g, b):
    mean = jnp.mean(h, axis=-1, keepdims=True)
    var = jnp.mean(jnp.square(h - mean), axis=-1, keepdims=True)
    return (h - mean) * jax.lax.rsqrt(var + LN_EPS) * g + b


# --------------------------- fused forward kernel --------------------------- #

def _fused_forward_kernel(x_ref, bias_ref, emb_g_ref, emb_b_ref, feat_ref,
                          wqkv_ref, bqkv_ref, wo_ref, bo_ref,
                          ln1g_ref, ln1b_ref, w1_ref, b1_ref, w2_ref, b2_ref,
                          ln2g_ref, ln2b_ref,
                          wf1h_ref, wf1f_ref, bf1_ref, wf2_ref, bf2_ref,
                          wc_ref, bc_ref, o_ref,
                          *, B, S, H, n_heads, n_layers):
    dh = H // n_heads

    # ---- embeddings LayerNorm ----
    x = _layernorm(x_ref[...], emb_g_ref[...], emb_b_ref[...])          # (T, H)
    # block-diagonal additive attention bias (cross-batch & padded keys = -1e9)
    bias = bias_ref[...]                                                 # (T, T)

    for l in range(n_layers):
        wqkv = wqkv_ref[l]                                               # (H, 3H)
        bqkv = bqkv_ref[l]                                               # (1, 3H)
        wo = wo_ref[l]                                                   # (H, H)
        bo = bo_ref[l]                                                   # (1, H)

        # fused Q|K|V projection (Q pre-scaled by 1/sqrt(dh) at pack time)
        qkv = jnp.dot(x, wqkv, preferred_element_type=jnp.float32) + bqkv  # (T, 3H)

        # block-diagonal attention per head; head-merge folded into Wo rows
        attn = bo
        for h in range(n_heads):
            q = qkv[:, h * dh:(h + 1) * dh]                              # (T, dh)
            k = qkv[:, H + h * dh:H + (h + 1) * dh]                      # (T, dh)
            v = qkv[:, 2 * H + h * dh:2 * H + (h + 1) * dh]              # (T, dh)

            s = jax.lax.dot_general(q, k, (((1,), (1,)), ((), ())),
                                    preferred_element_type=jnp.float32)  # (T, T)
            s = s + bias
            m = jnp.max(s, axis=-1, keepdims=True)
            p = jnp.exp(s - m)
            p = p * pl.reciprocal(jnp.sum(p, axis=-1, keepdims=True),
                                  approx=True)
            ctx = jnp.dot(p, v, preferred_element_type=jnp.float32)      # (T, dh)
            attn = attn + jnp.dot(ctx, wo[h * dh:(h + 1) * dh, :],
                                  preferred_element_type=jnp.float32)    # (T, H)

        # residual + sa_layer_norm (fused)
        x = _layernorm(attn + x, ln1g_ref[l], ln1b_ref[l])

        # FFN: W1 + GELU, W2, residual + output_layer_norm (fused)
        hdn = _gelu_tanh(jnp.dot(x, w1_ref[l],
                                 preferred_element_type=jnp.float32) + b1_ref[l])
        ffn_out = jnp.dot(hdn, w2_ref[l],
                          preferred_element_type=jnp.float32) + b2_ref[l]
        x = _layernorm(ffn_out + x, ln2g_ref[l], ln2b_ref[l])

    # ---- head: pooled [CLS] rows, split-Wf1 feature fusion, classifier ----
    pooled = x.reshape(B, S, H)[:, 0, :]                                 # (B, H)
    f = jnp.dot(pooled, wf1h_ref[...], preferred_element_type=jnp.float32)
    f = f + jnp.dot(feat_ref[...], wf1f_ref[...],
                    preferred_element_type=jnp.float32)
    f = jnp.maximum(f + bf1_ref[...], 0.0)                                # (B, 256)
    f = jnp.maximum(jnp.dot(f, wf2_ref[...],
                            preferred_element_type=jnp.float32) + bf2_ref[...],
                    0.0)                                                  # (B, 128)
    # lane-padded classifier output (B, 128); real logits are the first columns
    o_ref[...] = jnp.dot(f, wc_ref[...],
                         preferred_element_type=jnp.float32) + bc_ref[...]


# ------------------------- deterministic parameters ------------------------- #

def init_params(key, *, vocab=100, max_pos=16, hidden=32, n_layers=2,
                n_heads=2, ffn=64, num_features=5, num_classes=3):
    keys = iter(jax.random.split(key, 64 + 16 * n_layers))

    def dense(shape):
        return jax.random.normal(next(keys), shape, jnp.float32) * 0.02

    params = {
        "word_emb": dense((vocab, hidden)),
        "pos_emb": dense((max_pos, hidden)),
        "emb_ln_g": jnp.ones((hidden,), jnp.float32),
        "emb_ln_b": jnp.zeros((hidden,), jnp.float32),
        "layers": [],
        # fusion MLP: Linear(hidden+F, 256) -> ReLU -> Linear(256,128) -> ReLU
        "Wf1": dense((hidden + num_features, 256)),
        "bf1": jnp.zeros((256,), jnp.float32),
        "Wf2": dense((256, 128)),
        "bf2": jnp.zeros((128,), jnp.float32),
        # classifier Linear(128, num_classes)
        "Wc": dense((128, num_classes)),
        "bc": jnp.zeros((num_classes,), jnp.float32),
    }
    for _ in range(n_layers):
        params["layers"].append({
            "Wq": dense((hidden, hidden)), "bq": jnp.zeros((hidden,), jnp.float32),
            "Wk": dense((hidden, hidden)), "bk": jnp.zeros((hidden,), jnp.float32),
            "Wv": dense((hidden, hidden)), "bv": jnp.zeros((hidden,), jnp.float32),
            "Wo": dense((hidden, hidden)), "bo": jnp.zeros((hidden,), jnp.float32),
            "ln1_g": jnp.ones((hidden,), jnp.float32),
            "ln1_b": jnp.zeros((hidden,), jnp.float32),
            "W1": dense((hidden, ffn)), "b1": jnp.zeros((ffn,), jnp.float32),
            "W2": dense((ffn, hidden)), "b2": jnp.zeros((hidden,), jnp.float32),
            "ln2_g": jnp.ones((hidden,), jnp.float32),
            "ln2_b": jnp.zeros((hidden,), jnp.float32),
        })
    return params


def pack_params(p, *, num_classes, feat_pad, n_heads, cls_pad=CLS_PAD):
    """One-time packing: stacked per-layer weights, fused QKV with 1/sqrt(dh)
    folded into the Q columns, (1,N) biases, split/padded Wf1, padded Wc."""
    H = p["word_emb"].shape[1]
    dh = H // n_heads
    scale = 1.0 / math.sqrt(dh)
    num_features = p["Wf1"].shape[0] - H

    def stack(fn):
        return jnp.stack([fn(l) for l in p["layers"]], axis=0)

    packed = {
        "word_emb": p["word_emb"],
        "pos_emb": p["pos_emb"],
        "emb_ln_g": p["emb_ln_g"].reshape(1, H),
        "emb_ln_b": p["emb_ln_b"].reshape(1, H),
        # ---- stacked transformer weights: ~12 DMAs instead of 12*L ----
        "Wqkv": stack(lambda l: jnp.concatenate(
            [l["Wq"] * scale, l["Wk"], l["Wv"]], axis=1)),             # (L,H,3H)
        "bqkv": stack(lambda l: jnp.concatenate(
            [l["bq"] * scale, l["bk"], l["bv"]]).reshape(1, 3 * H)),   # (L,1,3H)
        "Wo": stack(lambda l: l["Wo"]),                                 # (L,H,H)
        "bo": stack(lambda l: l["bo"].reshape(1, H)),
        "ln1_g": stack(lambda l: l["ln1_g"].reshape(1, H)),
        "ln1_b": stack(lambda l: l["ln1_b"].reshape(1, H)),
        "W1": stack(lambda l: l["W1"]),                                 # (L,H,FFN)
        "b1": stack(lambda l: l["b1"].reshape(1, -1)),
        "W2": stack(lambda l: l["W2"]),                                 # (L,FFN,H)
        "b2": stack(lambda l: l["b2"].reshape(1, H)),
        "ln2_g": stack(lambda l: l["ln2_g"].reshape(1, H)),
        "ln2_b": stack(lambda l: l["ln2_b"].reshape(1, H)),
        # ---- head ----
        "Wf1_h": p["Wf1"][:H],
        "Wf1_f": jnp.pad(p["Wf1"][H:], ((0, feat_pad - num_features), (0, 0))),
        "bf1": p["bf1"].reshape(1, -1),
        "Wf2": p["Wf2"],
        "bf2": p["bf2"].reshape(1, -1),
        "Wc": jnp.pad(p["Wc"], ((0, 0), (0, cls_pad - num_classes))),
        "bc": jnp.pad(p["bc"], (0, cls_pad - num_classes)).reshape(1, cls_pad),
    }
    return packed


# ---------------------------------- forward --------------------------------- #

def distilbert_with_features(packed, input_ids, attention_mask, features, *, n_heads):
    B, S = input_ids.shape
    H = packed["word_emb"].shape[1]
    n_layers = packed["Wqkv"].shape[0]
    num_feat = features.shape[1]
    feat_pad = packed["Wf1_f"].shape[0]
    cls_pad = packed["Wc"].shape[1]
    T = B * S

    # embedding gather (glue) — LayerNorm happens inside the kernel
    pos_ids = jnp.arange(S)
    emb = packed["word_emb"][input_ids] + packed["pos_emb"][pos_ids][None, :, :]
    x = emb.reshape(T, H).astype(jnp.float32)

    # (T, T) additive attention bias: 0 within-batch for kept keys, -1e9 for
    # padded keys and all cross-batch blocks (block-diagonal batch merge).
    batch_of = jnp.arange(T) // S
    same_batch = batch_of[:, None] == batch_of[None, :]
    key_keep = attention_mask.reshape(T).astype(jnp.float32) > 0.5
    bias = jnp.where(same_batch & key_keep[None, :], 0.0, MASK_NEG)
    bias = bias.astype(jnp.float32)                                      # (T, T)

    feat = jnp.pad(features.astype(jnp.float32),
                   ((0, 0), (0, feat_pad - num_feat)))                   # (B, feat_pad)

    inputs = [x, bias,
              packed["emb_ln_g"], packed["emb_ln_b"], feat,
              packed["Wqkv"], packed["bqkv"], packed["Wo"], packed["bo"],
              packed["ln1_g"], packed["ln1_b"], packed["W1"], packed["b1"],
              packed["W2"], packed["b2"], packed["ln2_g"], packed["ln2_b"],
              packed["Wf1_h"], packed["Wf1_f"], packed["bf1"],
              packed["Wf2"], packed["bf2"], packed["Wc"], packed["bc"]]

    kernel = functools.partial(_fused_forward_kernel, B=B, S=S, H=H,
                               n_heads=n_heads, n_layers=n_layers)
    logits_pad = pl.pallas_call(
        kernel,
        out_shape=jax.ShapeDtypeStruct((B, cls_pad), jnp.float32),
        in_specs=[pl.BlockSpec(memory_space=pltpu.MemorySpace.VMEM)
                  for _ in inputs],
        out_specs=pl.BlockSpec(memory_space=pltpu.MemorySpace.VMEM),
    )(*inputs)
    return logits_pad   # caller slices the real logits


# --------------------------- pure-JAX reference ------------------------------ #

def reference_forward(p, input_ids, attention_mask, features, *, n_heads):
    hp = jax.lax.Precision.HIGHEST
    B, S = input_ids.shape
    H = p["word_emb"].shape[1]
    dh = H // n_heads

    def ln(h, g, b):
        mu = jnp.mean(h, -1, keepdims=True)
        var = jnp.mean(jnp.square(h - mu), -1, keepdims=True)
        return (h - mu) * jax.lax.rsqrt(var + LN_EPS) * g + b

    x = p["word_emb"][input_ids] + p["pos_emb"][jnp.arange(S)][None]
    x = ln(x.astype(jnp.float32), p["emb_ln_g"], p["emb_ln_b"])        # (B,S,H)
    bias = (attention_mask.astype(jnp.float32) - 1.0)[:, None, None, :] * 1e9

    def split(t):
        return t.reshape(B, S, n_heads, dh).transpose(0, 2, 1, 3)

    for lyr in p["layers"]:
        q = jnp.einsum("bsh,hd->bsd", x, lyr["Wq"], precision=hp) + lyr["bq"]
        k = jnp.einsum("bsh,hd->bsd", x, lyr["Wk"], precision=hp) + lyr["bk"]
        v = jnp.einsum("bsh,hd->bsd", x, lyr["Wv"], precision=hp) + lyr["bv"]
        s = jnp.einsum("bnqd,bnkd->bnqk", split(q), split(k),
                       precision=hp) / math.sqrt(dh) + bias
        pr = jax.nn.softmax(s, axis=-1)
        ctx = jnp.einsum("bnqk,bnkd->bnqd", pr, split(v), precision=hp)
        ctx = ctx.transpose(0, 2, 1, 3).reshape(B, S, H)
        attn = jnp.einsum("bsh,hd->bsd", ctx, lyr["Wo"], precision=hp) + lyr["bo"]
        x = ln(attn + x, lyr["ln1_g"], lyr["ln1_b"])
        hdn = _gelu_tanh(jnp.einsum("bsh,hf->bsf", x, lyr["W1"], precision=hp) + lyr["b1"])
        ffn_out = jnp.einsum("bsf,fh->bsh", hdn, lyr["W2"], precision=hp) + lyr["b2"]
        x = ln(ffn_out + x, lyr["ln2_g"], lyr["ln2_b"])

    pooled = x[:, 0]
    combined = jnp.concatenate([pooled, features.astype(jnp.float32)], axis=1)
    f = jax.nn.relu(jnp.dot(combined, p["Wf1"], precision=hp) + p["bf1"])
    f = jax.nn.relu(jnp.dot(f, p["Wf2"], precision=hp) + p["bf2"])
    return jnp.dot(f, p["Wc"], precision=hp) + p["bc"]


# ------------------------------------ main ----------------------------------- #

if __name__ == "__main__":
    B, S = 2, 8
    HIDDEN, N_HEADS, N_LAYERS, FFN = 32, 2, 2, 64
    NUM_FEATURES, NUM_CLASSES, VOCAB = 5, 3, 100

    key = jax.random.PRNGKey(0)
    k_param, k_ids, k_feat = jax.random.split(key, 3)

    raw = init_params(k_param, vocab=VOCAB, max_pos=S, hidden=HIDDEN,
                      n_layers=N_LAYERS, n_heads=N_HEADS, ffn=FFN,
                      num_features=NUM_FEATURES, num_classes=NUM_CLASSES)
    FEAT_PAD = ((NUM_FEATURES + 7) // 8) * 8
    packed = pack_params(raw, num_classes=NUM_CLASSES, feat_pad=FEAT_PAD,
                         n_heads=N_HEADS)

    input_ids = jax.random.randint(k_ids, (B, S), 0, VOCAB, dtype=jnp.int32)
    attention_mask = jnp.ones((B, S), jnp.int32).at[1, -2:].set(0)  # pad 2 tokens
    features = jax.random.normal(k_feat, (B, NUM_FEATURES), jnp.float32)

    fwd = jax.jit(functools.partial(distilbert_with_features, n_heads=N_HEADS))
    logits_pad = jax.block_until_ready(fwd(packed, input_ids, attention_mask, features))
    logits = logits_pad[:, :NUM_CLASSES]

    assert logits.shape == (B, NUM_CLASSES)
    assert bool(jnp.all(jnp.isfinite(logits)))

    ref = reference_forward(raw, input_ids, attention_mask, features, n_heads=N_HEADS)
    max_err = float(jnp.max(jnp.abs(logits - ref)))
    assert max_err < 5e-3, f"max |kernel - reference| = {max_err}"

    print("KERNEL_OK")
</pallas_src>

<mosaic_0001>
module attributes {stable_mosaic.version = 11 : i64} {
  func.func @_fused_forward_kernel(%arg0: memref<16x32xf32, #tpu.memory_space<vmem>>, %arg1: memref<16x16xf32, #tpu.memory_space<vmem>>, %arg2: memref<1x32xf32, #tpu.memory_space<vmem>>, %arg3: memref<1x32xf32, #tpu.memory_space<vmem>>, %arg4: memref<2x8xf32, #tpu.memory_space<vmem>>, %arg5: memref<2x32x96xf32, #tpu.memory_space<vmem>>, %arg6: memref<2x1x96xf32, #tpu.memory_space<vmem>>, %arg7: memref<2x32x32xf32, #tpu.memory_space<vmem>>, %arg8: memref<2x1x32xf32, #tpu.memory_space<vmem>>, %arg9: memref<2x1x32xf32, #tpu.memory_space<vmem>>, %arg10: memref<2x1x32xf32, #tpu.memory_space<vmem>>, %arg11: memref<2x32x64xf32, #tpu.memory_space<vmem>>, %arg12: memref<2x1x64xf32, #tpu.memory_space<vmem>>, %arg13: memref<2x64x32xf32, #tpu.memory_space<vmem>>, %arg14: memref<2x1x32xf32, #tpu.memory_space<vmem>>, %arg15: memref<2x1x32xf32, #tpu.memory_space<vmem>>, %arg16: memref<2x1x32xf32, #tpu.memory_space<vmem>>, %arg17: memref<32x256xf32, #tpu.memory_space<vmem>>, %arg18: memref<8x256xf32, #tpu.memory_space<vmem>>, %arg19: memref<1x256xf32, #tpu.memory_space<vmem>>, %arg20: memref<256x128xf32, #tpu.memory_space<vmem>>, %arg21: memref<1x128xf32, #tpu.memory_space<vmem>>, %arg22: memref<128x128xf32, #tpu.memory_space<vmem>>, %arg23: memref<1x128xf32, #tpu.memory_space<vmem>>, %arg24: memref<2x128xf32, #tpu.memory_space<vmem>>) attributes {dimension_semantics = [], scalar_prefetch = 0 : i64, scratch_operands = 0 : i64, tpu.core_type = #tpu.core_type<tc>} {
    %c0 = arith.constant 0 : index
    %c0_0 = arith.constant 0 : index
    %0 = vector.load %arg0[%c0, %c0_0] : memref<16x32xf32, #tpu.memory_space<vmem>>, vector<16x32xf32>
    %c0_1 = arith.constant 0 : index
    %c0_2 = arith.constant 0 : index
    %1 = vector.load %arg2[%c0_1, %c0_2] : memref<1x32xf32, #tpu.memory_space<vmem>>, vector<1x32xf32>
    %c0_3 = arith.constant 0 : index
    %c0_4 = arith.constant 0 : index
    %2 = vector.load %arg3[%c0_3, %c0_4] : memref<1x32xf32, #tpu.memory_space<vmem>>, vector<1x32xf32>
    %cst = arith.constant dense<0.000000e+00> : vector<16xf32>
    %3 = vector.multi_reduction <add>, %0, %cst [1] : vector<16x32xf32> to vector<16xf32>
    %4 = vector.shape_cast %3 : vector<16xf32> to vector<16x1xf32>
    %cst_5 = arith.constant 3.200000e+01 : f32
    %5 = vector.broadcast %cst_5 : f32 to vector<16x1xf32>
    %6 = arith.divf %4, %5 : vector<16x1xf32>
    %7 = vector.broadcast %6 : vector<16x1xf32> to vector<16x32xf32>
    %8 = arith.subf %0, %7 : vector<16x32xf32>
    %9 = arith.mulf %8, %8 : vector<16x32xf32>
    %cst_6 = arith.constant dense<0.000000e+00> : vector<16xf32>
    %10 = vector.multi_reduction <add>, %9, %cst_6 [1] : vector<16x32xf32> to vector<16xf32>
    %11 = vector.shape_cast %10 : vector<16xf32> to vector<16x1xf32>
    %cst_7 = arith.constant 3.200000e+01 : f32
    %12 = vector.broadcast %cst_7 : f32 to vector<16x1xf32>
    %13 = arith.divf %11, %12 : vector<16x1xf32>
    %14 = vector.broadcast %6 : vector<16x1xf32> to vector<16x32xf32>
    %15 = arith.subf %0, %14 : vector<16x32xf32>
    %cst_8 = arith.constant 9.99999996E-13 : f32
    %16 = vector.broadcast %cst_8 : f32 to vector<16x1xf32>
    %17 = arith.addf %13, %16 : vector<16x1xf32>
    %18 = math.rsqrt %17 : vector<16x1xf32>
    %19 = vector.broadcast %18 : vector<16x1xf32> to vector<16x32xf32>
    %20 = arith.mulf %15, %19 : vector<16x32xf32>
    %21 = vector.broadcast %1 : vector<1x32xf32> to vector<16x32xf32>
    %22 = arith.mulf %20, %21 : vector<16x32xf32>
    %23 = vector.broadcast %2 : vector<1x32xf32> to vector<16x32xf32>
    %24 = arith.addf %22, %23 : vector<16x32xf32>
    %c0_9 = arith.constant 0 : index
    %c0_10 = arith.constant 0 : index
    %25 = vector.load %arg1[%c0_9, %c0_10] : memref<16x16xf32, #tpu.memory_space<vmem>>, vector<16x16xf32>
    %c0_11 = arith.constant 0 : index
    %c0_12 = arith.constant 0 : index
    %c0_13 = arith.constant 0 : index
    %26 = vector.load %arg5[%c0_11, %c0_12, %c0_13] : memref<2x32x96xf32, #tpu.memory_space<vmem>>, vector<1x32x96xf32>
    %27 = vector.shape_cast %26 : vector<1x32x96xf32> to vector<32x96xf32>
    %c0_14 = arith.constant 0 : index
    %c0_15 = arith.constant 0 : index
    %c0_16 = arith.constant 0 : index
    %28 = vector.load %arg6[%c0_14, %c0_15, %c0_16] : memref<2x1x96xf32, #tpu.memory_space<vmem>>, vector<1x1x96xf32>
    %29 = vector.shape_cast %28 : vector<1x1x96xf32> to vector<1x96xf32>
    %c0_17 = arith.constant 0 : index
    %c0_18 = arith.constant 0 : index
    %c0_19 = arith.constant 0 : index
    %30 = vector.load %arg7[%c0_17, %c0_18, %c0_19] : memref<2x32x32xf32, #tpu.memory_space<vmem>>, vector<1x32x32xf32>
    %31 = vector.shape_cast %30 : vector<1x32x32xf32> to vector<32x32xf32>
    %c0_20 = arith.constant 0 : index
    %c0_21 = arith.constant 0 : index
    %c0_22 = arith.constant 0 : index
    %32 = vector.load %arg8[%c0_20, %c0_21, %c0_22] : memref<2x1x32xf32, #tpu.memory_space<vmem>>, vector<1x1x32xf32>
    %33 = vector.shape_cast %32 : vector<1x1x32xf32> to vector<1x32xf32>
    %cst_23 = arith.constant dense<0.000000e+00> : vector<16x96xf32>
    %34 = tpu.matmul %24, %27, %cst_23 {dimension_numbers = #tpu.dot_dimension_numbers<[1], [0], [0], [1], [0, 0, 1, 1], [], []>} : vector<16x32xf32>, vector<32x96xf32>, vector<16x96xf32> -> vector<16x96xf32>
    %35 = vector.broadcast %29 : vector<1x96xf32> to vector<16x96xf32>
    %36 = arith.addf %34, %35 : vector<16x96xf32>
    %37 = vector.extract_strided_slice %36 {offsets = [0, 0], sizes = [16, 16], strides = [1, 1]} : vector<16x96xf32> to vector<16x16xf32>
    %38 = vector.extract_strided_slice %36 {offsets = [0, 32], sizes = [16, 16], strides = [1, 1]} : vector<16x96xf32> to vector<16x16xf32>
    %39 = vector.extract_strided_slice %36 {offsets = [0, 64], sizes = [16, 16], strides = [1, 1]} : vector<16x96xf32> to vector<16x16xf32>
    %cst_24 = arith.constant dense<0.000000e+00> : vector<16x16xf32>
    %40 = tpu.matmul %37, %38, %cst_24 {dimension_numbers = #tpu.dot_dimension_numbers<[1], [1], [0], [0], [0, 0, 1, 0], [], []>} : vector<16x16xf32>, vector<16x16xf32>, vector<16x16xf32> -> vector<16x16xf32>
    %41 = arith.addf %40, %25 : vector<16x16xf32>
    %cst_25 = arith.constant dense<0xFF800000> : vector<16xf32>
    %42 = vector.multi_reduction <maximumf>, %41, %cst_25 [1] : vector<16x16xf32> to vector<16xf32>
    %43 = vector.shape_cast %42 : vector<16xf32> to vector<16x1xf32>
    %44 = vector.broadcast %43 : vector<16x1xf32> to vector<16x16xf32>
    %45 = arith.subf %41, %44 : vector<16x16xf32>
    %46 = math.exp %45 : vector<16x16xf32>
    %cst_26 = arith.constant dense<0.000000e+00> : vector<16xf32>
    %47 = vector.multi_reduction <add>, %46, %cst_26 [1] : vector<16x16xf32> to vector<16xf32>
    %48 = vector.shape_cast %47 : vector<16xf32> to vector<16x1xf32>
    %49 = tpu.reciprocal %48 {approx = true} : vector<16x1xf32> -> vector<16x1xf32>
    %50 = vector.broadcast %49 : vector<16x1xf32> to vector<16x16xf32>
    %51 = arith.mulf %46, %50 : vector<16x16xf32>
    %cst_27 = arith.constant dense<0.000000e+00> : vector<16x16xf32>
    %52 = tpu.matmul %51, %39, %cst_27 {dimension_numbers = #tpu.dot_dimension_numbers<[1], [0], [0], [1], [0, 0, 1, 1], [], []>} : vector<16x16xf32>, vector<16x16xf32>, vector<16x16xf32> -> vector<16x16xf32>
    %53 = vector.extract_strided_slice %31 {offsets = [0, 0], sizes = [16, 32], strides = [1, 1]} : vector<32x32xf32> to vector<16x32xf32>
    %cst_28 = arith.constant dense<0.000000e+00> : vector<16x32xf32>
    %54 = tpu.matmul %52, %53, %cst_28 {dimension_numbers = #tpu.dot_dimension_numbers<[1], [0], [0], [1], [0, 0, 1, 1], [], []>} : vector<16x16xf32>, vector<16x32xf32>, vector<16x32xf32> -> vector<16x32xf32>
    %55 = vector.broadcast %33 : vector<1x32xf32> to vector<16x32xf32>
    %56 = arith.addf %55, %54 : vector<16x32xf32>
    %57 = vector.extract_strided_slice %36 {offsets = [0, 16], sizes = [16, 16], strides = [1, 1]} : vector<16x96xf32> to vector<16x16xf32>
    %58 = vector.extract_strided_slice %36 {offsets = [0, 48], sizes = [16, 16], strides = [1, 1]} : vector<16x96xf32> to vector<16x16xf32>
    %59 = vector.extract_strided_slice %36 {offsets = [0, 80], sizes = [16, 16], strides = [1, 1]} : vector<16x96xf32> to vector<16x16xf32>
    %cst_29 = arith.constant dense<0.000000e+00> : vector<16x16xf32>
    %60 = tpu.matmul %57, %58, %cst_29 {dimension_numbers = #tpu.dot_dimension_numbers<[1], [1], [0], [0], [0, 0, 1, 0], [], []>} : vector<16x16xf32>, vector<16x16xf32>, vector<16x16xf32> -> vector<16x16xf32>
    %61 = arith.addf %60, %25 : vector<16x16xf32>
    %cst_30 = arith.constant dense<0xFF800000> : vector<16xf32>
    %62 = vector.multi_reduction <maximumf>, %61, %cst_30 [1] : vector<16x16xf32> to vector<16xf32>
    %63 = vector.shape_cast %62 : vector<16xf32> to vector<16x1xf32>
    %64 = vector.broadcast %63 : vector<16x1xf32> to vector<16x16xf32>
    %65 = arith.subf %61, %64 : vector<16x16xf32>
    %66 = math.exp %65 : vector<16x16xf32>
    %cst_31 = arith.constant dense<0.000000e+00> : vector<16xf32>
    %67 = vector.multi_reduction <add>, %66, %cst_31 [1] : vector<16x16xf32> to vector<16xf32>
    %68 = vector.shape_cast %67 : vector<16xf32> to vector<16x1xf32>
    %69 = tpu.reciprocal %68 {approx = true} : vector<16x1xf32> -> vector<16x1xf32>
    %70 = vector.broadcast %69 : vector<16x1xf32> to vector<16x16xf32>
    %71 = arith.mulf %66, %70 : vector<16x16xf32>
    %cst_32 = arith.constant dense<0.000000e+00> : vector<16x16xf32>
    %72 = tpu.matmul %71, %59, %cst_32 {dimension_numbers = #tpu.dot_dimension_numbers<[1], [0], [0], [1], [0, 0, 1, 1], [], []>} : vector<16x16xf32>, vector<16x16xf32>, vector<16x16xf32> -> vector<16x16xf32>
    %73 = vector.extract_strided_slice %31 {offsets = [16, 0], sizes = [16, 32], strides = [1, 1]} : vector<32x32xf32> to vector<16x32xf32>
    %cst_33 = arith.constant dense<0.000000e+00> : vector<16x32xf32>
    %74 = tpu.matmul %72, %73, %cst_33 {dimension_numbers = #tpu.dot_dimension_numbers<[1], [0], [0], [1], [0, 0, 1, 1], [], []>} : vector<16x16xf32>, vector<16x32xf32>, vector<16x32xf32> -> vector<16x32xf32>
    %75 = arith.addf %56, %74 : vector<16x32xf32>
    %76 = arith.addf %75, %24 : vector<16x32xf32>
    %c0_34 = arith.constant 0 : index
    %c0_35 = arith.constant 0 : index
    %c0_36 = arith.constant 0 : index
    %77 = vector.load %arg9[%c0_34, %c0_35, %c0_36] : memref<2x1x32xf32, #tpu.memory_space<vmem>>, vector<1x1x32xf32>
    %78 = vector.shape_cast %77 : vector<1x1x32xf32> to vector<1x32xf32>
    %c0_37 = arith.constant 0 : index
    %c0_38 = arith.constant 0 : index
    %c0_39 = arith.constant 0 : index
    %79 = vector.load %arg10[%c0_37, %c0_38, %c0_39] : memref<2x1x32xf32, #tpu.memory_space<vmem>>, vector<1x1x32xf32>
    %80 = vector.shape_cast %79 : vector<1x1x32xf32> to vector<1x32xf32>
    %cst_40 = arith.constant dense<0.000000e+00> : vector<16xf32>
    %81 = vector.multi_reduction <add>, %76, %cst_40 [1] : vector<16x32xf32> to vector<16xf32>
    %82 = vector.shape_cast %81 : vector<16xf32> to vector<16x1xf32>
    %cst_41 = arith.constant 3.200000e+01 : f32
    %83 = vector.broadcast %cst_41 : f32 to vector<16x1xf32>
    %84 = arith.divf %82, %83 : vector<16x1xf32>
    %85 = vector.broadcast %84 : vector<16x1xf32> to vector<16x32xf32>
    %86 = arith.subf %76, %85 : vector<16x32xf32>
    %87 = arith.mulf %86, %86 : vector<16x32xf32>
    %cst_42 = arith.constant dense<0.000000e+00> : vector<16xf32>
    %88 = vector.multi_reduction <add>, %87, %cst_42 [1] : vector<16x32xf32> to vector<16xf32>
    %89 = vector.shape_cast %88 : vector<16xf32> to vector<16x1xf32>
    %cst_43 = arith.constant 3.200000e+01 : f32
    %90 = vector.broadcast %cst_43 : f32 to vector<16x1xf32>
    %91 = arith.divf %89, %90 : vector<16x1xf32>
    %92 = vector.broadcast %84 : vector<16x1xf32> to vector<16x32xf32>
    %93 = arith.subf %76, %92 : vector<16x32xf32>
    %cst_44 = arith.constant 9.99999996E-13 : f32
    %94 = vector.broadcast %cst_44 : f32 to vector<16x1xf32>
    %95 = arith.addf %91, %94 : vector<16x1xf32>
    %96 = math.rsqrt %95 : vector<16x1xf32>
    %97 = vector.broadcast %96 : vector<16x1xf32> to vector<16x32xf32>
    %98 = arith.mulf %93, %97 : vector<16x32xf32>
    %99 = vector.broadcast %78 : vector<1x32xf32> to vector<16x32xf32>
    %100 = arith.mulf %98, %99 : vector<16x32xf32>
    %101 = vector.broadcast %80 : vector<1x32xf32> to vector<16x32xf32>
    %102 = arith.addf %100, %101 : vector<16x32xf32>
    %c0_45 = arith.constant 0 : index
    %c0_46 = arith.constant 0 : index
    %c0_47 = arith.constant 0 : index
    %103 = vector.load %arg11[%c0_45, %c0_46, %c0_47] : memref<2x32x64xf32, #tpu.memory_space<vmem>>, vector<1x32x64xf32>
    %104 = vector.shape_cast %103 : vector<1x32x64xf32> to vector<32x64xf32>
    %cst_48 = arith.constant dense<0.000000e+00> : vector<16x64xf32>
    %105 = tpu.matmul %102, %104, %cst_48 {dimension_numbers = #tpu.dot_dimension_numbers<[1], [0], [0], [1], [0, 0, 1, 1], [], []>} : vector<16x32xf32>, vector<32x64xf32>, vector<16x64xf32> -> vector<16x64xf32>
    %c0_49 = arith.constant 0 : index
    %c0_50 = arith.constant 0 : index
    %c0_51 = arith.constant 0 : index
    %106 = vector.load %arg12[%c0_49, %c0_50, %c0_51] : memref<2x1x64xf32, #tpu.memory_space<vmem>>, vector<1x1x64xf32>
    %107 = vector.shape_cast %106 : vector<1x1x64xf32> to vector<1x64xf32>
    %108 = vector.broadcast %107 : vector<1x64xf32> to vector<16x64xf32>
    %109 = arith.addf %105, %108 : vector<16x64xf32>
    %cst_52 = arith.constant 5.000000e-01 : f32
    %110 = vector.broadcast %cst_52 : f32 to vector<16x64xf32>
    %111 = arith.mulf %110, %109 : vector<16x64xf32>
    %cst_53 = arith.constant 4.471500e-02 : f32
    %112 = vector.broadcast %cst_53 : f32 to vector<16x64xf32>
    %113 = arith.mulf %112, %109 : vector<16x64xf32>
    %114 = arith.mulf %113, %109 : vector<16x64xf32>
    %115 = arith.mulf %114, %109 : vector<16x64xf32>
    %116 = arith.addf %109, %115 : vector<16x64xf32>
    %cst_54 = arith.constant 0.797884583 : f32
    %117 = vector.broadcast %cst_54 : f32 to vector<16x64xf32>
    %118 = arith.mulf %117, %116 : vector<16x64xf32>
    %119 = math.tanh %118 : vector<16x64xf32>
    %cst_55 = arith.constant 1.000000e+00 : f32
    %120 = vector.broadcast %cst_55 : f32 to vector<16x64xf32>
    %121 = arith.addf %120, %119 : vector<16x64xf32>
    %122 = arith.mulf %111, %121 : vector<16x64xf32>
    %c0_56 = arith.constant 0 : index
    %c0_57 = arith.constant 0 : index
    %c0_58 = arith.constant 0 : index
    %123 = vector.load %arg13[%c0_56, %c0_57, %c0_58] : memref<2x64x32xf32, #tpu.memory_space<vmem>>, vector<1x64x32xf32>
    %124 = vector.shape_cast %123 : vector<1x64x32xf32> to vector<64x32xf32>
    %cst_59 = arith.constant dense<0.000000e+00> : vector<16x32xf32>
    %125 = tpu.matmul %122, %124, %cst_59 {dimension_numbers = #tpu.dot_dimension_numbers<[1], [0], [0], [1], [0, 0, 1, 1], [], []>} : vector<16x64xf32>, vector<64x32xf32>, vector<16x32xf32> -> vector<16x32xf32>
    %c0_60 = arith.constant 0 : index
    %c0_61 = arith.constant 0 : index
    %c0_62 = arith.constant 0 : index
    %126 = vector.load %arg14[%c0_60, %c0_61, %c0_62] : memref<2x1x32xf32, #tpu.memory_space<vmem>>, vector<1x1x32xf32>
    %127 = vector.shape_cast %126 : vector<1x1x32xf32> to vector<1x32xf32>
    %128 = vector.broadcast %127 : vector<1x32xf32> to vector<16x32xf32>
    %129 = arith.addf %125, %128 : vector<16x32xf32>
    %130 = arith.addf %129, %102 : vector<16x32xf32>
    %c0_63 = arith.constant 0 : index
    %c0_64 = arith.constant 0 : index
    %c0_65 = arith.constant 0 : index
    %131 = vector.load %arg15[%c0_63, %c0_64, %c0_65] : memref<2x1x32xf32, #tpu.memory_space<vmem>>, vector<1x1x32xf32>
    %132 = vector.shape_cast %131 : vector<1x1x32xf32> to vector<1x32xf32>
    %c0_66 = arith.constant 0 : index
    %c0_67 = arith.constant 0 : index
    %c0_68 = arith.constant 0 : index
    %133 = vector.load %arg16[%c0_66, %c0_67, %c0_68] : memref<2x1x32xf32, #tpu.memory_space<vmem>>, vector<1x1x32xf32>
    %134 = vector.shape_cast %133 : vector<1x1x32xf32> to vector<1x32xf32>
    %cst_69 = arith.constant dense<0.000000e+00> : vector<16xf32>
    %135 = vector.multi_reduction <add>, %130, %cst_69 [1] : vector<16x32xf32> to vector<16xf32>
    %136 = vector.shape_cast %135 : vector<16xf32> to vector<16x1xf32>
    %cst_70 = arith.constant 3.200000e+01 : f32
    %137 = vector.broadcast %cst_70 : f32 to vector<16x1xf32>
    %138 = arith.divf %136, %137 : vector<16x1xf32>
    %139 = vector.broadcast %138 : vector<16x1xf32> to vector<16x32xf32>
    %140 = arith.subf %130, %139 : vector<16x32xf32>
    %141 = arith.mulf %140, %140 : vector<16x32xf32>
    %cst_71 = arith.constant dense<0.000000e+00> : vector<16xf32>
    %142 = vector.multi_reduction <add>, %141, %cst_71 [1] : vector<16x32xf32> to vector<16xf32>
    %143 = vector.shape_cast %142 : vector<16xf32> to vector<16x1xf32>
    %cst_72 = arith.constant 3.200000e+01 : f32
    %144 = vector.broadcast %cst_72 : f32 to vector<16x1xf32>
    %145 = arith.divf %143, %144 : vector<16x1xf32>
    %146 = vector.broadcast %138 : vector<16x1xf32> to vector<16x32xf32>
    %147 = arith.subf %130, %146 : vector<16x32xf32>
    %cst_73 = arith.constant 9.99999996E-13 : f32
    %148 = vector.broadcast %cst_73 : f32 to vector<16x1xf32>
    %149 = arith.addf %145, %148 : vector<16x1xf32>
    %150 = math.rsqrt %149 : vector<16x1xf32>
    %151 = vector.broadcast %150 : vector<16x1xf32> to vector<16x32xf32>
    %152 = arith.mulf %147, %151 : vector<16x32xf32>
    %153 = vector.broadcast %132 : vector<1x32xf32> to vector<16x32xf32>
    %154 = arith.mulf %152, %153 : vector<16x32xf32>
    %155 = vector.broadcast %134 : vector<1x32xf32> to vector<16x32xf32>
    %156 = arith.addf %154, %155 : vector<16x32xf32>
    %c1 = arith.constant 1 : index
    %c0_74 = arith.constant 0 : index
    %c0_75 = arith.constant 0 : index
    %157 = vector.load %arg5[%c1, %c0_74, %c0_75] : memref<2x32x96xf32, #tpu.memory_space<vmem>>, vector<1x32x96xf32>
    %158 = vector.shape_cast %157 : vector<1x32x96xf32> to vector<32x96xf32>
    %c1_76 = arith.constant 1 : index
    %c0_77 = arith.constant 0 : index
    %c0_78 = arith.constant 0 : index
    %159 = vector.load %arg6[%c1_76, %c0_77, %c0_78] : memref<2x1x96xf32, #tpu.memory_space<vmem>>, vector<1x1x96xf32>
    %160 = vector.shape_cast %159 : vector<1x1x96xf32> to vector<1x96xf32>
    %c1_79 = arith.constant 1 : index
    %c0_80 = arith.constant 0 : index
    %c0_81 = arith.constant 0 : index
    %161 = vector.load %arg7[%c1_79, %c0_80, %c0_81] : memref<2x32x32xf32, #tpu.memory_space<vmem>>, vector<1x32x32xf32>
    %162 = vector.shape_cast %161 : vector<1x32x32xf32> to vector<32x32xf32>
    %c1_82 = arith.constant 1 : index
    %c0_83 = arith.constant 0 : index
    %c0_84 = arith.constant 0 : index
    %163 = vector.load %arg8[%c1_82, %c0_83, %c0_84] : memref<2x1x32xf32, #tpu.memory_space<vmem>>, vector<1x1x32xf32>
    %164 = vector.shape_cast %163 : vector<1x1x32xf32> to vector<1x32xf32>
    %cst_85 = arith.constant dense<0.000000e+00> : vector<16x96xf32>
    %165 = tpu.matmul %156, %158, %cst_85 {dimension_numbers = #tpu.dot_dimension_numbers<[1], [0], [0], [1], [0, 0, 1, 1], [], []>} : vector<16x32xf32>, vector<32x96xf32>, vector<16x96xf32> -> vector<16x96xf32>
    %166 = vector.broadcast %160 : vector<1x96xf32> to vector<16x96xf32>
    %167 = arith.addf %165, %166 : vector<16x96xf32>
    %168 = vector.extract_strided_slice %167 {offsets = [0, 0], sizes = [16, 16], strides = [1, 1]} : vector<16x96xf32> to vector<16x16xf32>
    %169 = vector.extract_strided_slice %167 {offsets = [0, 32], sizes = [16, 16], strides = [1, 1]} : vector<16x96xf32> to vector<16x16xf32>
    %170 = vector.extract_strided_slice %167 {offsets = [0, 64], sizes = [16, 16], strides = [1, 1]} : vector<16x96xf32> to vector<16x16xf32>
    %cst_86 = arith.constant dense<0.000000e+00> : vector<16x16xf32>
    %171 = tpu.matmul %168, %169, %cst_86 {dimension_numbers = #tpu.dot_dimension_numbers<[1], [1], [0], [0], [0, 0, 1, 0], [], []>} : vector<16x16xf32>, vector<16x16xf32>, vector<16x16xf32> -> vector<16x16xf32>
    %172 = arith.addf %171, %25 : vector<16x16xf32>
    %cst_87 = arith.constant dense<0xFF800000> : vector<16xf32>
    %173 = vector.multi_reduction <maximumf>, %172, %cst_87 [1] : vector<16x16xf32> to vector<16xf32>
    %174 = vector.shape_cast %173 : vector<16xf32> to vector<16x1xf32>
    %175 = vector.broadcast %174 : vector<16x1xf32> to vector<16x16xf32>
    %176 = arith.subf %172, %175 : vector<16x16xf32>
    %177 = math.exp %176 : vector<16x16xf32>
    %cst_88 = arith.constant dense<0.000000e+00> : vector<16xf32>
    %178 = vector.multi_reduction <add>, %177, %cst_88 [1] : vector<16x16xf32> to vector<16xf32>
    %179 = vector.shape_cast %178 : vector<16xf32> to vector<16x1xf32>
    %180 = tpu.reciprocal %179 {approx = true} : vector<16x1xf32> -> vector<16x1xf32>
    %181 = vector.broadcast %180 : vector<16x1xf32> to vector<16x16xf32>
    %182 = arith.mulf %177, %181 : vector<16x16xf32>
    %cst_89 = arith.constant dense<0.000000e+00> : vector<16x16xf32>
    %183 = tpu.matmul %182, %170, %cst_89 {dimension_numbers = #tpu.dot_dimension_numbers<[1], [0], [0], [1], [0, 0, 1, 1], [], []>} : vector<16x16xf32>, vector<16x16xf32>, vector<16x16xf32> -> vector<16x16xf32>
    %184 = vector.extract_strided_slice %162 {offsets = [0, 0], sizes = [16, 32], strides = [1, 1]} : vector<32x32xf32> to vector<16x32xf32>
    %cst_90 = arith.constant dense<0.000000e+00> : vector<16x32xf32>
    %185 = tpu.matmul %183, %184, %cst_90 {dimension_numbers = #tpu.dot_dimension_numbers<[1], [0], [0], [1], [0, 0, 1, 1], [], []>} : vector<16x16xf32>, vector<16x32xf32>, vector<16x32xf32> -> vector<16x32xf32>
    %186 = vector.broadcast %164 : vector<1x32xf32> to vector<16x32xf32>
    %187 = arith.addf %186, %185 : vector<16x32xf32>
    %188 = vector.extract_strided_slice %167 {offsets = [0, 16], sizes = [16, 16], strides = [1, 1]} : vector<16x96xf32> to vector<16x16xf32>
    %189 = vector.extract_strided_slice %167 {offsets = [0, 48], sizes = [16, 16], strides = [1, 1]} : vector<16x96xf32> to vector<16x16xf32>
    %190 = vector.extract_strided_slice %167 {offsets = [0, 80], sizes = [16, 16], strides = [1, 1]} : vector<16x96xf32> to vector<16x16xf32>
    %cst_91 = arith.constant dense<0.000000e+00> : vector<16x16xf32>
    %191 = tpu.matmul %188, %189, %cst_91 {dimension_numbers = #tpu.dot_dimension_numbers<[1], [1], [0], [0], [0, 0, 1, 0], [], []>} : vector<16x16xf32>, vector<16x16xf32>, vector<16x16xf32> -> vector<16x16xf32>
    %192 = arith.addf %191, %25 : vector<16x16xf32>
    %cst_92 = arith.constant dense<0xFF800000> : vector<16xf32>
    %193 = vector.multi_reduction <maximumf>, %192, %cst_92 [1] : vector<16x16xf32> to vector<16xf32>
    %194 = vector.shape_cast %193 : vector<16xf32> to vector<16x1xf32>
    %195 = vector.broadcast %194 : vector<16x1xf32> to vector<16x16xf32>
    %196 = arith.subf %192, %195 : vector<16x16xf32>
    %197 = math.exp %196 : vector<16x16xf32>
    %cst_93 = arith.constant dense<0.000000e+00> : vector<16xf32>
    %198 = vector.multi_reduction <add>, %197, %cst_93 [1] : vector<16x16xf32> to vector<16xf32>
    %199 = vector.shape_cast %198 : vector<16xf32> to vector<16x1xf32>
    %200 = tpu.reciprocal %199 {approx = true} : vector<16x1xf32> -> vector<16x1xf32>
    %201 = vector.broadcast %200 : vector<16x1xf32> to vector<16x16xf32>
    %202 = arith.mulf %197, %201 : vector<16x16xf32>
    %cst_94 = arith.constant dense<0.000000e+00> : vector<16x16xf32>
    %203 = tpu.matmul %202, %190, %cst_94 {dimension_numbers = #tpu.dot_dimension_numbers<[1], [0], [0], [1], [0, 0, 1, 1], [], []>} : vector<16x16xf32>, vector<16x16xf32>, vector<16x16xf32> -> vector<16x16xf32>
    %204 = vector.extract_strided_slice %162 {offsets = [16, 0], sizes = [16, 32], strides = [1, 1]} : vector<32x32xf32> to vector<16x32xf32>
    %cst_95 = arith.constant dense<0.000000e+00> : vector<16x32xf32>
    %205 = tpu.matmul %203, %204, %cst_95 {dimension_numbers = #tpu.dot_dimension_numbers<[1], [0], [0], [1], [0, 0, 1, 1], [], []>} : vector<16x16xf32>, vector<16x32xf32>, vector<16x32xf32> -> vector<16x32xf32>
    %206 = arith.addf %187, %205 : vector<16x32xf32>
    %207 = arith.addf %206, %156 : vector<16x32xf32>
    %c1_96 = arith.constant 1 : index
    %c0_97 = arith.constant 0 : index
    %c0_98 = arith.constant 0 : index
    %208 = vector.load %arg9[%c1_96, %c0_97, %c0_98] : memref<2x1x32xf32, #tpu.memory_space<vmem>>, vector<1x1x32xf32>
    %209 = vector.shape_cast %208 : vector<1x1x32xf32> to vector<1x32xf32>
    %c1_99 = arith.constant 1 : index
    %c0_100 = arith.constant 0 : index
    %c0_101 = arith.constant 0 : index
    %210 = vector.load %arg10[%c1_99, %c0_100, %c0_101] : memref<2x1x32xf32, #tpu.memory_space<vmem>>, vector<1x1x32xf32>
    %211 = vector.shape_cast %210 : vector<1x1x32xf32> to vector<1x32xf32>
    %cst_102 = arith.constant dense<0.000000e+00> : vector<16xf32>
    %212 = vector.multi_reduction <add>, %207, %cst_102 [1] : vector<16x32xf32> to vector<16xf32>
    %213 = vector.shape_cast %212 : vector<16xf32> to vector<16x1xf32>
    %cst_103 = arith.constant 3.200000e+01 : f32
    %214 = vector.broadcast %cst_103 : f32 to vector<16x1xf32>
    %215 = arith.divf %213, %214 : vector<16x1xf32>
    %216 = vector.broadcast %215 : vector<16x1xf32> to vector<16x32xf32>
    %217 = arith.subf %207, %216 : vector<16x32xf32>
    %218 = arith.mulf %217, %217 : vector<16x32xf32>
    %cst_104 = arith.constant dense<0.000000e+00> : vector<16xf32>
    %219 = vector.multi_reduction <add>, %218, %cst_104 [1] : vector<16x32xf32> to vector<16xf32>
    %220 = vector.shape_cast %219 : vector<16xf32> to vector<16x1xf32>
    %cst_105 = arith.constant 3.200000e+01 : f32
    %221 = vector.broadcast %cst_105 : f32 to vector<16x1xf32>
    %222 = arith.divf %220, %221 : vector<16x1xf32>
    %223 = vector.broadcast %215 : vector<16x1xf32> to vector<16x32xf32>
    %224 = arith.subf %207, %223 : vector<16x32xf32>
    %cst_106 = arith.constant 9.99999996E-13 : f32
    %225 = vector.broadcast %cst_106 : f32 to vector<16x1xf32>
    %226 = arith.addf %222, %225 : vector<16x1xf32>
    %227 = math.rsqrt %226 : vector<16x1xf32>
    %228 = vector.broadcast %227 : vector<16x1xf32> to vector<16x32xf32>
    %229 = arith.mulf %224, %228 : vector<16x32xf32>
    %230 = vector.broadcast %209 : vector<1x32xf32> to vector<16x32xf32>
    %231 = arith.mulf %229, %230 : vector<16x32xf32>
    %232 = vector.broadcast %211 : vector<1x32xf32> to vector<16x32xf32>
    %233 = arith.addf %231, %232 : vector<16x32xf32>
    %c1_107 = arith.constant 1 : index
    %c0_108 = arith.constant 0 : index
    %c0_109 = arith.constant 0 : index
    %234 = vector.load %arg11[%c1_107, %c0_108, %c0_109] : memref<2x32x64xf32, #tpu.memory_space<vmem>>, vector<1x32x64xf32>
    %235 = vector.shape_cast %234 : vector<1x32x64xf32> to vector<32x64xf32>
    %cst_110 = arith.constant dense<0.000000e+00> : vector<16x64xf32>
    %236 = tpu.matmul %233, %235, %cst_110 {dimension_numbers = #tpu.dot_dimension_numbers<[1], [0], [0], [1], [0, 0, 1, 1], [], []>} : vector<16x32xf32>, vector<32x64xf32>, vector<16x64xf32> -> vector<16x64xf32>
    %c1_111 = arith.constant 1 : index
    %c0_112 = arith.constant 0 : index
    %c0_113 = arith.constant 0 : index
    %237 = vector.load %arg12[%c1_111, %c0_112, %c0_113] : memref<2x1x64xf32, #tpu.memory_space<vmem>>, vector<1x1x64xf32>
    %238 = vector.shape_cast %237 : vector<1x1x64xf32> to vector<1x64xf32>
    %239 = vector.broadcast %238 : vector<1x64xf32> to vector<16x64xf32>
    %240 = arith.addf %236, %239 : vector<16x64xf32>
    %cst_114 = arith.constant 5.000000e-01 : f32
    %241 = vector.broadcast %cst_114 : f32 to vector<16x64xf32>
    %242 = arith.mulf %241, %240 : vector<16x64xf32>
    %cst_115 = arith.constant 4.471500e-02 : f32
    %243 = vector.broadcast %cst_115 : f32 to vector<16x64xf32>
    %244 = arith.mulf %243, %240 : vector<16x64xf32>
    %245 = arith.mulf %244, %240 : vector<16x64xf32>
    %246 = arith.mulf %245, %240 : vector<16x64xf32>
    %247 = arith.addf %240, %246 : vector<16x64xf32>
    %cst_116 = arith.constant 0.797884583 : f32
    %248 = vector.broadcast %cst_116 : f32 to vector<16x64xf32>
    %249 = arith.mulf %248, %247 : vector<16x64xf32>
    %250 = math.tanh %249 : vector<16x64xf32>
    %cst_117 = arith.constant 1.000000e+00 : f32
    %251 = vector.broadcast %cst_117 : f32 to vector<16x64xf32>
    %252 = arith.addf %251, %250 : vector<16x64xf32>
    %253 = arith.mulf %242, %252 : vector<16x64xf32>
    %c1_118 = arith.constant 1 : index
    %c0_119 = arith.constant 0 : index
    %c0_120 = arith.constant 0 : index
    %254 = vector.load %arg13[%c1_118, %c0_119, %c0_120] : memref<2x64x32xf32, #tpu.memory_space<vmem>>, vector<1x64x32xf32>
    %255 = vector.shape_cast %254 : vector<1x64x32xf32> to vector<64x32xf32>
    %cst_121 = arith.constant dense<0.000000e+00> : vector<16x32xf32>
    %256 = tpu.matmul %253, %255, %cst_121 {dimension_numbers = #tpu.dot_dimension_numbers<[1], [0], [0], [1], [0, 0, 1, 1], [], []>} : vector<16x64xf32>, vector<64x32xf32>, vector<16x32xf32> -> vector<16x32xf32>
    %c1_122 = arith.constant 1 : index
    %c0_123 = arith.constant 0 : index
    %c0_124 = arith.constant 0 : index
    %257 = vector.load %arg14[%c1_122, %c0_123, %c0_124] : memref<2x1x32xf32, #tpu.memory_space<vmem>>, vector<1x1x32xf32>
    %258 = vector.shape_cast %257 : vector<1x1x32xf32> to vector<1x32xf32>
    %259 = vector.broadcast %258 : vector<1x32xf32> to vector<16x32xf32>
    %260 = arith.addf %256, %259 : vector<16x32xf32>
    %261 = arith.addf %260, %233 : vector<16x32xf32>
    %c1_125 = arith.constant 1 : index
    %c0_126 = arith.constant 0 : index
    %c0_127 = arith.constant 0 : index
    %262 = vector.load %arg15[%c1_125, %c0_126, %c0_127] : memref<2x1x32xf32, #tpu.memory_space<vmem>>, vector<1x1x32xf32>
    %263 = vector.shape_cast %262 : vector<1x1x32xf32> to vector<1x32xf32>
    %c1_128 = arith.constant 1 : index
    %c0_129 = arith.constant 0 : index
    %c0_130 = arith.constant 0 : index
    %264 = vector.load %arg16[%c1_128, %c0_129, %c0_130] : memref<2x1x32xf32, #tpu.memory_space<vmem>>, vector<1x1x32xf32>
    %265 = vector.shape_cast %264 : vector<1x1x32xf32> to vector<1x32xf32>
    %cst_131 = arith.constant dense<0.000000e+00> : vector<16xf32>
    %266 = vector.multi_reduction <add>, %261, %cst_131 [1] : vector<16x32xf32> to vector<16xf32>
    %267 = vector.shape_cast %266 : vector<16xf32> to vector<16x1xf32>
    %cst_132 = arith.constant 3.200000e+01 : f32
    %268 = vector.broadcast %cst_132 : f32 to vector<16x1xf32>
    %269 = arith.divf %267, %268 : vector<16x1xf32>
    %270 = vector.broadcast %269 : vector<16x1xf32> to vector<16x32xf32>
    %271 = arith.subf %261, %270 : vector<16x32xf32>
    %272 = arith.mulf %271, %271 : vector<16x32xf32>
    %cst_133 = arith.constant dense<0.000000e+00> : vector<16xf32>
    %273 = vector.multi_reduction <add>, %272, %cst_133 [1] : vector<16x32xf32> to vector<16xf32>
    %274 = vector.shape_cast %273 : vector<16xf32> to vector<16x1xf32>
    %cst_134 = arith.constant 3.200000e+01 : f32
    %275 = vector.broadcast %cst_134 : f32 to vector<16x1xf32>
    %276 = arith.divf %274, %275 : vector<16x1xf32>
    %277 = vector.broadcast %269 : vector<16x1xf32> to vector<16x32xf32>
    %278 = arith.subf %261, %277 : vector<16x32xf32>
    %cst_135 = arith.constant 9.99999996E-13 : f32
    %279 = vector.broadcast %cst_135 : f32 to vector<16x1xf32>
    %280 = arith.addf %276, %279 : vector<16x1xf32>
    %281 = math.rsqrt %280 : vector<16x1xf32>
    %282 = vector.broadcast %281 : vector<16x1xf32> to vector<16x32xf32>
    %283 = arith.mulf %278, %282 : vector<16x32xf32>
    %284 = vector.broadcast %263 : vector<1x32xf32> to vector<16x32xf32>
    %285 = arith.mulf %283, %284 : vector<16x32xf32>
    %286 = vector.broadcast %265 : vector<1x32xf32> to vector<16x32xf32>
    %287 = arith.addf %285, %286 : vector<16x32xf32>
    %288 = vector.shape_cast %287 : vector<16x32xf32> to vector<2x8x32xf32>
    %289 = vector.extract_strided_slice %288 {offsets = [0, 0, 0], sizes = [2, 1, 32], strides = [1, 1, 1]} : vector<2x8x32xf32> to vector<2x1x32xf32>
    %290 = vector.shape_cast %289 : vector<2x1x32xf32> to vector<2x32xf32>
    %c0_136 = arith.constant 0 : index
    %c0_137 = arith.constant 0 : index
    %291 = vector.load %arg17[%c0_136, %c0_137] : memref<32x256xf32, #tpu.memory_space<vmem>>, vector<32x256xf32>
    %cst_138 = arith.constant dense<0.000000e+00> : vector<2x256xf32>
    %292 = tpu.matmul %290, %291, %cst_138 {dimension_numbers = #tpu.dot_dimension_numbers<[1], [0], [0], [1], [0, 0, 1, 1], [], []>} : vector<2x32xf32>, vector<32x256xf32>, vector<2x256xf32> -> vector<2x256xf32>
    %c0_139 = arith.constant 0 : index
    %c0_140 = arith.constant 0 : index
    %293 = vector.load %arg4[%c0_139, %c0_140] : memref<2x8xf32, #tpu.memory_space<vmem>>, vector<2x8xf32>
    %c0_141 = arith.constant 0 : index
    %c0_142 = arith.constant 0 : index
    %294 = vector.load %arg18[%c0_141, %c0_142] : memref<8x256xf32, #tpu.memory_space<vmem>>, vector<8x256xf32>
    %cst_143 = arith.constant dense<0.000000e+00> : vector<2x256xf32>
    %295 = tpu.matmul %293, %294, %cst_143 {dimension_numbers = #tpu.dot_dimension_numbers<[1], [0], [0], [1], [0, 0, 1, 1], [], []>} : vector<2x8xf32>, vector<8x256xf32>, vector<2x256xf32> -> vector<2x256xf32>
    %296 = arith.addf %292, %295 : vector<2x256xf32>
    %c0_144 = arith.constant 0 : index
    %c0_145 = arith.constant 0 : index
    %297 = vector.load %arg19[%c0_144, %c0_145] : memref<1x256xf32, #tpu.memory_space<vmem>>, vector<1x256xf32>
    %298 = vector.broadcast %297 : vector<1x256xf32> to vector<2x256xf32>
    %299 = arith.addf %296, %298 : vector<2x256xf32>
    %cst_146 = arith.constant 0.000000e+00 : f32
    %300 = vector.broadcast %cst_146 : f32 to vector<2x256xf32>
    %301 = arith.maximumf %299, %300 : vector<2x256xf32>
    %c0_147 = arith.constant 0 : index
    %c0_148 = arith.constant 0 : index
    %302 = vector.load %arg20[%c0_147, %c0_148] : memref<256x128xf32, #tpu.memory_space<vmem>>, vector<256x128xf32>
    %cst_149 = arith.constant dense<0.000000e+00> : vector<2x128xf32>
    %303 = tpu.matmul %301, %302, %cst_149 {dimension_numbers = #tpu.dot_dimension_numbers<[1], [0], [0], [1], [0, 0, 1, 1], [], []>} : vector<2x256xf32>, vector<256x128xf32>, vector<2x128xf32> -> vector<2x128xf32>
    %c0_150 = arith.constant 0 : index
    %c0_151 = arith.constant 0 : index
    %304 = vector.load %arg21[%c0_150, %c0_151] : memref<1x128xf32, #tpu.memory_space<vmem>>, vector<1x128xf32>
    %305 = vector.broadcast %304 : vector<1x128xf32> to vector<2x128xf32>
    %306 = arith.addf %303, %305 : vector<2x128xf32>
    %cst_152 = arith.constant 0.000000e+00 : f32
    %307 = vector.broadcast %cst_152 : f32 to vector<2x128xf32>
    %308 = arith.maximumf %306, %307 : vector<2x128xf32>
    %c0_153 = arith.constant 0 : index
    %c0_154 = arith.constant 0 : index
    %309 = vector.load %arg22[%c0_153, %c0_154] : memref<128x128xf32, #tpu.memory_space<vmem>>, vector<128x128xf32>
    %cst_155 = arith.constant dense<0.000000e+00> : vector<2x128xf32>
    %310 = tpu.matmul %308, %309, %cst_155 {dimension_numbers = #tpu.dot_dimension_numbers<[1], [0], [0], [1], [0, 0, 1, 1], [], []>} : vector<2x128xf32>, vector<128x128xf32>, vector<2x128xf32> -> vector<2x128xf32>
    %c0_156 = arith.constant 0 : index
    %c0_157 = arith.constant 0 : index
    %311 = vector.load %arg23[%c0_156, %c0_157] : memref<1x128xf32, #tpu.memory_space<vmem>>, vector<1x128xf32>
    %312 = vector.broadcast %311 : vector<1x128xf32> to vector<2x128xf32>
    %313 = arith.addf %310, %312 : vector<2x128xf32>
    %c0_158 = arith.constant 0 : index
    %c0_159 = arith.constant 0 : index
    %314 = vector.load %arg24[%c0_158, %c0_159] : memref<2x128xf32, #tpu.memory_space<vmem>>, vector<2x128xf32>
    tpu.vector_store %arg24[%c0_158, %c0_159], %313 {strides = array<i32>} : memref<2x128xf32, #tpu.memory_space<vmem>>, vector<2x128xf32>,
    return
  }
}

</mosaic_0001>

<llo_original>
// kernel: distilbert_with_features.1
$region0: #{distilbert_with_features.1}
  #allocation0 [shape = 'u32[]', space=smem, size = 0x4, offset = 0x4, fixed_abs, tag = 'smem constant byte address 0x4 - core index']
  #allocation1 [shape = 'u32[144,128]{1,0:T(1,128)}', space=vmem, size = 0x12000, scoped, tag = 'internal scratch']
  %s0 = inlined_call_operand.vmem [shape: f32[16,32], index: 0, kind: input, shape index: {}]
  %s1 = inlined_call_operand.vmem [shape: f32[16,16], index: 1, kind: input, shape index: {}]
  %s2 = inlined_call_operand.vmem [shape: f32[1,32], index: 2, kind: input, shape index: {}]
  %s3 = inlined_call_operand.vmem [shape: f32[1,32], index: 3, kind: input, shape index: {}]
  %s4 = inlined_call_operand.vmem [shape: f32[2,8], index: 4, kind: input, shape index: {}]
  %s5 = inlined_call_operand.vmem [shape: f32[2,32,96], index: 5, kind: input, shape index: {}]
  %s6 = inlined_call_operand.vmem [shape: f32[2,1,96], index: 6, kind: input, shape index: {}]
  %s7 = inlined_call_operand.vmem [shape: f32[2,32,32], index: 7, kind: input, shape index: {}]
  %s8 = inlined_call_operand.vmem [shape: f32[2,1,32], index: 8, kind: input, shape index: {}]
  %s9 = inlined_call_operand.vmem [shape: f32[2,1,32], index: 9, kind: input, shape index: {}]
  %s10 = inlined_call_operand.vmem [shape: f32[2,1,32], index: 10, kind: input, shape index: {}]
  %s11 = inlined_call_operand.vmem [shape: f32[2,32,64], index: 11, kind: input, shape index: {}]
  %s12 = inlined_call_operand.hbm [shape: f32[2,1,64], index: 12, kind: input, shape index: {}]
  %s13 = inlined_call_operand.vmem [shape: f32[2,64,32], index: 13, kind: input, shape index: {}]
  %s14 = inlined_call_operand.vmem [shape: f32[2,1,32], index: 14, kind: input, shape index: {}]
  %s15 = inlined_call_operand.vmem [shape: f32[2,1,32], index: 15, kind: input, shape index: {}]
  %s16 = inlined_call_operand.vmem [shape: f32[2,1,32], index: 16, kind: input, shape index: {}]
  %s17 = inlined_call_operand.hbm [shape: f32[32,256], index: 17, kind: input, shape index: {}]
  %s18 = inlined_call_operand.hbm [shape: f32[8,256], index: 18, kind: input, shape index: {}]
  %s19 = inlined_call_operand.vmem [shape: f32[1,256], index: 19, kind: input, shape index: {}]
  %s20 = inlined_call_operand.vmem [shape: f32[256,128], index: 20, kind: input, shape index: {}]
  %s21 = inlined_call_operand.hbm [shape: f32[1,128], index: 21, kind: input, shape index: {}]
  %s22 = inlined_call_operand.vmem [shape: f32[128,128], index: 22, kind: input, shape index: {}]
  %s23 = inlined_call_operand.hbm [shape: f32[1,128], index: 23, kind: input, shape index: {}]
  %s24 = inlined_call_operand.hbm [shape: f32[2,128], index: 24, kind: output, shape index: {}]
  %s25 = sld [smem:[#allocation0]]
  $region126: #{distilbert_with_features.1} parent=0
    _
  %s27 = ssub.s32 1, %s25
  %s28 = scalar_select 0, %s27, %s25
  $region1: #{distilbert_with_features.1} parent=0
    #allocation2 [shape = 'u8[1024]{0}', space=vmem, size = 0x400, scoped, tag = 'input window, operand 12, single buffered']
    #allocation3 [shape = 's32[1]{0}', space=sflag, size = 0x4, scoped, tag = 'scoped memory for distilbert_with_features.1']
    #allocation4 [shape = 's32[1]{0}', space=sflag, size = 0x4, scoped, tag = 'scoped memory for distilbert_with_features.1']
    #allocation5 [shape = 'u8[32768]{0}', space=vmem, size = 0x8000, scoped, tag = 'input window, operand 17, single buffered']
    #allocation6 [shape = 's32[1]{0}', space=sflag, size = 0x4, scoped, tag = 'scoped memory for distilbert_with_features.1']
    #allocation7 [shape = 'u8[8192]{0}', space=vmem, size = 0x2000, scoped, tag = 'input window, operand 18, single buffered']
    #allocation8 [shape = 'u8[512]{0}', space=vmem, size = 0x400, scoped, tag = 'input window, operand 21, single buffered']
    #allocation9 [shape = 's32[1]{0}', space=sflag, size = 0x4, scoped, tag = 'scoped memory for distilbert_with_features.1']
    #allocation10 [shape = 'u8[512]{0}', space=vmem, size = 0x400, scoped, tag = 'input window, operand 23, single buffered']
    #allocation11 [shape = 'u8[1024]{0}', space=vmem, size = 0x400, scoped, tag = 'output window, operand 0, single buffered']
    %29 = vsyncpa [#allocation3], 0
    %30 = vsyncpa [#allocation6], 0
    %31 = vsyncpa [#allocation9], 0
    %32 = vsyncpa [#allocation4], 0
    // Predicated region
    $region2: #{distilbert_with_features.1} parent=1 // pred_check
      _
    $region3: #{distilbert_with_features.1} parent=1 // pred_check_branch
      %34 = sbr.rel (0) target = $region5
    $region4: #{distilbert_with_features.1} parent=1 // pred_region
      _
    $region5: #{distilbert_with_features.1} parent=1 // pred_fallthru
      _
    // Predicated region
    $region6: #{distilbert_with_features.1} parent=1 // pred_check
      _
    $region7: #{distilbert_with_features.1} parent=1 // pred_check_branch
      %36 = sbr.rel (0) target = $region9
    $region8: #{distilbert_with_features.1} parent=1 // pred_region
      _
    $region9: #{distilbert_with_features.1} parent=1 // pred_fallthru
      _
    // Predicated region
    $region10: #{distilbert_with_features.1} parent=1 // pred_check
      _
    $region11: #{distilbert_with_features.1} parent=1 // pred_check_branch
      %38 = sbr.rel (0) target = $region13
    $region12: #{distilbert_with_features.1} parent=1 // pred_region
      _
    $region13: #{distilbert_with_features.1} parent=1 // pred_fallthru
      _
    // Predicated region
    $region14: #{distilbert_with_features.1} parent=1 // pred_check
      _
    $region15: #{distilbert_with_features.1} parent=1 // pred_check_branch
      %40 = sbr.rel (0) target = $region17
    $region16: #{distilbert_with_features.1} parent=1 // pred_region
      _
    $region17: #{distilbert_with_features.1} parent=1 // pred_fallthru
      _
    // Predicated region
    $region18: #{distilbert_with_features.1} parent=1 // pred_check
      _
    $region19: #{distilbert_with_features.1} parent=1 // pred_check_branch
      %42 = sbr.rel (0) target = $region21
    $region20: #{distilbert_with_features.1} parent=1 // pred_region
      _
    $region21: #{distilbert_with_features.1} parent=1 // pred_fallthru
      _
    // Predicated region
    $region22: #{distilbert_with_features.1} parent=1 // pred_check
      _
    $region23: #{distilbert_with_features.1} parent=1 // pred_check_branch
      %44 = sbr.rel (0) target = $region25
    $region24: #{distilbert_with_features.1} parent=1 // pred_region
      _
    $region25: #{distilbert_with_features.1} parent=1 // pred_fallthru
      _
    // Predicated region
    $region26: #{distilbert_with_features.1} parent=1 // pred_check
      _
    $region27: #{distilbert_with_features.1} parent=1 // pred_check_branch
      %46 = sbr.rel (0) target = $region29
    $region28: #{distilbert_with_features.1} parent=1 // pred_region
      _
    $region29: #{distilbert_with_features.1} parent=1 // pred_fallthru
      _
    // Predicated region
    $region30: #{distilbert_with_features.1} parent=1 // pred_check
      _
    $region31: #{distilbert_with_features.1} parent=1 // pred_check_branch
      %48 = sbr.rel (0) target = $region33
    $region32: #{distilbert_with_features.1} parent=1 // pred_region
      _
    $region33: #{distilbert_with_features.1} parent=1 // pred_fallthru
      _
    // Predicated region
    $region34: #{distilbert_with_features.1} parent=1 // pred_check
      _
    $region35: #{distilbert_with_features.1} parent=1 // pred_check_branch
      %50 = sbr.rel (0) target = $region37
    $region36: #{distilbert_with_features.1} parent=1 // pred_region
      _
    $region37: #{distilbert_with_features.1} parent=1 // pred_fallthru
      _
    // Predicated region
    $region38: #{distilbert_with_features.1} parent=1 // pred_check
      _
    $region39: #{distilbert_with_features.1} parent=1 // pred_check_branch
      %52 = sbr.rel (0) target = $region41
    $region40: #{distilbert_with_features.1} parent=1 // pred_region
      _
    $region41: #{distilbert_with_features.1} parent=1 // pred_fallthru
      _
    // Predicated region
    $region42: #{distilbert_with_features.1} parent=1 // pred_check
      _
    $region43: #{distilbert_with_features.1} parent=1 // pred_check_branch
      %54 = sbr.rel (0) target = $region45
    $region44: #{distilbert_with_features.1} parent=1 // pred_region
      _
    $region45: #{distilbert_with_features.1} parent=1 // pred_fallthru
      _
    // Predicated region
    $region46: #{distilbert_with_features.1} parent=1 // pred_check
      _
    $region47: #{distilbert_with_features.1} parent=1 // pred_check_branch
      %56 = sbr.rel (0) target = $region49
    $region48: #{distilbert_with_features.1} parent=1 // pred_region
      _
    $region49: #{distilbert_with_features.1} parent=1 // pred_fallthru
      _
    // Predicated region
    $region50: #{distilbert_with_features.1} parent=1 // pred_check
      _
    $region51: #{distilbert_with_features.1} parent=1 // pred_check_branch
      %58 = sbr.rel (0) target = $region53
    $region52: #{distilbert_with_features.1} parent=1 // pred_region
      %s60 = ssub.s32 32, 32
      %61 = vsyncadd [#allocation3], %s60
      %s62 = sshll.u32 [#allocation2], 4
      %s63 = int_to_ptr.vmem [resolvable:$true] %s62
      %68 = dma.hbm_to_vmem [thread:$0]  %s12, 32, %s63, [#allocation3], 16, 16, 1
    $region53: #{distilbert_with_features.1} parent=1 // pred_fallthru
      _
    // Predicated region
    $region54: #{distilbert_with_features.1} parent=1 // pred_check
      _
    $region55: #{distilbert_with_features.1} parent=1 // pred_check_branch
      %70 = sbr.rel (0) target = $region57
    $region56: #{distilbert_with_features.1} parent=1 // pred_region
      _
    $region57: #{distilbert_with_features.1} parent=1 // pred_fallthru
      _
    // Predicated region
    $region58: #{distilbert_with_features.1} parent=1 // pred_check
      _
    $region59: #{distilbert_with_features.1} parent=1 // pred_check_branch
      %72 = sbr.rel (0) target = $region61
    $region60: #{distilbert_with_features.1} parent=1 // pred_region
      _
    $region61: #{distilbert_with_features.1} parent=1 // pred_fallthru
      _
    // Predicated region
    $region62: #{distilbert_with_features.1} parent=1 // pred_check
      _
    $region63: #{distilbert_with_features.1} parent=1 // pred_check_branch
      %74 = sbr.rel (0) target = $region65
    $region64: #{distilbert_with_features.1} parent=1 // pred_region
      _
    $region65: #{distilbert_with_features.1} parent=1 // pred_fallthru
      _
    // Predicated region
    $region66: #{distilbert_with_features.1} parent=1 // pred_check
      _
    $region67: #{distilbert_with_features.1} parent=1 // pred_check_branch
      %76 = sbr.rel (0) target = $region69
    $region68: #{distilbert_with_features.1} parent=1 // pred_region
      _
    $region69: #{distilbert_with_features.1} parent=1 // pred_fallthru
      _
    // Predicated region
    $region70: #{distilbert_with_features.1} parent=1 // pred_check
      _
    $region71: #{distilbert_with_features.1} parent=1 // pred_check_branch
      %78 = sbr.rel (0) target = $region73
    $region72: #{distilbert_with_features.1} parent=1 // pred_region
      %s80 = ssub.s32 1024, 1024
      %81 = vsyncadd [#allocation6], %s80
      %s82 = sshll.u32 [#allocation5], 4
      %s83 = int_to_ptr.vmem [resolvable:$true] %s82
      %88 = dma.hbm_to_vmem [thread:$0]  %s17, 1024, %s83, [#allocation6], 256, 256, 16
    $region73: #{distilbert_with_features.1} parent=1 // pred_fallthru
      _
    // Predicated region
    $region74: #{distilbert_with_features.1} parent=1 // pred_check
      _
    $region75: #{distilbert_with_features.1} parent=1 // pred_check_branch
      %90 = sbr.rel (0) target = $region77
    $region76: #{distilbert_with_features.1} parent=1 // pred_region
      %s92 = ssub.s32 256, 256
      %93 = vsyncadd [#allocation6], %s92
      %s95 = sshll.u32 [#allocation7], 4
      %s96 = int_to_ptr.vmem [resolvable:$true] %s95
      %98 = dma.hbm_to_vmem [thread:$0]  %s18, 256, %s96, [#allocation6]
    $region77: #{distilbert_with_features.1} parent=1 // pred_fallthru
      _
    // Predicated region
    $region78: #{distilbert_with_features.1} parent=1 // pred_check
      _
    $region79: #{distilbert_with_features.1} parent=1 // pred_check_branch
      %100 = sbr.rel (0) target = $region81
    $region80: #{distilbert_with_features.1} parent=1 // pred_region
      _
    $region81: #{distilbert_with_features.1} parent=1 // pred_fallthru
      _
    // Predicated region
    $region82: #{distilbert_with_features.1} parent=1 // pred_check
      _
    $region83: #{distilbert_with_features.1} parent=1 // pred_check_branch
      %102 = sbr.rel (0) target = $region85
    $region84: #{distilbert_with_features.1} parent=1 // pred_region
      _
    $region85: #{distilbert_with_features.1} parent=1 // pred_fallthru
      _
    // Predicated region
    $region86: #{distilbert_with_features.1} parent=1 // pred_check
      _
    $region87: #{distilbert_with_features.1} parent=1 // pred_check_branch
      %104 = sbr.rel (0) target = $region89
    $region88: #{distilbert_with_features.1} parent=1 // pred_region
      %s106 = ssub.s32 16, 16
      %107 = vsyncadd [#allocation9], %s106
      %s109 = sshll.u32 [#allocation8], 4
      %s110 = int_to_ptr.vmem [resolvable:$true] %s109
      %112 = dma.hbm_to_vmem [thread:$0]  %s21, 16, %s110, [#allocation9]
    $region89: #{distilbert_with_features.1} parent=1 // pred_fallthru
      _
    // Predicated region
    $region90: #{distilbert_with_features.1} parent=1 // pred_check
      _
    $region91: #{distilbert_with_features.1} parent=1 // pred_check_branch
      %114 = sbr.rel (0) target = $region93
    $region92: #{distilbert_with_features.1} parent=1 // pred_region
      _
    $region93: #{distilbert_with_features.1} parent=1 // pred_fallthru
      _
    // Predicated region
    $region94: #{distilbert_with_features.1} parent=1 // pred_check
      _
    $region95: #{distilbert_with_features.1} parent=1 // pred_check_branch
      %116 = sbr.rel (0) target = $region97
    $region96: #{distilbert_with_features.1} parent=1 // pred_region
      %s118 = ssub.s32 16, 16
      %119 = vsyncadd [#allocation9], %s118
      %s121 = sshll.u32 [#allocation10], 4
      %s122 = int_to_ptr.vmem [resolvable:$true] %s121
      %124 = dma.hbm_to_vmem [thread:$0]  %s23, 16, %s122, [#allocation9]
    $region97: #{distilbert_with_features.1} parent=1 // pred_fallthru
      _
    // Predicated region
    $region98: #{distilbert_with_features.1} parent=1 // pred_check
      _
    $region99: #{distilbert_with_features.1} parent=1 // pred_check_branch
      %126 = sbr.rel (0) target = $region101
    $region100: #{distilbert_with_features.1} parent=1 // pred_region
      %127 = dma.done [#allocation3], 32
    $region101: #{distilbert_with_features.1} parent=1 // pred_fallthru
      _
    // Predicated region
    $region102: #{distilbert_with_features.1} parent=1 // pred_check
      _
    $region103: #{distilbert_with_features.1} parent=1 // pred_check_branch
      %129 = sbr.rel (0) target = $region105
    $region104: #{distilbert_with_features.1} parent=1 // pred_region
      %130 = dma.done [#allocation6], 1024
    $region105: #{distilbert_with_features.1} parent=1 // pred_fallthru
      _
    // Predicated region
    $region106: #{distilbert_with_features.1} parent=1 // pred_check
      _
    $region107: #{distilbert_with_features.1} parent=1 // pred_check_branch
      %132 = sbr.rel (0) target = $region109
    $region108: #{distilbert_with_features.1} parent=1 // pred_region
      %133 = dma.done [#allocation6], 256
    $region109: #{distilbert_with_features.1} parent=1 // pred_fallthru
      _
    // Predicated region
    $region110: #{distilbert_with_features.1} parent=1 // pred_check
      _
    $region111: #{distilbert_with_features.1} parent=1 // pred_check_branch
      %135 = sbr.rel (0) target = $region113
    $region112: #{distilbert_with_features.1} parent=1 // pred_region
      %136 = dma.done [#allocation9], 16
    $region113: #{distilbert_with_features.1} parent=1 // pred_fallthru
      _
    // Predicated region
    $region114: #{distilbert_with_features.1} parent=1 // pred_check
      _
    $region115: #{distilbert_with_features.1} parent=1 // pred_check_branch
      %138 = sbr.rel (0) target = $region117
    $region116: #{distilbert_with_features.1} parent=1 // pred_region
      %139 = dma.done [#allocation9], 16
    $region117: #{distilbert_with_features.1} parent=1 // pred_fallthru
      _
    %v140 = vld [vmem:[%s0] sm:$0xff]
    %v141 = vld [vmem:[%s0 + $0x8] sm:$0xff]
    %v142 = vld [vmem:[%s2] sm:$0x1]
    %v143 = vld [vmem:[%s3] sm:$0x1]
    %vm144 = vcmask 261120
    %v145 = vsel %vm144, %v140, 0.0
    %146 = vadd.xlane.f32.xlu0 %v145
    %v147 = vpop.xlane.xlu0 %146
    %v148 = vsel %vm144, %v141, 0.0
    %149 = vadd.xlane.f32.xlu0 %v148
    %v150 = vpop.xlane.xlu0 %149
    %v151 = vrcp.pop 32.0
    %v152 = vmul.f32 %v147, %v151
    %v153 = vmul.f32 %v150, %v151
    %v154 = vsub.f32 %v140, %v152
    %v155 = vsub.f32 %v141, %v153
    %v156 = vmul.f32 %v154, %v154
    %v157 = vmul.f32 %v155, %v155
    %v158 = vsel %vm144, %v156, 0.0
    %159 = vadd.xlane.f32.xlu0 %v158
    %v160 = vpop.xlane.xlu0 %159
    %v161 = vsel %vm144, %v157, 0.0
    %162 = vadd.xlane.f32.xlu0 %v161
    %v163 = vpop.xlane.xlu0 %162
    %v164 = vmul.f32 %v160, %v151
    %v165 = vmul.f32 %v163, %v151
    %v166 = vadd.f32 %v164, 1e-12
    %v167 = vadd.f32 %v165, 1e-12
    %v168 = vrsqrt.pop %v166
    %v169 = vrsqrt.pop %v167
    %v170 = vmul.f32 %v154, %v168
    %v171 = vmul.f32 %v155, %v169
    %v173 = vlaneseq
    %v174 = vshrl.u32 %v173, 7
    %v175 = vsub.s32 0, %v174
    %v176 = vrot.slane %v142, %v175
    %v178 = vmul.f32 %v170, %v176
    %v179 = vmul.f32 %v171, %v176
    %v181 = vlaneseq
    %v182 = vshrl.u32 %v181, 7
    %v183 = vsub.s32 0, %v182
    %v184 = vrot.slane %v143, %v183
    %v186 = vadd.f32 %v178, %v184
    %v187 = vadd.f32 %v179, %v184
    %v188 = vld [vmem:[%s1] sm:$0xff]
    %v189 = vld [vmem:[%s1 + $0x8] sm:$0xff]
    %v190 = vld [vmem:[%s5] sm:$0xff]
    %v191 = vld [vmem:[%s5 + $0x8] sm:$0xff]
    %v192 = vld [vmem:[%s5 + $0x10] sm:$0xff]
    %v193 = vld [vmem:[%s5 + $0x18] sm:$0xff]
    %v194 = vld [vmem:[%s6] sm:$0x1]
    %v195 = vld [vmem:[%s7] sm:$0xff]
    %v196 = vld [vmem:[%s7 + $0x8] sm:$0xff]
    %v197 = vld [vmem:[%s7 + $0x10] sm:$0xff]
    %v198 = vld [vmem:[%s7 + $0x18] sm:$0xff]
    %v199 = vld [vmem:[%s8] sm:$0x1]
    %v201 = vlaneseq
    %v202 = vshrl.u32 %v201, 7
    %v203 = vsub.s32 0, %v202
    %v204 = vrot.slane %v194, %v203
    %v207 = vsel %vm144, %v186, 0
    %v210 = vsel %vm144, %v187, 0
    %212 = vmatprep.subr.mxu0 0.0
    %213 = vmatpush1.msra.mxu0 %v190
    %214 = vmatprep.subr.mxu0 0.0
    %215 = vmatpush1.msra.mxu0 %v191
    %216 = vmatprep.subr.mxu0 0.0
    %217 = vmatpush1.msra.mxu0 %v192
    %218 = vmatprep.subr.mxu0 0.0
    %219 = vmatpush1.msra.mxu0 %v193
    %220 = vmatprep.subr.mxu0 0.0
    %221 = vmatpush1.msra.mxu0 0.0
    %222 = vmatprep.subr.mxu0 0.0
    %223 = vmatpush1.msra.mxu0 0.0
    %224 = vmatprep.subr.mxu0 0.0
    %225 = vmatpush1.msra.mxu0 0.0
    %226 = vmatprep.subr.mxu0 0.0
    %227 = vmatpush1.msra.mxu0 0.0
    %228 = vmatprep.subr.mxu0 0.0
    %229 = vmatpush1.msra.mxu0 0.0
    %230 = vmatprep.subr.mxu0 0.0
    %231 = vmatpush1.msra.mxu0 0.0
    %232 = vmatprep.subr.mxu0 0.0
    %233 = vmatpush1.msra.mxu0 0.0
    %234 = vmatprep.subr.mxu0 0.0
    %235 = vmatpush1.msra.mxu0 0.0
    %236 = vmatprep.subr.mxu0 0.0
    %237 = vmatpush1.msra.mxu0 0.0
    %238 = vmatprep.subr.mxu0 0.0
    %239 = vmatpush1.msra.mxu0 0.0
    %240 = vmatprep.subr.mxu0 0.0
    %241 = vmatpush1.msra.mxu0 0.0
    %242 = vmatprep.subr.mxu0 0.0
    %243 = vmatpush1.msra.mxu0 0.0
    %244 = vmatprep.subr.mxu0 0.0
    %245 = vmatpush1.msra.mxu0 0.0
    %246 = vmatprep.subr.mxu0 0.0
    %247 = vmatpush1.msra.mxu0 0.0
    %248 = vmatprep.subr.mxu0 0.0
    %249 = vmatpush1.msra.mxu0 0.0
    %250 = vmatprep.subr.mxu0 0.0
    %251 = vmatpush1.msra.mxu0 0.0
    %252 = vmatprep.subr.mxu0 0.0
    %253 = vmatpush1.msra.mxu0 0.0
    %254 = vmatprep.subr.mxu0 0.0
    %255 = vmatpush1.msra.mxu0 0.0
    %256 = vmatprep.subr.mxu0 0.0
    %257 = vmatpush1.msra.mxu0 0.0
    %258 = vmatprep.subr.mxu0 0.0
    %259 = vmatpush1.msra.mxu0 0.0
    %260 = vmatprep.subr.mxu0 0.0
    %261 = vmatpush1.msra.mxu0 0.0
    %262 = vmatprep.subr.mxu0 0.0
    %263 = vmatpush1.msra.mxu0 0.0
    %264 = vmatprep.subr.mxu0 0.0
    %265 = vmatpush1.msra.mxu0 0.0
    %266 = vmatprep.subr.mxu0 0.0
    %267 = vmatpush1.msra.mxu0 0.0
    %268 = vmatprep.subr.mxu0 0.0
    %269 = vmatpush1.msra.mxu0 0.0
    %270 = vmatprep.subr.mxu0 0.0
    %271 = vmatpush1.msra.mxu0 0.0
    %272 = vmatprep.subr.mxu0 0.0
    %273 = vmatpush1.msra.mxu0 0.0
    %274 = vmatprep.subr.mxu0 0.0
    %275 = vmatpush1.msra.mxu0 0.0
    %276 = vmatprep.mubr.f32.mxu0 0.0
    %277 = vmatmul.mubr.f32.gmra.mrb[0].mxu0 %v207
    %v278 = vpop.f32.mrb[0].mxu0
    %v279 = vadd.f32 %v204, %v278
    %v280 = vpop.f32.mrb[0].mxu0
    %281 = vmatprep.mubr.f32.mxu0 0.0
    %282 = vmatmul.mubr.f32.gmra.mrb[0].mxu0 %v210
    %v283 = vpop.f32.mrb[0].mxu0
    %v284 = vadd.f32 %v204, %v283
    %v285 = vpop.f32.mrb[0].mxu0
    %286 = vdwg.mxu0
    %289 = vrot.lane.b32.xlu0 %v279, 96
    %v290 = vpop.permute.xlu0 %289
    %291 = vrot.lane.b32.xlu0 %v284, 96
    %v292 = vpop.permute.xlu0 %291
    %vm293 = vcmask 130048
    %v294 = vsel %vm293, %v279, 0
    %v296 = vsel %vm293, %v284, 0
    %v298 = vsel %vm293, %v290, 0
    %v300 = vsel %vm293, %v292, 0
    %302 = vmatprep.subr.mxu0 0.0
    %303 = vmatpush1.xpose.msra.mxu0 %v298
    %304 = vmatprep.subr.mxu0 0.0
    %305 = vmatpush1.xpose.msra.mxu0 %v300
    %306 = vmatprep.subr.mxu0 0.0
    %307 = vmatpush1.xpose.msra.mxu0 0.0
    %308 = vmatprep.subr.mxu0 0.0
    %309 = vmatpush1.xpose.msra.mxu0 0.0
    %310 = vmatprep.subr.mxu0 0.0
    %311 = vmatpush1.xpose.msra.mxu0 0.0
    %312 = vmatprep.subr.mxu0 0.0
    %313 = vmatpush1.xpose.msra.mxu0 0.0
    %314 = vmatprep.subr.mxu0 0.0
    %315 = vmatpush1.xpose.msra.mxu0 0.0
    %316 = vmatprep.subr.mxu0 0.0
    %317 = vmatpush1.xpose.msra.mxu0 0.0
    %318 = vmatprep.subr.mxu0 0.0
    %319 = vmatpush1.xpose.msra.mxu0 0.0
    %320 = vmatprep.subr.mxu0 0.0
    %321 = vmatpush1.xpose.msra.mxu0 0.0
    %322 = vmatprep.subr.mxu0 0.0
    %323 = vmatpush1.xpose.msra.mxu0 0.0
    %324 = vmatprep.subr.mxu0 0.0
    %325 = vmatpush1.xpose.msra.mxu0 0.0
    %326 = vmatprep.subr.mxu0 0.0
    %327 = vmatpush1.xpose.msra.mxu0 0.0
    %328 = vmatprep.subr.mxu0 0.0
    %329 = vmatpush1.xpose.msra.mxu0 0.0
    %330 = vmatprep.subr.mxu0 0.0
    %331 = vmatpush1.xpose.msra.mxu0 0.0
    %332 = vmatprep.subr.mxu0 0.0
    %333 = vmatpush1.xpose.msra.mxu0 0.0
    %334 = vmatprep.subr.mxu0 0.0
    %335 = vmatpush1.xpose.msra.mxu0 0.0
    %336 = vmatprep.subr.mxu0 0.0
    %337 = vmatpush1.xpose.msra.mxu0 0.0
    %338 = vmatprep.subr.mxu0 0.0
    %339 = vmatpush1.xpose.msra.mxu0 0.0
    %340 = vmatprep.subr.mxu0 0.0
    %341 = vmatpush1.xpose.msra.mxu0 0.0
    %342 = vmatprep.subr.mxu0 0.0
    %343 = vmatpush1.xpose.msra.mxu0 0.0
    %344 = vmatprep.subr.mxu0 0.0
    %345 = vmatpush1.xpose.msra.mxu0 0.0
    %346 = vmatprep.subr.mxu0 0.0
    %347 = vmatpush1.xpose.msra.mxu0 0.0
    %348 = vmatprep.subr.mxu0 0.0
    %349 = vmatpush1.xpose.msra.mxu0 0.0
    %350 = vmatprep.subr.mxu0 0.0
    %351 = vmatpush1.xpose.msra.mxu0 0.0
    %352 = vmatprep.subr.mxu0 0.0
    %353 = vmatpush1.xpose.msra.mxu0 0.0
    %354 = vmatprep.subr.mxu0 0.0
    %355 = vmatpush1.xpose.msra.mxu0 0.0
    %356 = vmatprep.subr.mxu0 0.0
    %357 = vmatpush1.xpose.msra.mxu0 0.0
    %358 = vmatprep.subr.mxu0 0.0
    %359 = vmatpush1.xpose.msra.mxu0 0.0
    %360 = vmatprep.subr.mxu0 0.0
    %361 = vmatpush1.xpose.msra.mxu0 0.0
    %362 = vmatprep.subr.mxu0 0.0
    %363 = vmatpush1.xpose.msra.mxu0 0.0
    %364 = vmatprep.subr.mxu0 0.0
    %365 = vmatpush1.xpose.msra.mxu0 0.0
    %366 = vmatprep.mubr.f32.mxu0 0.0
    %367 = vmatmul.mubr.f32.gmra.mrb[0].mxu0 %v294
    %v368 = vpop.f32.mrb[0].mxu0
    %v369 = vadd.f32 %v188, %v368
    %v370 = vpop.f32.mrb[0].mxu0
    %371 = vmatprep.mubr.f32.mxu0 0.0
    %372 = vmatmul.mubr.f32.gmra.mrb[0].mxu0 %v296
    %v373 = vpop.f32.mrb[0].mxu0
    %v374 = vadd.f32 %v189, %v373
    %v375 = vpop.f32.mrb[0].mxu0
    %376 = vdwg.mxu0
    %v377 = vsel %vm293, %v369, -inf
    %378 = vmax.xlane.f32.xlu0 %v377
    %v379 = vpop.xlane.xlu0 %378
    %v380 = vsel %vm293, %v374, -inf
    %381 = vmax.xlane.f32.xlu0 %v380
    %v382 = vpop.xlane.xlu0 %381
    %v383 = vsub.f32 %v369, %v379
    %v384 = vsub.f32 %v374, %v382
    %v385 = vmul.f32 %v383, 1.442695
    %v386 = vpow.pop %v385
    %v387 = vmul.f32 %v384, 1.442695
    %v388 = vpow.pop %v387
    %v389 = vsel %vm293, %v386, 0.0
    %390 = vadd.xlane.f32.xlu0 %v389
    %v391 = vpop.xlane.xlu0 %390
    %v392 = vsel %vm293, %v388, 0.0
    %393 = vadd.xlane.f32.xlu0 %v392
    %v394 = vpop.xlane.xlu0 %393
    %v395 = vrcp.pop %v391
    %v396 = vrcp.pop %v394
    %v397 = vmul.f32 %v386, %v395
    %v398 = vmul.f32 %v388, %v396
    %399 = vrot.lane.b32.xlu0 %v279, 64
    %v400 = vpop.permute.xlu0 %399
    %401 = vrot.lane.b32.xlu0 %v284, 64
    %v402 = vpop.permute.xlu0 %401
    %v406 = vsel %vm293, %v397, 0
    %v409 = vsel %vm293, %v398, 0
    %411 = vmatprep.subr.mxu0 0.0
    %412 = vmatpush1.msra.mxu0 %v400
    %413 = vmatprep.subr.mxu0 0.0
    %414 = vmatpush1.msra.mxu0 %v402
    %415 = vmatprep.subr.mxu0 0.0
    %416 = vmatpush1.msra.mxu0 0.0
    %417 = vmatprep.subr.mxu0 0.0
    %418 = vmatpush1.msra.mxu0 0.0
    %419 = vmatprep.subr.mxu0 0.0
    %420 = vmatpush1.msra.mxu0 0.0
    %421 = vmatprep.subr.mxu0 0.0
    %422 = vmatpush1.msra.mxu0 0.0
    %423 = vmatprep.subr.mxu0 0.0
    %424 = vmatpush1.msra.mxu0 0.0
    %425 = vmatprep.subr.mxu0 0.0
    %426 = vmatpush1.msra.mxu0 0.0
    %427 = vmatprep.subr.mxu0 0.0
    %428 = vmatpush1.msra.mxu0 0.0
    %429 = vmatprep.subr.mxu0 0.0
    %430 = vmatpush1.msra.mxu0 0.0
    %431 = vmatprep.subr.mxu0 0.0
    %432 = vmatpush1.msra.mxu0 0.0
    %433 = vmatprep.subr.mxu0 0.0
    %434 = vmatpush1.msra.mxu0 0.0
    %435 = vmatprep.subr.mxu0 0.0
    %436 = vmatpush1.msra.mxu0 0.0
    %437 = vmatprep.subr.mxu0 0.0
    %438 = vmatpush1.msra.mxu0 0.0
    %439 = vmatprep.subr.mxu0 0.0
    %440 = vmatpush1.msra.mxu0 0.0
    %441 = vmatprep.subr.mxu0 0.0
    %442 = vmatpush1.msra.mxu0 0.0
    %443 = vmatprep.subr.mxu0 0.0
    %444 = vmatpush1.msra.mxu0 0.0
    %445 = vmatprep.subr.mxu0 0.0
    %446 = vmatpush1.msra.mxu0 0.0
    %447 = vmatprep.subr.mxu0 0.0
    %448 = vmatpush1.msra.mxu0 0.0
    %449 = vmatprep.subr.mxu0 0.0
    %450 = vmatpush1.msra.mxu0 0.0
    %451 = vmatprep.subr.mxu0 0.0
    %452 = vmatpush1.msra.mxu0 0.0
    %453 = vmatprep.subr.mxu0 0.0
    %454 = vmatpush1.msra.mxu0 0.0
    %455 = vmatprep.subr.mxu0 0.0
    %456 = vmatpush1.msra.mxu0 0.0
    %457 = vmatprep.subr.mxu0 0.0
    %458 = vmatpush1.msra.mxu0 0.0
    %459 = vmatprep.subr.mxu0 0.0
    %460 = vmatpush1.msra.mxu0 0.0
    %461 = vmatprep.subr.mxu0 0.0
    %462 = vmatpush1.msra.mxu0 0.0
    %463 = vmatprep.subr.mxu0 0.0
    %464 = vmatpush1.msra.mxu0 0.0
    %465 = vmatprep.subr.mxu0 0.0
    %466 = vmatpush1.msra.mxu0 0.0
    %467 = vmatprep.subr.mxu0 0.0
    %468 = vmatpush1.msra.mxu0 0.0
    %469 = vmatprep.subr.mxu0 0.0
    %470 = vmatpush1.msra.mxu0 0.0
    %471 = vmatprep.subr.mxu0 0.0
    %472 = vmatpush1.msra.mxu0 0.0
    %473 = vmatprep.subr.mxu0 0.0
    %474 = vmatpush1.msra.mxu0 0.0
    %475 = vmatprep.mubr.f32.mxu0 0.0
    %476 = vmatmul.mubr.f32.gmra.mrb[0].mxu0 %v406
    %v477 = vpop.f32.mrb[0].mxu0
    %v478 = vadd.f32 0.0, %v477
    %v479 = vpop.f32.mrb[0].mxu0
    %480 = vmatprep.mubr.f32.mxu0 0.0
    %481 = vmatmul.mubr.f32.gmra.mrb[0].mxu0 %v409
    %v482 = vpop.f32.mrb[0].mxu0
    %v483 = vadd.f32 0.0, %v482
    %v484 = vpop.f32.mrb[0].mxu0
    %485 = vdwg.mxu0
    %v487 = vsel %vm293, %v478, 0
    %v490 = vsel %vm293, %v483, 0
    %492 = vmatprep.subr.mxu0 0.0
    %493 = vmatpush1.msra.mxu0 %v195
    %494 = vmatprep.subr.mxu0 0.0
    %495 = vmatpush1.msra.mxu0 %v196
    %496 = vmatprep.subr.mxu0 0.0
    %497 = vmatpush1.msra.mxu0 0.0
    %498 = vmatprep.subr.mxu0 0.0
    %499 = vmatpush1.msra.mxu0 0.0
    %500 = vmatprep.subr.mxu0 0.0
    %501 = vmatpush1.msra.mxu0 0.0
    %502 = vmatprep.subr.mxu0 0.0
    %503 = vmatpush1.msra.mxu0 0.0
    %504 = vmatprep.subr.mxu0 0.0
    %505 = vmatpush1.msra.mxu0 0.0
    %506 = vmatprep.subr.mxu0 0.0
    %507 = vmatpush1.msra.mxu0 0.0
    %508 = vmatprep.subr.mxu0 0.0
    %509 = vmatpush1.msra.mxu0 0.0
    %510 = vmatprep.subr.mxu0 0.0
    %511 = vmatpush1.msra.mxu0 0.0
    %512 = vmatprep.subr.mxu0 0.0
    %513 = vmatpush1.msra.mxu0 0.0
    %514 = vmatprep.subr.mxu0 0.0
    %515 = vmatpush1.msra.mxu0 0.0
    %516 = vmatprep.subr.mxu0 0.0
    %517 = vmatpush1.msra.mxu0 0.0
    %518 = vmatprep.subr.mxu0 0.0
    %519 = vmatpush1.msra.mxu0 0.0
    %520 = vmatprep.subr.mxu0 0.0
    %521 = vmatpush1.msra.mxu0 0.0
    %522 = vmatprep.subr.mxu0 0.0
    %523 = vmatpush1.msra.mxu0 0.0
    %524 = vmatprep.subr.mxu0 0.0
    %525 = vmatpush1.msra.mxu0 0.0
    %526 = vmatprep.subr.mxu0 0.0
    %527 = vmatpush1.msra.mxu0 0.0
    %528 = vmatprep.subr.mxu0 0.0
    %529 = vmatpush1.msra.mxu0 0.0
    %530 = vmatprep.subr.mxu0 0.0
    %531 = vmatpush1.msra.mxu0 0.0
    %532 = vmatprep.subr.mxu0 0.0
    %533 = vmatpush1.msra.mxu0 0.0
    %534 = vmatprep.subr.mxu0 0.0
    %535 = vmatpush1.msra.mxu0 0.0
    %536 = vmatprep.subr.mxu0 0.0
    %537 = vmatpush1.msra.mxu0 0.0
    %538 = vmatprep.subr.mxu0 0.0
    %539 = vmatpush1.msra.mxu0 0.0
    %540 = vmatprep.subr.mxu0 0.0
    %541 = vmatpush1.msra.mxu0 0.0
    %542 = vmatprep.subr.mxu0 0.0
    %543 = vmatpush1.msra.mxu0 0.0
    %544 = vmatprep.subr.mxu0 0.0
    %545 = vmatpush1.msra.mxu0 0.0
    %546 = vmatprep.subr.mxu0 0.0
    %547 = vmatpush1.msra.mxu0 0.0
    %548 = vmatprep.subr.mxu0 0.0
    %549 = vmatpush1.msra.mxu0 0.0
    %550 = vmatprep.subr.mxu0 0.0
    %551 = vmatpush1.msra.mxu0 0.0
    %552 = vmatprep.subr.mxu0 0.0
    %553 = vmatpush1.msra.mxu0 0.0
    %554 = vmatprep.subr.mxu0 0.0
    %555 = vmatpush1.msra.mxu0 0.0
    %556 = vmatprep.mubr.f32.mxu0 0.0
    %557 = vmatmul.mubr.f32.gmra.mrb[0].mxu0 %v487
    %v558 = vpop.f32.mrb[0].mxu0
    %v559 = vadd.f32 0.0, %v558
    %v560 = vpop.f32.mrb[0].mxu0
    %561 = vmatprep.mubr.f32.mxu0 0.0
    %562 = vmatmul.mubr.f32.gmra.mrb[0].mxu0 %v490
    %v563 = vpop.f32.mrb[0].mxu0
    %v564 = vadd.f32 0.0, %v563
    %v565 = vpop.f32.mrb[0].mxu0
    %566 = vdwg.mxu0
    %v568 = vlaneseq
    %v569 = vshrl.u32 %v568, 7
    %v570 = vsub.s32 0, %v569
    %v571 = vrot.slane %v199, %v570
    %v573 = vadd.f32 %v571, %v559
    %v574 = vadd.f32 %v571, %v564
    %575 = vrot.lane.b32.xlu0 %v279, 112
    %v576 = vpop.permute.xlu0 %575
    %577 = vrot.lane.b32.xlu0 %v284, 112
    %v578 = vpop.permute.xlu0 %577
    %579 = vrot.lane.b32.xlu0 %v279, 80
    %v580 = vpop.permute.xlu0 %579
    %581 = vrot.lane.b32.xlu0 %v284, 80
    %v582 = vpop.permute.xlu0 %581
    %v583 = vsel %vm293, %v576, 0
    %v585 = vsel %vm293, %v578, 0
    %v587 = vsel %vm293, %v580, 0
    %v589 = vsel %vm293, %v582, 0
    %591 = vmatprep.subr.mxu0 0.0
    %592 = vmatpush1.xpose.msra.mxu0 %v587
    %593 = vmatprep.subr.mxu0 0.0
    %594 = vmatpush1.xpose.msra.mxu0 %v589
    %595 = vmatprep.subr.mxu0 0.0
    %596 = vmatpush1.xpose.msra.mxu0 0.0
    %597 = vmatprep.subr.mxu0 0.0
    %598 = vmatpush1.xpose.msra.mxu0 0.0
    %599 = vmatprep.subr.mxu0 0.0
    %600 = vmatpush1.xpose.msra.mxu0 0.0
    %601 = vmatprep.subr.mxu0 0.0
    %602 = vmatpush1.xpose.msra.mxu0 0.0
    %603 = vmatprep.subr.mxu0 0.0
    %604 = vmatpush1.xpose.msra.mxu0 0.0
    %605 = vmatprep.subr.mxu0 0.0
    %606 = vmatpush1.xpose.msra.mxu0 0.0
    %607 = vmatprep.subr.mxu0 0.0
    %608 = vmatpush1.xpose.msra.mxu0 0.0
    %609 = vmatprep.subr.mxu0 0.0
    %610 = vmatpush1.xpose.msra.mxu0 0.0
    %611 = vmatprep.subr.mxu0 0.0
    %612 = vmatpush1.xpose.msra.mxu0 0.0
    %613 = vmatprep.subr.mxu0 0.0
    %614 = vmatpush1.xpose.msra.mxu0 0.0
    %615 = vmatprep.subr.mxu0 0.0
    %616 = vmatpush1.xpose.msra.mxu0 0.0
    %617 = vmatprep.subr.mxu0 0.0
    %618 = vmatpush1.xpose.msra.mxu0 0.0
    %619 = vmatprep.subr.mxu0 0.0
    %620 = vmatpush1.xpose.msra.mxu0 0.0
    %621 = vmatprep.subr.mxu0 0.0
    %622 = vmatpush1.xpose.msra.mxu0 0.0
    %623 = vmatprep.subr.mxu0 0.0
    %624 = vmatpush1.xpose.msra.mxu0 0.0
    %625 = vmatprep.subr.mxu0 0.0
    %626 = vmatpush1.xpose.msra.mxu0 0.0
    %627 = vmatprep.subr.mxu0 0.0
    %628 = vmatpush1.xpose.msra.mxu0 0.0
    %629 = vmatprep.subr.mxu0 0.0
    %630 = vmatpush1.xpose.msra.mxu0 0.0
    %631 = vmatprep.subr.mxu0 0.0
    %632 = vmatpush1.xpose.msra.mxu0 0.0
    %633 = vmatprep.subr.mxu0 0.0
    %634 = vmatpush1.xpose.msra.mxu0 0.0
    %635 = vmatprep.subr.mxu0 0.0
    %636 = vmatpush1.xpose.msra.mxu0 0.0
    %637 = vmatprep.subr.mxu0 0.0
    %638 = vmatpush1.xpose.msra.mxu0 0.0
    %639 = vmatprep.subr.mxu0 0.0
    %640 = vmatpush1.xpose.msra.mxu0 0.0
    %641 = vmatprep.subr.mxu0 0.0
    %642 = vmatpush1.xpose.msra.mxu0 0.0
    %643 = vmatprep.subr.mxu0 0.0
    %644 = vmatpush1.xpose.msra.mxu0 0.0
    %645 = vmatprep.subr.mxu0 0.0
    %646 = vmatpush1.xpose.msra.mxu0 0.0
    %647 = vmatprep.subr.mxu0 0.0
    %648 = vmatpush1.xpose.msra.mxu0 0.0
    %649 = vmatprep.subr.mxu0 0.0
    %650 = vmatpush1.xpose.msra.mxu0 0.0
    %651 = vmatprep.subr.mxu0 0.0
    %652 = vmatpush1.xpose.msra.mxu0 0.0
    %653 = vmatprep.subr.mxu0 0.0
    %654 = vmatpush1.xpose.msra.mxu0 0.0
    %655 = vmatprep.mubr.f32.mxu0 0.0
    %656 = vmatmul.mubr.f32.gmra.mrb[0].mxu0 %v583
    %v657 = vpop.f32.mrb[0].mxu0
    %v658 = vadd.f32 %v188, %v657
    %v659 = vpop.f32.mrb[0].mxu0
    %660 = vmatprep.mubr.f32.mxu0 0.0
    %661 = vmatmul.mubr.f32.gmra.mrb[0].mxu0 %v585
    %v662 = vpop.f32.mrb[0].mxu0
    %v663 = vadd.f32 %v189, %v662
    %v664 = vpop.f32.mrb[0].mxu0
    %665 = vdwg.mxu0
    %v666 = vsel %vm293, %v658, -inf
    %667 = vmax.xlane.f32.xlu0 %v666
    %v668 = vpop.xlane.xlu0 %667
    %v669 = vsel %vm293, %v663, -inf
    %670 = vmax.xlane.f32.xlu0 %v669
    %v671 = vpop.xlane.xlu0 %670
    %v672 = vsub.f32 %v658, %v668
    %v673 = vsub.f32 %v663, %v671
    %v674 = vmul.f32 %v672, 1.442695
    %v675 = vpow.pop %v674
    %v676 = vmul.f32 %v673, 1.442695
    %v677 = vpow.pop %v676
    %v678 = vsel %vm293, %v675, 0.0
    %679 = vadd.xlane.f32.xlu0 %v678
    %v680 = vpop.xlane.xlu0 %679
    %v681 = vsel %vm293, %v677, 0.0
    %682 = vadd.xlane.f32.xlu0 %v681
    %v683 = vpop.xlane.xlu0 %682
    %v684 = vrcp.pop %v680
    %v685 = vrcp.pop %v683
    %v686 = vmul.f32 %v675, %v684
    %v687 = vmul.f32 %v677, %v685
    %688 = vrot.lane.b32.xlu0 %v279, 48
    %v689 = vpop.permute.xlu0 %688
    %690 = vrot.lane.b32.xlu0 %v284, 48
    %v691 = vpop.permute.xlu0 %690
    %v695 = vsel %vm293, %v686, 0
    %v698 = vsel %vm293, %v687, 0
    %700 = vmatprep.subr.mxu0 0.0
    %701 = vmatpush1.msra.mxu0 %v689
    %702 = vmatprep.subr.mxu0 0.0
    %703 = vmatpush1.msra.mxu0 %v691
    %704 = vmatprep.subr.mxu0 0.0
    %705 = vmatpush1.msra.mxu0 0.0
    %706 = vmatprep.subr.mxu0 0.0
    %707 = vmatpush1.msra.mxu0 0.0
    %708 = vmatprep.subr.mxu0 0.0
    %709 = vmatpush1.msra.mxu0 0.0
    %710 = vmatprep.subr.mxu0 0.0
    %711 = vmatpush1.msra.mxu0 0.0
    %712 = vmatprep.subr.mxu0 0.0
    %713 = vmatpush1.msra.mxu0 0.0
    %714 = vmatprep.subr.mxu0 0.0
    %715 = vmatpush1.msra.mxu0 0.0
    %716 = vmatprep.subr.mxu0 0.0
    %717 = vmatpush1.msra.mxu0 0.0
    %718 = vmatprep.subr.mxu0 0.0
    %719 = vmatpush1.msra.mxu0 0.0
    %720 = vmatprep.subr.mxu0 0.0
    %721 = vmatpush1.msra.mxu0 0.0
    %722 = vmatprep.subr.mxu0 0.0
    %723 = vmatpush1.msra.mxu0 0.0
    %724 = vmatprep.subr.mxu0 0.0
    %725 = vmatpush1.msra.mxu0 0.0
    %726 = vmatprep.subr.mxu0 0.0
    %727 = vmatpush1.msra.mxu0 0.0
    %728 = vmatprep.subr.mxu0 0.0
    %729 = vmatpush1.msra.mxu0 0.0
    %730 = vmatprep.subr.mxu0 0.0
    %731 = vmatpush1.msra.mxu0 0.0
    %732 = vmatprep.subr.mxu0 0.0
    %733 = vmatpush1.msra.mxu0 0.0
    %734 = vmatprep.subr.mxu0 0.0
    %735 = vmatpush1.msra.mxu0 0.0
    %736 = vmatprep.subr.mxu0 0.0
    %737 = vmatpush1.msra.mxu0 0.0
    %738 = vmatprep.subr.mxu0 0.0
    %739 = vmatpush1.msra.mxu0 0.0
    %740 = vmatprep.subr.mxu0 0.0
    %741 = vmatpush1.msra.mxu0 0.0
    %742 = vmatprep.subr.mxu0 0.0
    %743 = vmatpush1.msra.mxu0 0.0
    %744 = vmatprep.subr.mxu0 0.0
    %745 = vmatpush1.msra.mxu0 0.0
    %746 = vmatprep.subr.mxu0 0.0
    %747 = vmatpush1.msra.mxu0 0.0
    %748 = vmatprep.subr.mxu0 0.0
    %749 = vmatpush1.msra.mxu0 0.0
    %750 = vmatprep.subr.mxu0 0.0
    %751 = vmatpush1.msra.mxu0 0.0
    %752 = vmatprep.subr.mxu0 0.0
    %753 = vmatpush1.msra.mxu0 0.0
    %754 = vmatprep.subr.mxu0 0.0
    %755 = vmatpush1.msra.mxu0 0.0
    %756 = vmatprep.subr.mxu0 0.0
    %757 = vmatpush1.msra.mxu0 0.0
    %758 = vmatprep.subr.mxu0 0.0
    %759 = vmatpush1.msra.mxu0 0.0
    %760 = vmatprep.subr.mxu0 0.0
    %761 = vmatpush1.msra.mxu0 0.0
    %762 = vmatprep.subr.mxu0 0.0
    %763 = vmatpush1.msra.mxu0 0.0
    %764 = vmatprep.mubr.f32.mxu0 0.0
    %765 = vmatmul.mubr.f32.gmra.mrb[0].mxu0 %v695
    %v766 = vpop.f32.mrb[0].mxu0
    %v767 = vadd.f32 0.0, %v766
    %v768 = vpop.f32.mrb[0].mxu0
    %769 = vmatprep.mubr.f32.mxu0 0.0
    %770 = vmatmul.mubr.f32.gmra.mrb[0].mxu0 %v698
    %v771 = vpop.f32.mrb[0].mxu0
    %v772 = vadd.f32 0.0, %v771
    %v773 = vpop.f32.mrb[0].mxu0
    %774 = vdwg.mxu0
    %v776 = vsel %vm293, %v767, 0
    %v779 = vsel %vm293, %v772, 0
    %781 = vmatprep.subr.mxu0 0.0
    %782 = vmatpush1.msra.mxu0 %v197
    %783 = vmatprep.subr.mxu0 0.0
    %784 = vmatpush1.msra.mxu0 %v198
    %785 = vmatprep.subr.mxu0 0.0
    %786 = vmatpush1.msra.mxu0 0.0
    %787 = vmatprep.subr.mxu0 0.0
    %788 = vmatpush1.msra.mxu0 0.0
    %789 = vmatprep.subr.mxu0 0.0
    %790 = vmatpush1.msra.mxu0 0.0
    %791 = vmatprep.subr.mxu0 0.0
    %792 = vmatpush1.msra.mxu0 0.0
    %793 = vmatprep.subr.mxu0 0.0
    %794 = vmatpush1.msra.mxu0 0.0
    %795 = vmatprep.subr.mxu0 0.0
    %796 = vmatpush1.msra.mxu0 0.0
    %797 = vmatprep.subr.mxu0 0.0
    %798 = vmatpush1.msra.mxu0 0.0
    %799 = vmatprep.subr.mxu0 0.0
    %800 = vmatpush1.msra.mxu0 0.0
    %801 = vmatprep.subr.mxu0 0.0
    %802 = vmatpush1.msra.mxu0 0.0
    %803 = vmatprep.subr.mxu0 0.0
    %804 = vmatpush1.msra.mxu0 0.0
    %805 = vmatprep.subr.mxu0 0.0
    %806 = vmatpush1.msra.mxu0 0.0
    %807 = vmatprep.subr.mxu0 0.0
    %808 = vmatpush1.msra.mxu0 0.0
    %809 = vmatprep.subr.mxu0 0.0
    %810 = vmatpush1.msra.mxu0 0.0
    %811 = vmatprep.subr.mxu0 0.0
    %812 = vmatpush1.msra.mxu0 0.0
    %813 = vmatprep.subr.mxu0 0.0
    %814 = vmatpush1.msra.mxu0 0.0
    %815 = vmatprep.subr.mxu0 0.0
    %816 = vmatpush1.msra.mxu0 0.0
    %817 = vmatprep.subr.mxu0 0.0
    %818 = vmatpush1.msra.mxu0 0.0
    %819 = vmatprep.subr.mxu0 0.0
    %820 = vmatpush1.msra.mxu0 0.0
    %821 = vmatprep.subr.mxu0 0.0
    %822 = vmatpush1.msra.mxu0 0.0
    %823 = vmatprep.subr.mxu0 0.0
    %824 = vmatpush1.msra.mxu0 0.0
    %825 = vmatprep.subr.mxu0 0.0
    %826 = vmatpush1.msra.mxu0 0.0
    %827 = vmatprep.subr.mxu0 0.0
    %828 = vmatpush1.msra.mxu0 0.0
    %829 = vmatprep.subr.mxu0 0.0
    %830 = vmatpush1.msra.mxu0 0.0
    %831 = vmatprep.subr.mxu0 0.0
    %832 = vmatpush1.msra.mxu0 0.0
    %833 = vmatprep.subr.mxu0 0.0
    %834 = vmatpush1.msra.mxu0 0.0
    %835 = vmatprep.subr.mxu0 0.0
    %836 = vmatpush1.msra.mxu0 0.0
    %837 = vmatprep.subr.mxu0 0.0
    %838 = vmatpush1.msra.mxu0 0.0
    %839 = vmatprep.subr.mxu0 0.0
    %840 = vmatpush1.msra.mxu0 0.0
    %841 = vmatprep.subr.mxu0 0.0
    %842 = vmatpush1.msra.mxu0 0.0
    %843 = vmatprep.subr.mxu0 0.0
    %844 = vmatpush1.msra.mxu0 0.0
    %845 = vmatprep.mubr.f32.mxu0 0.0
    %846 = vmatmul.mubr.f32.gmra.mrb[0].mxu0 %v776
    %v847 = vpop.f32.mrb[0].mxu0
    %v848 = vadd.f32 0.0, %v847
    %v849 = vpop.f32.mrb[0].mxu0
    %850 = vmatprep.mubr.f32.mxu0 0.0
    %851 = vmatmul.mubr.f32.gmra.mrb[0].mxu0 %v779
    %v852 = vpop.f32.mrb[0].mxu0
    %v853 = vadd.f32 0.0, %v852
    %v854 = vpop.f32.mrb[0].mxu0
    %855 = vdwg.mxu0
    %v856 = vadd.f32 %v573, %v848
    %v857 = vadd.f32 %v574, %v853
    %v858 = vadd.f32 %v856, %v186
    %v859 = vadd.f32 %v857, %v187
    %v860 = vld [vmem:[%s9] sm:$0x1]
    %v861 = vld [vmem:[%s10] sm:$0x1]
    %v862 = vsel %vm144, %v858, 0.0
    %863 = vadd.xlane.f32.xlu0 %v862
    %v864 = vpop.xlane.xlu0 %863
    %v865 = vsel %vm144, %v859, 0.0
    %866 = vadd.xlane.f32.xlu0 %v865
    %v867 = vpop.xlane.xlu0 %866
    %v868 = vmul.f32 %v864, %v151
    %v869 = vmul.f32 %v867, %v151
    %v870 = vsub.f32 %v858, %v868
    %v871 = vsub.f32 %v859, %v869
    %v872 = vmul.f32 %v870, %v870
    %v873 = vmul.f32 %v871, %v871
    %v874 = vsel %vm144, %v872, 0.0
    %875 = vadd.xlane.f32.xlu0 %v874
    %v876 = vpop.xlane.xlu0 %875
    %v877 = vsel %vm144, %v873, 0.0
    %878 = vadd.xlane.f32.xlu0 %v877
    %v879 = vpop.xlane.xlu0 %878
    %v880 = vmul.f32 %v876, %v151
    %v881 = vmul.f32 %v879, %v151
    %v882 = vadd.f32 %v880, 1e-12
    %v883 = vadd.f32 %v881, 1e-12
    %v884 = vrsqrt.pop %v882
    %v885 = vrsqrt.pop %v883
    %v886 = vmul.f32 %v870, %v884
    %v887 = vmul.f32 %v871, %v885
    %v889 = vlaneseq
    %v890 = vshrl.u32 %v889, 7
    %v891 = vsub.s32 0, %v890
    %v892 = vrot.slane %v860, %v891
    %v894 = vmul.f32 %v886, %v892
    %v895 = vmul.f32 %v887, %v892
    %v897 = vlaneseq
    %v898 = vshrl.u32 %v897, 7
    %v899 = vsub.s32 0, %v898
    %v900 = vrot.slane %v861, %v899
    %v902 = vadd.f32 %v894, %v900
    %v903 = vadd.f32 %v895, %v900
    %v904 = vld [vmem:[%s11] sm:$0xff]
    %v905 = vld [vmem:[%s11 + $0x8] sm:$0xff]
    %v906 = vld [vmem:[%s11 + $0x10] sm:$0xff]
    %v907 = vld [vmem:[%s11 + $0x18] sm:$0xff]
    %v908 = vld [vmem:[#allocation2] sm:$0x1]
    %v910 = vlaneseq
    %v911 = vshrl.u32 %v910, 7
    %v912 = vsub.s32 0, %v911
    %v913 = vrot.slane %v908, %v912
    %v916 = vsel %vm144, %v902, 0
    %v919 = vsel %vm144, %v903, 0
    %921 = vmatprep.subr.mxu0 0.0
    %922 = vmatpush1.msra.mxu0 %v904
    %923 = vmatprep.subr.mxu0 0.0
    %924 = vmatpush1.msra.mxu0 %v905
    %925 = vmatprep.subr.mxu0 0.0
    %926 = vmatpush1.msra.mxu0 %v906
    %927 = vmatprep.subr.mxu0 0.0
    %928 = vmatpush1.msra.mxu0 %v907
    %929 = vmatprep.subr.mxu0 0.0
    %930 = vmatpush1.msra.mxu0 0.0
    %931 = vmatprep.subr.mxu0 0.0
    %932 = vmatpush1.msra.mxu0 0.0
    %933 = vmatprep.subr.mxu0 0.0
    %934 = vmatpush1.msra.mxu0 0.0
    %935 = vmatprep.subr.mxu0 0.0
    %936 = vmatpush1.msra.mxu0 0.0
    %937 = vmatprep.subr.mxu0 0.0
    %938 = vmatpush1.msra.mxu0 0.0
    %939 = vmatprep.subr.mxu0 0.0
    %940 = vmatpush1.msra.mxu0 0.0
    %941 = vmatprep.subr.mxu0 0.0
    %942 = vmatpush1.msra.mxu0 0.0
    %943 = vmatprep.subr.mxu0 0.0
    %944 = vmatpush1.msra.mxu0 0.0
    %945 = vmatprep.subr.mxu0 0.0
    %946 = vmatpush1.msra.mxu0 0.0
    %947 = vmatprep.subr.mxu0 0.0
    %948 = vmatpush1.msra.mxu0 0.0
    %949 = vmatprep.subr.mxu0 0.0
    %950 = vmatpush1.msra.mxu0 0.0
    %951 = vmatprep.subr.mxu0 0.0
    %952 = vmatpush1.msra.mxu0 0.0
    %953 = vmatprep.subr.mxu0 0.0
    %954 = vmatpush1.msra.mxu0 0.0
    %955 = vmatprep.subr.mxu0 0.0
    %956 = vmatpush1.msra.mxu0 0.0
    %957 = vmatprep.subr.mxu0 0.0
    %958 = vmatpush1.msra.mxu0 0.0
    %959 = vmatprep.subr.mxu0 0.0
    %960 = vmatpush1.msra.mxu0 0.0
    %961 = vmatprep.subr.mxu0 0.0
    %962 = vmatpush1.msra.mxu0 0.0
    %963 = vmatprep.subr.mxu0 0.0
    %964 = vmatpush1.msra.mxu0 0.0
    %965 = vmatprep.subr.mxu0 0.0
    %966 = vmatpush1.msra.mxu0 0.0
    %967 = vmatprep.subr.mxu0 0.0
    %968 = vmatpush1.msra.mxu0 0.0
    %969 = vmatprep.subr.mxu0 0.0
    %970 = vmatpush1.msra.mxu0 0.0
    %971 = vmatprep.subr.mxu0 0.0
    %972 = vmatpush1.msra.mxu0 0.0
    %973 = vmatprep.subr.mxu0 0.0
    %974 = vmatpush1.msra.mxu0 0.0
    %975 = vmatprep.subr.mxu0 0.0
    %976 = vmatpush1.msra.mxu0 0.0
    %977 = vmatprep.subr.mxu0 0.0
    %978 = vmatpush1.msra.mxu0 0.0
    %979 = vmatprep.subr.mxu0 0.0
    %980 = vmatpush1.msra.mxu0 0.0
    %981 = vmatprep.subr.mxu0 0.0
    %982 = vmatpush1.msra.mxu0 0.0
    %983 = vmatprep.subr.mxu0 0.0
    %984 = vmatpush1.msra.mxu0 0.0
    %985 = vmatprep.mubr.f32.mxu0 0.0
    %986 = vmatmul.mubr.f32.gmra.mrb[0].mxu0 %v916
    %v987 = vpop.f32.mrb[0].mxu0
    %v988 = vadd.f32 %v913, %v987
    %v989 = vpop.f32.mrb[0].mxu0
    %990 = vmatprep.mubr.f32.mxu0 0.0
    %991 = vmatmul.mubr.f32.gmra.mrb[0].mxu0 %v919
    %v992 = vpop.f32.mrb[0].mxu0
    %v993 = vadd.f32 %v913, %v992
    %v994 = vpop.f32.mrb[0].mxu0
    %995 = vdwg.mxu0
    %v996 = vmul.f32 %v988, 0.5
    %v997 = vmul.f32 %v993, 0.5
    %v998 = vmul.f32 %v988, 0.044715
    %v999 = vmul.f32 %v993, 0.044715
    %v1000 = vmul.f32 %v998, %v988
    %v1001 = vmul.f32 %v999, %v993
    %v1002 = vmul.f32 %v1000, %v988
    %v1003 = vmul.f32 %v1001, %v993
    %v1004 = vadd.f32 %v988, %v1002
    %v1005 = vadd.f32 %v993, %v1003
    %v1006 = vmul.f32 %v1004, 0.7978846
    %v1007 = vmul.f32 %v1005, 0.7978846
    %v1008 = vtanh.pop %v1006
    %v1009 = vtanh.pop %v1007
    %v1010 = vadd.f32 %v1008, 1.0
    %v1011 = vadd.f32 %v1009, 1.0
    %v1012 = vmul.f32 %v996, %v1010
    %v1013 = vmul.f32 %v997, %v1011
    %v1014 = vld [vmem:[%s13] sm:$0xff]
    %v1015 = vld [vmem:[%s13 + $0x8] sm:$0xff]
    %v1016 = vld [vmem:[%s13 + $0x10] sm:$0xff]
    %v1017 = vld [vmem:[%s13 + $0x18] sm:$0xff]
    %v1018 = vld [vmem:[%s13 + $0x20] sm:$0xff]
    %v1019 = vld [vmem:[%s13 + $0x28] sm:$0xff]
    %v1020 = vld [vmem:[%s13 + $0x30] sm:$0xff]
    %v1021 = vld [vmem:[%s13 + $0x38] sm:$0xff]
    %v1022 = vld [vmem:[%s14] sm:$0x1]
    %v1024 = vlaneseq
    %v1025 = vshrl.u32 %v1024, 7
    %v1026 = vsub.s32 0, %v1025
    %v1027 = vrot.slane %v1022, %v1026
    %vm1029 = vcmask 523264
    %v1031 = vsel %vm1029, %v1012, 0
    %v1034 = vsel %vm1029, %v1013, 0
    %1036 = vmatprep.subr.mxu0 0.0
    %1037 = vmatpush1.msra.mxu0 %v1014
    %1038 = vmatprep.subr.mxu0 0.0
    %1039 = vmatpush1.msra.mxu0 %v1015
    %1040 = vmatprep.subr.mxu0 0.0
    %1041 = vmatpush1.msra.mxu0 %v1016
    %1042 = vmatprep.subr.mxu0 0.0
    %1043 = vmatpush1.msra.mxu0 %v1017
    %1044 = vmatprep.subr.mxu0 0.0
    %1045 = vmatpush1.msra.mxu0 %v1018
    %1046 = vmatprep.subr.mxu0 0.0
    %1047 = vmatpush1.msra.mxu0 %v1019
    %1048 = vmatprep.subr.mxu0 0.0
    %1049 = vmatpush1.msra.mxu0 %v1020
    %1050 = vmatprep.subr.mxu0 0.0
    %1051 = vmatpush1.msra.mxu0 %v1021
    %1052 = vmatprep.subr.mxu0 0.0
    %1053 = vmatpush1.msra.mxu0 0.0
    %1054 = vmatprep.subr.mxu0 0.0
    %1055 = vmatpush1.msra.mxu0 0.0
    %1056 = vmatprep.subr.mxu0 0.0
    %1057 = vmatpush1.msra.mxu0 0.0
    %1058 = vmatprep.subr.mxu0 0.0
    %1059 = vmatpush1.msra.mxu0 0.0
    %1060 = vmatprep.subr.mxu0 0.0
    %1061 = vmatpush1.msra.mxu0 0.0
    %1062 = vmatprep.subr.mxu0 0.0
    %1063 = vmatpush1.msra.mxu0 0.0
    %1064 = vmatprep.subr.mxu0 0.0
    %1065 = vmatpush1.msra.mxu0 0.0
    %1066 = vmatprep.subr.mxu0 0.0
    %1067 = vmatpush1.msra.mxu0 0.0
    %1068 = vmatprep.subr.mxu0 0.0
    %1069 = vmatpush1.msra.mxu0 0.0
    %1070 = vmatprep.subr.mxu0 0.0
    %1071 = vmatpush1.msra.mxu0 0.0
    %1072 = vmatprep.subr.mxu0 0.0
    %1073 = vmatpush1.msra.mxu0 0.0
    %1074 = vmatprep.subr.mxu0 0.0
    %1075 = vmatpush1.msra.mxu0 0.0
    %1076 = vmatprep.subr.mxu0 0.0
    %1077 = vmatpush1.msra.mxu0 0.0
    %1078 = vmatprep.subr.mxu0 0.0
    %1079 = vmatpush1.msra.mxu0 0.0
    %1080 = vmatprep.subr.mxu0 0.0
    %1081 = vmatpush1.msra.mxu0 0.0
    %1082 = vmatprep.subr.mxu0 0.0
    %1083 = vmatpush1.msra.mxu0 0.0
    %1084 = vmatprep.subr.mxu0 0.0
    %1085 = vmatpush1.msra.mxu0 0.0
    %1086 = vmatprep.subr.mxu0 0.0
    %1087 = vmatpush1.msra.mxu0 0.0
    %1088 = vmatprep.subr.mxu0 0.0
    %1089 = vmatpush1.msra.mxu0 0.0
    %1090 = vmatprep.subr.mxu0 0.0
    %1091 = vmatpush1.msra.mxu0 0.0
    %1092 = vmatprep.subr.mxu0 0.0
    %1093 = vmatpush1.msra.mxu0 0.0
    %1094 = vmatprep.subr.mxu0 0.0
    %1095 = vmatpush1.msra.mxu0 0.0
    %1096 = vmatprep.subr.mxu0 0.0
    %1097 = vmatpush1.msra.mxu0 0.0
    %1098 = vmatprep.subr.mxu0 0.0
    %1099 = vmatpush1.msra.mxu0 0.0
    %1100 = vmatprep.mubr.f32.mxu0 0.0
    %1101 = vmatmul.mubr.f32.gmra.mrb[0].mxu0 %v1031
    %v1102 = vpop.f32.mrb[0].mxu0
    %v1103 = vadd.f32 %v1027, %v1102
    %v1104 = vpop.f32.mrb[0].mxu0
    %1105 = vmatprep.mubr.f32.mxu0 0.0
    %1106 = vmatmul.mubr.f32.gmra.mrb[0].mxu0 %v1034
    %v1107 = vpop.f32.mrb[0].mxu0
    %v1108 = vadd.f32 %v1027, %v1107
    %v1109 = vpop.f32.mrb[0].mxu0
    %1110 = vdwg.mxu0
    %v1111 = vadd.f32 %v1103, %v902
    %v1112 = vadd.f32 %v1108, %v903
    %v1113 = vld [vmem:[%s15] sm:$0x1]
    %v1114 = vld [vmem:[%s16] sm:$0x1]
    %v1115 = vsel %vm144, %v1111, 0.0
    %1116 = vadd.xlane.f32.xlu0 %v1115
    %v1117 = vpop.xlane.xlu0 %1116
    %v1118 = vsel %vm144, %v1112, 0.0
    %1119 = vadd.xlane.f32.xlu0 %v1118
    %v1120 = vpop.xlane.xlu0 %1119
    %v1121 = vmul.f32 %v1117, %v151
    %v1122 = vmul.f32 %v1120, %v151
    %v1123 = vsub.f32 %v1111, %v1121
    %v1124 = vsub.f32 %v1112, %v1122
    %v1125 = vmul.f32 %v1123, %v1123
    %v1126 = vmul.f32 %v1124, %v1124
    %v1127 = vsel %vm144, %v1125, 0.0
    %1128 = vadd.xlane.f32.xlu0 %v1127
    %v1129 = vpop.xlane.xlu0 %1128
    %v1130 = vsel %vm144, %v1126, 0.0
    %1131 = vadd.xlane.f32.xlu0 %v1130
    %v1132 = vpop.xlane.xlu0 %1131
    %v1133 = vmul.f32 %v1129, %v151
    %v1134 = vmul.f32 %v1132, %v151
    %v1135 = vadd.f32 %v1133, 1e-12
    %v1136 = vadd.f32 %v1134, 1e-12
    %v1137 = vrsqrt.pop %v1135
    %v1138 = vrsqrt.pop %v1136
    %v1139 = vmul.f32 %v1123, %v1137
    %v1140 = vmul.f32 %v1124, %v1138
    %v1142 = vlaneseq
    %v1143 = vshrl.u32 %v1142, 7
    %v1144 = vsub.s32 0, %v1143
    %v1145 = vrot.slane %v1113, %v1144
    %v1147 = vmul.f32 %v1139, %v1145
    %v1148 = vmul.f32 %v1140, %v1145
    %v1150 = vlaneseq
    %v1151 = vshrl.u32 %v1150, 7
    %v1152 = vsub.s32 0, %v1151
    %v1153 = vrot.slane %v1114, %v1152
    %v1155 = vadd.f32 %v1147, %v1153
    %v1156 = vadd.f32 %v1148, %v1153
    %s1157 = scalar_lea.vmem %s5, 32
    %v1158 = vld [vmem:[%s1157] sm:$0xff]
    %v1159 = vld [vmem:[%s1157 + $0x8] sm:$0xff]
    %v1160 = vld [vmem:[%s1157 + $0x10] sm:$0xff]
    %v1161 = vld [vmem:[%s1157 + $0x18] sm:$0xff]
    %s1162 = scalar_lea.vmem %s6, 1
    %v1163 = vld [vmem:[%s1162] sm:$0x1]
    %s1164 = scalar_lea.vmem %s7, 32
    %v1165 = vld [vmem:[%s1164] sm:$0xff]
    %v1166 = vld [vmem:[%s1164 + $0x8] sm:$0xff]
    %v1167 = vld [vmem:[%s1164 + $0x10] sm:$0xff]
    %v1168 = vld [vmem:[%s1164 + $0x18] sm:$0xff]
    %s1169 = scalar_lea.vmem %s8, 1
    %v1170 = vld [vmem:[%s1169] sm:$0x1]
    %v1172 = vlaneseq
    %v1173 = vshrl.u32 %v1172, 7
    %v1174 = vsub.s32 0, %v1173
    %v1175 = vrot.slane %v1163, %v1174
    %v1178 = vsel %vm144, %v1155, 0
    %v1181 = vsel %vm144, %v1156, 0
    %1183 = vmatprep.subr.mxu0 0.0
    %1184 = vmatpush1.msra.mxu0 %v1158
    %1185 = vmatprep.subr.mxu0 0.0
    %1186 = vmatpush1.msra.mxu0 %v1159
    %1187 = vmatprep.subr.mxu0 0.0
    %1188 = vmatpush1.msra.mxu0 %v1160
    %1189 = vmatprep.subr.mxu0 0.0
    %1190 = vmatpush1.msra.mxu0 %v1161
    %1191 = vmatprep.subr.mxu0 0.0
    %1192 = vmatpush1.msra.mxu0 0.0
    %1193 = vmatprep.subr.mxu0 0.0
    %1194 = vmatpush1.msra.mxu0 0.0
    %1195 = vmatprep.subr.mxu0 0.0
    %1196 = vmatpush1.msra.mxu0 0.0
    %1197 = vmatprep.subr.mxu0 0.0
    %1198 = vmatpush1.msra.mxu0 0.0
    %1199 = vmatprep.subr.mxu0 0.0
    %1200 = vmatpush1.msra.mxu0 0.0
    %1201 = vmatprep.subr.mxu0 0.0
    %1202 = vmatpush1.msra.mxu0 0.0
    %1203 = vmatprep.subr.mxu0 0.0
    %1204 = vmatpush1.msra.mxu0 0.0
    %1205 = vmatprep.subr.mxu0 0.0
    %1206 = vmatpush1.msra.mxu0 0.0
    %1207 = vmatprep.subr.mxu0 0.0
    %1208 = vmatpush1.msra.mxu0 0.0
    %1209 = vmatprep.subr.mxu0 0.0
    %1210 = vmatpush1.msra.mxu0 0.0
    %1211 = vmatprep.subr.mxu0 0.0
    %1212 = vmatpush1.msra.mxu0 0.0
    %1213 = vmatprep.subr.mxu0 0.0
    %1214 = vmatpush1.msra.mxu0 0.0
    %1215 = vmatprep.subr.mxu0 0.0
    %1216 = vmatpush1.msra.mxu0 0.0
    %1217 = vmatprep.subr.mxu0 0.0
    %1218 = vmatpush1.msra.mxu0 0.0
    %1219 = vmatprep.subr.mxu0 0.0
    %1220 = vmatpush1.msra.mxu0 0.0
    %1221 = vmatprep.subr.mxu0 0.0
    %1222 = vmatpush1.msra.mxu0 0.0
    %1223 = vmatprep.subr.mxu0 0.0
    %1224 = vmatpush1.msra.mxu0 0.0
    %1225 = vmatprep.subr.mxu0 0.0
    %1226 = vmatpush1.msra.mxu0 0.0
    %1227 = vmatprep.subr.mxu0 0.0
    %1228 = vmatpush1.msra.mxu0 0.0
    %1229 = vmatprep.subr.mxu0 0.0
    %1230 = vmatpush1.msra.mxu0 0.0
    %1231 = vmatprep.subr.mxu0 0.0
    %1232 = vmatpush1.msra.mxu0 0.0
    %1233 = vmatprep.subr.mxu0 0.0
    %1234 = vmatpush1.msra.mxu0 0.0
    %1235 = vmatprep.subr.mxu0 0.0
    %1236 = vmatpush1.msra.mxu0 0.0
    %1237 = vmatprep.subr.mxu0 0.0
    %1238 = vmatpush1.msra.mxu0 0.0
    %1239 = vmatprep.subr.mxu0 0.0
    %1240 = vmatpush1.msra.mxu0 0.0
    %1241 = vmatprep.subr.mxu0 0.0
    %1242 = vmatpush1.msra.mxu0 0.0
    %1243 = vmatprep.subr.mxu0 0.0
    %1244 = vmatpush1.msra.mxu0 0.0
    %1245 = vmatprep.subr.mxu0 0.0
    %1246 = vmatpush1.msra.mxu0 0.0
    %1247 = vmatprep.mubr.f32.mxu0 0.0
    %1248 = vmatmul.mubr.f32.gmra.mrb[0].mxu0 %v1178
    %v1249 = vpop.f32.mrb[0].mxu0
    %v1250 = vadd.f32 %v1175, %v1249
    %v1251 = vpop.f32.mrb[0].mxu0
    %1252 = vmatprep.mubr.f32.mxu0 0.0
    %1253 = vmatmul.mubr.f32.gmra.mrb[0].mxu0 %v1181
    %v1254 = vpop.f32.mrb[0].mxu0
    %v1255 = vadd.f32 %v1175, %v1254
    %v1256 = vpop.f32.mrb[0].mxu0
    %1257 = vdwg.mxu0
    %1260 = vrot.lane.b32.xlu0 %v1250, 96
    %v1261 = vpop.permute.xlu0 %1260
    %1262 = vrot.lane.b32.xlu0 %v1255, 96
    %v1263 = vpop.permute.xlu0 %1262
    %v1264 = vsel %vm293, %v1250, 0
    %v1266 = vsel %vm293, %v1255, 0
    %v1268 = vsel %vm293, %v1261, 0
    %v1270 = vsel %vm293, %v1263, 0
    %1272 = vmatprep.subr.mxu0 0.0
    %1273 = vmatpush1.xpose.msra.mxu0 %v1268
    %1274 = vmatprep.subr.mxu0 0.0
    %1275 = vmatpush1.xpose.msra.mxu0 %v1270
    %1276 = vmatprep.subr.mxu0 0.0
    %1277 = vmatpush1.xpose.msra.mxu0 0.0
    %1278 = vmatprep.subr.mxu0 0.0
    %1279 = vmatpush1.xpose.msra.mxu0 0.0
    %1280 = vmatprep.subr.mxu0 0.0
    %1281 = vmatpush1.xpose.msra.mxu0 0.0
    %1282 = vmatprep.subr.mxu0 0.0
    %1283 = vmatpush1.xpose.msra.mxu0 0.0
    %1284 = vmatprep.subr.mxu0 0.0
    %1285 = vmatpush1.xpose.msra.mxu0 0.0
    %1286 = vmatprep.subr.mxu0 0.0
    %1287 = vmatpush1.xpose.msra.mxu0 0.0
    %1288 = vmatprep.subr.mxu0 0.0
    %1289 = vmatpush1.xpose.msra.mxu0 0.0
    %1290 = vmatprep.subr.mxu0 0.0
    %1291 = vmatpush1.xpose.msra.mxu0 0.0
    %1292 = vmatprep.subr.mxu0 0.0
    %1293 = vmatpush1.xpose.msra.mxu0 0.0
    %1294 = vmatprep.subr.mxu0 0.0
    %1295 = vmatpush1.xpose.msra.mxu0 0.0
    %1296 = vmatprep.subr.mxu0 0.0
    %1297 = vmatpush1.xpose.msra.mxu0 0.0
    %1298 = vmatprep.subr.mxu0 0.0
    %1299 = vmatpush1.xpose.msra.mxu0 0.0
    %1300 = vmatprep.subr.mxu0 0.0
    %1301 = vmatpush1.xpose.msra.mxu0 0.0
    %1302 = vmatprep.subr.mxu0 0.0
    %1303 = vmatpush1.xpose.msra.mxu0 0.0
    %1304 = vmatprep.subr.mxu0 0.0
    %1305 = vmatpush1.xpose.msra.mxu0 0.0
    %1306 = vmatprep.subr.mxu0 0.0
    %1307 = vmatpush1.xpose.msra.mxu0 0.0
    %1308 = vmatprep.subr.mxu0 0.0
    %1309 = vmatpush1.xpose.msra.mxu0 0.0
    %1310 = vmatprep.subr.mxu0 0.0
    %1311 = vmatpush1.xpose.msra.mxu0 0.0
    %1312 = vmatprep.subr.mxu0 0.0
    %1313 = vmatpush1.xpose.msra.mxu0 0.0
    %1314 = vmatprep.subr.mxu0 0.0
    %1315 = vmatpush1.xpose.msra.mxu0 0.0
    %1316 = vmatprep.subr.mxu0 0.0
    %1317 = vmatpush1.xpose.msra.mxu0 0.0
    %1318 = vmatprep.subr.mxu0 0.0
    %1319 = vmatpush1.xpose.msra.mxu0 0.0
    %1320 = vmatprep.subr.mxu0 0.0
    %1321 = vmatpush1.xpose.msra.mxu0 0.0
    %1322 = vmatprep.subr.mxu0 0.0
    %1323 = vmatpush1.xpose.msra.mxu0 0.0
    %1324 = vmatprep.subr.mxu0 0.0
    %1325 = vmatpush1.xpose.msra.mxu0 0.0
    %1326 = vmatprep.subr.mxu0 0.0
    %1327 = vmatpush1.xpose.msra.mxu0 0.0
    %1328 = vmatprep.subr.mxu0 0.0
    %1329 = vmatpush1.xpose.msra.mxu0 0.0
    %1330 = vmatprep.subr.mxu0 0.0
    %1331 = vmatpush1.xpose.msra.mxu0 0.0
    %1332 = vmatprep.subr.mxu0 0.0
    %1333 = vmatpush1.xpose.msra.mxu0 0.0
    %1334 = vmatprep.subr.mxu0 0.0
    %1335 = vmatpush1.xpose.msra.mxu0 0.0
    %1336 = vmatprep.mubr.f32.mxu0 0.0
    %1337 = vmatmul.mubr.f32.gmra.mrb[0].mxu0 %v1264
    %v1338 = vpop.f32.mrb[0].mxu0
    %v1339 = vadd.f32 %v188, %v1338
    %v1340 = vpop.f32.mrb[0].mxu0
    %1341 = vmatprep.mubr.f32.mxu0 0.0
    %1342 = vmatmul.mubr.f32.gmra.mrb[0].mxu0 %v1266
    %v1343 = vpop.f32.mrb[0].mxu0
    %v1344 = vadd.f32 %v189, %v1343
    %v1345 = vpop.f32.mrb[0].mxu0
    %1346 = vdwg.mxu0
    %v1347 = vsel %vm293, %v1339, -inf
    %1348 = vmax.xlane.f32.xlu0 %v1347
    %v1349 = vpop.xlane.xlu0 %1348
    %v1350 = vsel %vm293, %v1344, -inf
    %1351 = vmax.xlane.f32.xlu0 %v1350
    %v1352 = vpop.xlane.xlu0 %1351
    %v1353 = vsub.f32 %v1339, %v1349
    %v1354 = vsub.f32 %v1344, %v1352
    %v1355 = vmul.f32 %v1353, 1.442695
    %v1356 = vpow.pop %v1355
    %v1357 = vmul.f32 %v1354, 1.442695
    %v1358 = vpow.pop %v1357
    %v1359 = vsel %vm293, %v1356, 0.0
    %1360 = vadd.xlane.f32.xlu0 %v1359
    %v1361 = vpop.xlane.xlu0 %1360
    %v1362 = vsel %vm293, %v1358, 0.0
    %1363 = vadd.xlane.f32.xlu0 %v1362
    %v1364 = vpop.xlane.xlu0 %1363
    %v1365 = vrcp.pop %v1361
    %v1366 = vrcp.pop %v1364
    %v1367 = vmul.f32 %v1356, %v1365
    %v1368 = vmul.f32 %v1358, %v1366
    %1369 = vrot.lane.b32.xlu0 %v1250, 64
    %v1370 = vpop.permute.xlu0 %1369
    %1371 = vrot.lane.b32.xlu0 %v1255, 64
    %v1372 = vpop.permute.xlu0 %1371
    %v1376 = vsel %vm293, %v1367, 0
    %v1379 = vsel %vm293, %v1368, 0
    %1381 = vmatprep.subr.mxu0 0.0
    %1382 = vmatpush1.msra.mxu0 %v1370
    %1383 = vmatprep.subr.mxu0 0.0
    %1384 = vmatpush1.msra.mxu0 %v1372
    %1385 = vmatprep.subr.mxu0 0.0
    %1386 = vmatpush1.msra.mxu0 0.0
    %1387 = vmatprep.subr.mxu0 0.0
    %1388 = vmatpush1.msra.mxu0 0.0
    %1389 = vmatprep.subr.mxu0 0.0
    %1390 = vmatpush1.msra.mxu0 0.0
    %1391 = vmatprep.subr.mxu0 0.0
    %1392 = vmatpush1.msra.mxu0 0.0
    %1393 = vmatprep.subr.mxu0 0.0
    %1394 = vmatpush1.msra.mxu0 0.0
    %1395 = vmatprep.subr.mxu0 0.0
    %1396 = vmatpush1.msra.mxu0 0.0
    %1397 = vmatprep.subr.mxu0 0.0
    %1398 = vmatpush1.msra.mxu0 0.0
    %1399 = vmatprep.subr.mxu0 0.0
    %1400 = vmatpush1.msra.mxu0 0.0
    %1401 = vmatprep.subr.mxu0 0.0
    %1402 = vmatpush1.msra.mxu0 0.0
    %1403 = vmatprep.subr.mxu0 0.0
    %1404 = vmatpush1.msra.mxu0 0.0
    %1405 = vmatprep.subr.mxu0 0.0
    %1406 = vmatpush1.msra.mxu0 0.0
    %1407 = vmatprep.subr.mxu0 0.0
    %1408 = vmatpush1.msra.mxu0 0.0
    %1409 = vmatprep.subr.mxu0 0.0
    %1410 = vmatpush1.msra.mxu0 0.0
    %1411 = vmatprep.subr.mxu0 0.0
    %1412 = vmatpush1.msra.mxu0 0.0
    %1413 = vmatprep.subr.mxu0 0.0
    %1414 = vmatpush1.msra.mxu0 0.0
    %1415 = vmatprep.subr.mxu0 0.0
    %1416 = vmatpush1.msra.mxu0 0.0
    %1417 = vmatprep.subr.mxu0 0.0
    %1418 = vmatpush1.msra.mxu0 0.0
    %1419 = vmatprep.subr.mxu0 0.0
    %1420 = vmatpush1.msra.mxu0 0.0
    %1421 = vmatprep.subr.mxu0 0.0
    %1422 = vmatpush1.msra.mxu0 0.0
    %1423 = vmatprep.subr.mxu0 0.0
    %1424 = vmatpush1.msra.mxu0 0.0
    %1425 = vmatprep.subr.mxu0 0.0
    %1426 = vmatpush1.msra.mxu0 0.0
    %1427 = vmatprep.subr.mxu0 0.0
    %1428 = vmatpush1.msra.mxu0 0.0
    %1429 = vmatprep.subr.mxu0 0.0
    %1430 = vmatpush1.msra.mxu0 0.0
    %1431 = vmatprep.subr.mxu0 0.0
    %1432 = vmatpush1.msra.mxu0 0.0
    %1433 = vmatprep.subr.mxu0 0.0
    %1434 = vmatpush1.msra.mxu0 0.0
    %1435 = vmatprep.subr.mxu0 0.0
    %1436 = vmatpush1.msra.mxu0 0.0
    %1437 = vmatprep.subr.mxu0 0.0
    %1438 = vmatpush1.msra.mxu0 0.0
    %1439 = vmatprep.subr.mxu0 0.0
    %1440 = vmatpush1.msra.mxu0 0.0
    %1441 = vmatprep.subr.mxu0 0.0
    %1442 = vmatpush1.msra.mxu0 0.0
    %1443 = vmatprep.subr.mxu0 0.0
    %1444 = vmatpush1.msra.mxu0 0.0
    %1445 = vmatprep.mubr.f32.mxu0 0.0
    %1446 = vmatmul.mubr.f32.gmra.mrb[0].mxu0 %v1376
    %v1447 = vpop.f32.mrb[0].mxu0
    %v1448 = vadd.f32 0.0, %v1447
    %v1449 = vpop.f32.mrb[0].mxu0
    %1450 = vmatprep.mubr.f32.mxu0 0.0
    %1451 = vmatmul.mubr.f32.gmra.mrb[0].mxu0 %v1379
    %v1452 = vpop.f32.mrb[0].mxu0
    %v1453 = vadd.f32 0.0, %v1452
    %v1454 = vpop.f32.mrb[0].mxu0
    %1455 = vdwg.mxu0
    %v1457 = vsel %vm293, %v1448, 0
    %v1460 = vsel %vm293, %v1453, 0
    %1462 = vmatprep.subr.mxu0 0.0
    %1463 = vmatpush1.msra.mxu0 %v1165
    %1464 = vmatprep.subr.mxu0 0.0
    %1465 = vmatpush1.msra.mxu0 %v1166
    %1466 = vmatprep.subr.mxu0 0.0
    %1467 = vmatpush1.msra.mxu0 0.0
    %1468 = vmatprep.subr.mxu0 0.0
    %1469 = vmatpush1.msra.mxu0 0.0
    %1470 = vmatprep.subr.mxu0 0.0
    %1471 = vmatpush1.msra.mxu0 0.0
    %1472 = vmatprep.subr.mxu0 0.0
    %1473 = vmatpush1.msra.mxu0 0.0
    %1474 = vmatprep.subr.mxu0 0.0
    %1475 = vmatpush1.msra.mxu0 0.0
    %1476 = vmatprep.subr.mxu0 0.0
    %1477 = vmatpush1.msra.mxu0 0.0
    %1478 = vmatprep.subr.mxu0 0.0
    %1479 = vmatpush1.msra.mxu0 0.0
    %1480 = vmatprep.subr.mxu0 0.0
    %1481 = vmatpush1.msra.mxu0 0.0
    %1482 = vmatprep.subr.mxu0 0.0
    %1483 = vmatpush1.msra.mxu0 0.0
    %1484 = vmatprep.subr.mxu0 0.0
    %1485 = vmatpush1.msra.mxu0 0.0
    %1486 = vmatprep.subr.mxu0 0.0
    %1487 = vmatpush1.msra.mxu0 0.0
    %1488 = vmatprep.subr.mxu0 0.0
    %1489 = vmatpush1.msra.mxu0 0.0
    %1490 = vmatprep.subr.mxu0 0.0
    %1491 = vmatpush1.msra.mxu0 0.0
    %1492 = vmatprep.subr.mxu0 0.0
    %1493 = vmatpush1.msra.mxu0 0.0
    %1494 = vmatprep.subr.mxu0 0.0
    %1495 = vmatpush1.msra.mxu0 0.0
    %1496 = vmatprep.subr.mxu0 0.0
    %1497 = vmatpush1.msra.mxu0 0.0
    %1498 = vmatprep.subr.mxu0 0.0
    %1499 = vmatpush1.msra.mxu0 0.0
    %1500 = vmatprep.subr.mxu0 0.0
    %1501 = vmatpush1.msra.mxu0 0.0
    %1502 = vmatprep.subr.mxu0 0.0
    %1503 = vmatpush1.msra.mxu0 0.0
    %1504 = vmatprep.subr.mxu0 0.0
    %1505 = vmatpush1.msra.mxu0 0.0
    %1506 = vmatprep.subr.mxu0 0.0
    %1507 = vmatpush1.msra.mxu0 0.0
    %1508 = vmatprep.subr.mxu0 0.0
    %1509 = vmatpush1.msra.mxu0 0.0
    %1510 = vmatprep.subr.mxu0 0.0
    %1511 = vmatpush1.msra.mxu0 0.0
    %1512 = vmatprep.subr.mxu0 0.0
    %1513 = vmatpush1.msra.mxu0 0.0
    %1514 = vmatprep.subr.mxu0 0.0
    %1515 = vmatpush1.msra.mxu0 0.0
    %1516 = vmatprep.subr.mxu0 0.0
    %1517 = vmatpush1.msra.mxu0 0.0
    %1518 = vmatprep.subr.mxu0 0.0
    %1519 = vmatpush1.msra.mxu0 0.0
    %1520 = vmatprep.subr.mxu0 0.0
    %1521 = vmatpush1.msra.mxu0 0.0
    %1522 = vmatprep.subr.mxu0 0.0
    %1523 = vmatpush1.msra.mxu0 0.0
    %1524 = vmatprep.subr.mxu0 0.0
    %1525 = vmatpush1.msra.mxu0 0.0
    %1526 = vmatprep.mubr.f32.mxu0 0.0
    %1527 = vmatmul.mubr.f32.gmra.mrb[0].mxu0 %v1457
    %v1528 = vpop.f32.mrb[0].mxu0
    %v1529 = vadd.f32 0.0, %v1528
    %v1530 = vpop.f32.mrb[0].mxu0
    %1531 = vmatprep.mubr.f32.mxu0 0.0
    %1532 = vmatmul.mubr.f32.gmra.mrb[0].mxu0 %v1460
    %v1533 = vpop.f32.mrb[0].mxu0
    %v1534 = vadd.f32 0.0, %v1533
    %v1535 = vpop.f32.mrb[0].mxu0
    %1536 = vdwg.mxu0
    %v1538 = vlaneseq
    %v1539 = vshrl.u32 %v1538, 7
    %v1540 = vsub.s32 0, %v1539
    %v1541 = vrot.slane %v1170, %v1540
    %v1543 = vadd.f32 %v1541, %v1529
    %v1544 = vadd.f32 %v1541, %v1534
    %1545 = vrot.lane.b32.xlu0 %v1250, 112
    %v1546 = vpop.permute.xlu0 %1545
    %1547 = vrot.lane.b32.xlu0 %v1255, 112
    %v1548 = vpop.permute.xlu0 %1547
    %1549 = vrot.lane.b32.xlu0 %v1250, 80
    %v1550 = vpop.permute.xlu0 %1549
    %1551 = vrot.lane.b32.xlu0 %v1255, 80
    %v1552 = vpop.permute.xlu0 %1551
    %v1553 = vsel %vm293, %v1546, 0
    %v1555 = vsel %vm293, %v1548, 0
    %v1557 = vsel %vm293, %v1550, 0
    %v1559 = vsel %vm293, %v1552, 0
    %1561 = vmatprep.subr.mxu0 0.0
    %1562 = vmatpush1.xpose.msra.mxu0 %v1557
    %1563 = vmatprep.subr.mxu0 0.0
    %1564 = vmatpush1.xpose.msra.mxu0 %v1559
    %1565 = vmatprep.subr.mxu0 0.0
    %1566 = vmatpush1.xpose.msra.mxu0 0.0
    %1567 = vmatprep.subr.mxu0 0.0
    %1568 = vmatpush1.xpose.msra.mxu0 0.0
    %1569 = vmatprep.subr.mxu0 0.0
    %1570 = vmatpush1.xpose.msra.mxu0 0.0
    %1571 = vmatprep.subr.mxu0 0.0
    %1572 = vmatpush1.xpose.msra.mxu0 0.0
    %1573 = vmatprep.subr.mxu0 0.0
    %1574 = vmatpush1.xpose.msra.mxu0 0.0
    %1575 = vmatprep.subr.mxu0 0.0
    %1576 = vmatpush1.xpose.msra.mxu0 0.0
    %1577 = vmatprep.subr.mxu0 0.0
    %1578 = vmatpush1.xpose.msra.mxu0 0.0
    %1579 = vmatprep.subr.mxu0 0.0
    %1580 = vmatpush1.xpose.msra.mxu0 0.0
    %1581 = vmatprep.subr.mxu0 0.0
    %1582 = vmatpush1.xpose.msra.mxu0 0.0
    %1583 = vmatprep.subr.mxu0 0.0
    %1584 = vmatpush1.xpose.msra.mxu0 0.0
    %1585 = vmatprep.subr.mxu0 0.0
    %1586 = vmatpush1.xpose.msra.mxu0 0.0
    %1587 = vmatprep.subr.mxu0 0.0
    %1588 = vmatpush1.xpose.msra.mxu0 0.0
    %1589 = vmatprep.subr.mxu0 0.0
    %1590 = vmatpush1.xpose.msra.mxu0 0.0
    %1591 = vmatprep.subr.mxu0 0.0
    %1592 = vmatpush1.xpose.msra.mxu0 0.0
    %1593 = vmatprep.subr.mxu0 0.0
    %1594 = vmatpush1.xpose.msra.mxu0 0.0
    %1595 = vmatprep.subr.mxu0 0.0
    %1596 = vmatpush1.xpose.msra.mxu0 0.0
    %1597 = vmatprep.subr.mxu0 0.0
    %1598 = vmatpush1.xpose.msra.mxu0 0.0
    %1599 = vmatprep.subr.mxu0 0.0
    %1600 = vmatpush1.xpose.msra.mxu0 0.0
    %1601 = vmatprep.subr.mxu0 0.0
    %1602 = vmatpush1.xpose.msra.mxu0 0.0
    %1603 = vmatprep.subr.mxu0 0.0
    %1604 = vmatpush1.xpose.msra.mxu0 0.0
    %1605 = vmatprep.subr.mxu0 0.0
    %1606 = vmatpush1.xpose.msra.mxu0 0.0
    %1607 = vmatprep.subr.mxu0 0.0
    %1608 = vmatpush1.xpose.msra.mxu0 0.0
    %1609 = vmatprep.subr.mxu0 0.0
    %1610 = vmatpush1.xpose.msra.mxu0 0.0
    %1611 = vmatprep.subr.mxu0 0.0
    %1612 = vmatpush1.xpose.msra.mxu0 0.0
    %1613 = vmatprep.subr.mxu0 0.0
    %1614 = vmatpush1.xpose.msra.mxu0 0.0
    %1615 = vmatprep.subr.mxu0 0.0
    %1616 = vmatpush1.xpose.msra.mxu0 0.0
    %1617 = vmatprep.subr.mxu0 0.0
    %1618 = vmatpush1.xpose.msra.mxu0 0.0
    %1619 = vmatprep.subr.mxu0 0.0
    %1620 = vmatpush1.xpose.msra.mxu0 0.0
    %1621 = vmatprep.subr.mxu0 0.0
    %1622 = vmatpush1.xpose.msra.mxu0 0.0
    %1623 = vmatprep.subr.mxu0 0.0
    %1624 = vmatpush1.xpose.msra.mxu0 0.0
    %1625 = vmatprep.mubr.f32.mxu0 0.0
    %1626 = vmatmul.mubr.f32.gmra.mrb[0].mxu0 %v1553
    %v1627 = vpop.f32.mrb[0].mxu0
    %v1628 = vadd.f32 %v188, %v1627
    %v1629 = vpop.f32.mrb[0].mxu0
    %1630 = vmatprep.mubr.f32.mxu0 0.0
    %1631 = vmatmul.mubr.f32.gmra.mrb[0].mxu0 %v1555
    %v1632 = vpop.f32.mrb[0].mxu0
    %v1633 = vadd.f32 %v189, %v1632
    %v1634 = vpop.f32.mrb[0].mxu0
    %1635 = vdwg.mxu0
    %v1636 = vsel %vm293, %v1628, -inf
    %1637 = vmax.xlane.f32.xlu0 %v1636
    %v1638 = vpop.xlane.xlu0 %1637
    %v1639 = vsel %vm293, %v1633, -inf
    %1640 = vmax.xlane.f32.xlu0 %v1639
    %v1641 = vpop.xlane.xlu0 %1640
    %v1642 = vsub.f32 %v1628, %v1638
    %v1643 = vsub.f32 %v1633, %v1641
    %v1644 = vmul.f32 %v1642, 1.442695
    %v1645 = vpow.pop %v1644
    %v1646 = vmul.f32 %v1643, 1.442695
    %v1647 = vpow.pop %v1646
    %v1648 = vsel %vm293, %v1645, 0.0
    %1649 = vadd.xlane.f32.xlu0 %v1648
    %v1650 = vpop.xlane.xlu0 %1649
    %v1651 = vsel %vm293, %v1647, 0.0
    %1652 = vadd.xlane.f32.xlu0 %v1651
    %v1653 = vpop.xlane.xlu0 %1652
    %v1654 = vrcp.pop %v1650
    %v1655 = vrcp.pop %v1653
    %v1656 = vmul.f32 %v1645, %v1654
    %v1657 = vmul.f32 %v1647, %v1655
    %1658 = vrot.lane.b32.xlu0 %v1250, 48
    %v1659 = vpop.permute.xlu0 %1658
    %1660 = vrot.lane.b32.xlu0 %v1255, 48
    %v1661 = vpop.permute.xlu0 %1660
    %v1665 = vsel %vm293, %v1656, 0
    %v1668 = vsel %vm293, %v1657, 0
    %1670 = vmatprep.subr.mxu0 0.0
    %1671 = vmatpush1.msra.mxu0 %v1659
    %1672 = vmatprep.subr.mxu0 0.0
    %1673 = vmatpush1.msra.mxu0 %v1661
    %1674 = vmatprep.subr.mxu0 0.0
    %1675 = vmatpush1.msra.mxu0 0.0
    %1676 = vmatprep.subr.mxu0 0.0
    %1677 = vmatpush1.msra.mxu0 0.0
    %1678 = vmatprep.subr.mxu0 0.0
    %1679 = vmatpush1.msra.mxu0 0.0
    %1680 = vmatprep.subr.mxu0 0.0
    %1681 = vmatpush1.msra.mxu0 0.0
    %1682 = vmatprep.subr.mxu0 0.0
    %1683 = vmatpush1.msra.mxu0 0.0
    %1684 = vmatprep.subr.mxu0 0.0
    %1685 = vmatpush1.msra.mxu0 0.0
    %1686 = vmatprep.subr.mxu0 0.0
    %1687 = vmatpush1.msra.mxu0 0.0
    %1688 = vmatprep.subr.mxu0 0.0
    %1689 = vmatpush1.msra.mxu0 0.0
    %1690 = vmatprep.subr.mxu0 0.0
    %1691 = vmatpush1.msra.mxu0 0.0
    %1692 = vmatprep.subr.mxu0 0.0
    %1693 = vmatpush1.msra.mxu0 0.0
    %1694 = vmatprep.subr.mxu0 0.0
    %1695 = vmatpush1.msra.mxu0 0.0
    %1696 = vmatprep.subr.mxu0 0.0
    %1697 = vmatpush1.msra.mxu0 0.0
    %1698 = vmatprep.subr.mxu0 0.0
    %1699 = vmatpush1.msra.mxu0 0.0
    %1700 = vmatprep.subr.mxu0 0.0
    %1701 = vmatpush1.msra.mxu0 0.0
    %1702 = vmatprep.subr.mxu0 0.0
    %1703 = vmatpush1.msra.mxu0 0.0
    %1704 = vmatprep.subr.mxu0 0.0
    %1705 = vmatpush1.msra.mxu0 0.0
    %1706 = vmatprep.subr.mxu0 0.0
    %1707 = vmatpush1.msra.mxu0 0.0
    %1708 = vmatprep.subr.mxu0 0.0
    %1709 = vmatpush1.msra.mxu0 0.0
    %1710 = vmatprep.subr.mxu0 0.0
    %1711 = vmatpush1.msra.mxu0 0.0
    %1712 = vmatprep.subr.mxu0 0.0
    %1713 = vmatpush1.msra.mxu0 0.0
    %1714 = vmatprep.subr.mxu0 0.0
    %1715 = vmatpush1.msra.mxu0 0.0
    %1716 = vmatprep.subr.mxu0 0.0
    %1717 = vmatpush1.msra.mxu0 0.0
    %1718 = vmatprep.subr.mxu0 0.0
    %1719 = vmatpush1.msra.mxu0 0.0
    %1720 = vmatprep.subr.mxu0 0.0
    %1721 = vmatpush1.msra.mxu0 0.0
    %1722 = vmatprep.subr.mxu0 0.0
    %1723 = vmatpush1.msra.mxu0 0.0
    %1724 = vmatprep.subr.mxu0 0.0
    %1725 = vmatpush1.msra.mxu0 0.0
    %1726 = vmatprep.subr.mxu0 0.0
    %1727 = vmatpush1.msra.mxu0 0.0
    %1728 = vmatprep.subr.mxu0 0.0
    %1729 = vmatpush1.msra.mxu0 0.0
    %1730 = vmatprep.subr.mxu0 0.0
    %1731 = vmatpush1.msra.mxu0 0.0
    %1732 = vmatprep.subr.mxu0 0.0
    %1733 = vmatpush1.msra.mxu0 0.0
    %1734 = vmatprep.mubr.f32.mxu0 0.0
    %1735 = vmatmul.mubr.f32.gmra.mrb[0].mxu0 %v1665
    %v1736 = vpop.f32.mrb[0].mxu0
    %v1737 = vadd.f32 0.0, %v1736
    %v1738 = vpop.f32.mrb[0].mxu0
    %1739 = vmatprep.mubr.f32.mxu0 0.0
    %1740 = vmatmul.mubr.f32.gmra.mrb[0].mxu0 %v1668
    %v1741 = vpop.f32.mrb[0].mxu0
    %v1742 = vadd.f32 0.0, %v1741
    %v1743 = vpop.f32.mrb[0].mxu0
    %1744 = vdwg.mxu0
    %v1746 = vsel %vm293, %v1737, 0
    %v1749 = vsel %vm293, %v1742, 0
    %1751 = vmatprep.subr.mxu0 0.0
    %1752 = vmatpush1.msra.mxu0 %v1167
    %1753 = vmatprep.subr.mxu0 0.0
    %1754 = vmatpush1.msra.mxu0 %v1168
    %1755 = vmatprep.subr.mxu0 0.0
    %1756 = vmatpush1.msra.mxu0 0.0
    %1757 = vmatprep.subr.mxu0 0.0
    %1758 = vmatpush1.msra.mxu0 0.0
    %1759 = vmatprep.subr.mxu0 0.0
    %1760 = vmatpush1.msra.mxu0 0.0
    %1761 = vmatprep.subr.mxu0 0.0
    %1762 = vmatpush1.msra.mxu0 0.0
    %1763 = vmatprep.subr.mxu0 0.0
    %1764 = vmatpush1.msra.mxu0 0.0
    %1765 = vmatprep.subr.mxu0 0.0
    %1766 = vmatpush1.msra.mxu0 0.0
    %1767 = vmatprep.subr.mxu0 0.0
    %1768 = vmatpush1.msra.mxu0 0.0
    %1769 = vmatprep.subr.mxu0 0.0
    %1770 = vmatpush1.msra.mxu0 0.0
    %1771 = vmatprep.subr.mxu0 0.0
    %1772 = vmatpush1.msra.mxu0 0.0
    %1773 = vmatprep.subr.mxu0 0.0
    %1774 = vmatpush1.msra.mxu0 0.0
    %1775 = vmatprep.subr.mxu0 0.0
    %1776 = vmatpush1.msra.mxu0 0.0
    %1777 = vmatprep.subr.mxu0 0.0
    %1778 = vmatpush1.msra.mxu0 0.0
    %1779 = vmatprep.subr.mxu0 0.0
    %1780 = vmatpush1.msra.mxu0 0.0
    %1781 = vmatprep.subr.mxu0 0.0
    %1782 = vmatpush1.msra.mxu0 0.0
    %1783 = vmatprep.subr.mxu0 0.0
    %1784 = vmatpush1.msra.mxu0 0.0
    %1785 = vmatprep.subr.mxu0 0.0
    %1786 = vmatpush1.msra.mxu0 0.0
    %1787 = vmatprep.subr.mxu0 0.0
    %1788 = vmatpush1.msra.mxu0 0.0
    %1789 = vmatprep.subr.mxu0 0.0
    %1790 = vmatpush1.msra.mxu0 0.0
    %1791 = vmatprep.subr.mxu0 0.0
    %1792 = vmatpush1.msra.mxu0 0.0
    %1793 = vmatprep.subr.mxu0 0.0
    %1794 = vmatpush1.msra.mxu0 0.0
    %1795 = vmatprep.subr.mxu0 0.0
    %1796 = vmatpush1.msra.mxu0 0.0
    %1797 = vmatprep.subr.mxu0 0.0
    %1798 = vmatpush1.msra.mxu0 0.0
    %1799 = vmatprep.subr.mxu0 0.0
    %1800 = vmatpush1.msra.mxu0 0.0
    %1801 = vmatprep.subr.mxu0 0.0
    %1802 = vmatpush1.msra.mxu0 0.0
    %1803 = vmatprep.subr.mxu0 0.0
    %1804 = vmatpush1.msra.mxu0 0.0
    %1805 = vmatprep.subr.mxu0 0.0
    %1806 = vmatpush1.msra.mxu0 0.0
    %1807 = vmatprep.subr.mxu0 0.0
    %1808 = vmatpush1.msra.mxu0 0.0
    %1809 = vmatprep.subr.mxu0 0.0
    %1810 = vmatpush1.msra.mxu0 0.0
    %1811 = vmatprep.subr.mxu0 0.0
    %1812 = vmatpush1.msra.mxu0 0.0
    %1813 = vmatprep.subr.mxu0 0.0
    %1814 = vmatpush1.msra.mxu0 0.0
    %1815 = vmatprep.mubr.f32.mxu0 0.0
    %1816 = vmatmul.mubr.f32.gmra.mrb[0].mxu0 %v1746
    %v1817 = vpop.f32.mrb[0].mxu0
    %v1818 = vadd.f32 0.0, %v1817
    %v1819 = vpop.f32.mrb[0].mxu0
    %1820 = vmatprep.mubr.f32.mxu0 0.0
    %1821 = vmatmul.mubr.f32.gmra.mrb[0].mxu0 %v1749
    %v1822 = vpop.f32.mrb[0].mxu0
    %v1823 = vadd.f32 0.0, %v1822
    %v1824 = vpop.f32.mrb[0].mxu0
    %1825 = vdwg.mxu0
    %v1826 = vadd.f32 %v1543, %v1818
    %v1827 = vadd.f32 %v1544, %v1823
    %v1828 = vadd.f32 %v1826, %v1155
    %v1829 = vadd.f32 %v1827, %v1156
    %s1830 = scalar_lea.vmem %s9, 1
    %v1831 = vld [vmem:[%s1830] sm:$0x1]
    %s1832 = scalar_lea.vmem %s10, 1
    %v1833 = vld [vmem:[%s1832] sm:$0x1]
    %v1834 = vsel %vm144, %v1828, 0.0
    %1835 = vadd.xlane.f32.xlu0 %v1834
    %v1836 = vpop.xlane.xlu0 %1835
    %v1837 = vsel %vm144, %v1829, 0.0
    %1838 = vadd.xlane.f32.xlu0 %v1837
    %v1839 = vpop.xlane.xlu0 %1838
    %v1840 = vmul.f32 %v1836, %v151
    %v1841 = vmul.f32 %v1839, %v151
    %v1842 = vsub.f32 %v1828, %v1840
    %v1843 = vsub.f32 %v1829, %v1841
    %v1844 = vmul.f32 %v1842, %v1842
    %v1845 = vmul.f32 %v1843, %v1843
    %v1846 = vsel %vm144, %v1844, 0.0
    %1847 = vadd.xlane.f32.xlu0 %v1846
    %v1848 = vpop.xlane.xlu0 %1847
    %v1849 = vsel %vm144, %v1845, 0.0
    %1850 = vadd.xlane.f32.xlu0 %v1849
    %v1851 = vpop.xlane.xlu0 %1850
    %v1852 = vmul.f32 %v1848, %v151
    %v1853 = vmul.f32 %v1851, %v151
    %v1854 = vadd.f32 %v1852, 1e-12
    %v1855 = vadd.f32 %v1853, 1e-12
    %v1856 = vrsqrt.pop %v1854
    %v1857 = vrsqrt.pop %v1855
    %v1858 = vmul.f32 %v1842, %v1856
    %v1859 = vmul.f32 %v1843, %v1857
    %v1861 = vlaneseq
    %v1862 = vshrl.u32 %v1861, 7
    %v1863 = vsub.s32 0, %v1862
    %v1864 = vrot.slane %v1831, %v1863
    %v1866 = vmul.f32 %v1858, %v1864
    %v1867 = vmul.f32 %v1859, %v1864
    %v1869 = vlaneseq
    %v1870 = vshrl.u32 %v1869, 7
    %v1871 = vsub.s32 0, %v1870
    %v1872 = vrot.slane %v1833, %v1871
    %v1874 = vadd.f32 %v1866, %v1872
    %v1875 = vadd.f32 %v1867, %v1872
    %s1876 = scalar_lea.vmem %s11, 32
    %v1877 = vld [vmem:[%s1876] sm:$0xff]
    %v1878 = vld [vmem:[%s1876 + $0x8] sm:$0xff]
    %v1879 = vld [vmem:[%s1876 + $0x10] sm:$0xff]
    %v1880 = vld [vmem:[%s1876 + $0x18] sm:$0xff]
    %s1881 = scalar_lea.vmem [#allocation2], 1
    %v1882 = vld [vmem:[%s1881] sm:$0x1]
    %v1884 = vlaneseq
    %v1885 = vshrl.u32 %v1884, 7
    %v1886 = vsub.s32 0, %v1885
    %v1887 = vrot.slane %v1882, %v1886
    %v1890 = vsel %vm144, %v1874, 0
    %v1893 = vsel %vm144, %v1875, 0
    %1895 = vmatprep.subr.mxu0 0.0
    %1896 = vmatpush1.msra.mxu0 %v1877
    %1897 = vmatprep.subr.mxu0 0.0
    %1898 = vmatpush1.msra.mxu0 %v1878
    %1899 = vmatprep.subr.mxu0 0.0
    %1900 = vmatpush1.msra.mxu0 %v1879
    %1901 = vmatprep.subr.mxu0 0.0
    %1902 = vmatpush1.msra.mxu0 %v1880
    %1903 = vmatprep.subr.mxu0 0.0
    %1904 = vmatpush1.msra.mxu0 0.0
    %1905 = vmatprep.subr.mxu0 0.0
    %1906 = vmatpush1.msra.mxu0 0.0
    %1907 = vmatprep.subr.mxu0 0.0
    %1908 = vmatpush1.msra.mxu0 0.0
    %1909 = vmatprep.subr.mxu0 0.0
    %1910 = vmatpush1.msra.mxu0 0.0
    %1911 = vmatprep.subr.mxu0 0.0
    %1912 = vmatpush1.msra.mxu0 0.0
    %1913 = vmatprep.subr.mxu0 0.0
    %1914 = vmatpush1.msra.mxu0 0.0
    %1915 = vmatprep.subr.mxu0 0.0
    %1916 = vmatpush1.msra.mxu0 0.0
    %1917 = vmatprep.subr.mxu0 0.0
    %1918 = vmatpush1.msra.mxu0 0.0
    %1919 = vmatprep.subr.mxu0 0.0
    %1920 = vmatpush1.msra.mxu0 0.0
    %1921 = vmatprep.subr.mxu0 0.0
    %1922 = vmatpush1.msra.mxu0 0.0
    %1923 = vmatprep.subr.mxu0 0.0
    %1924 = vmatpush1.msra.mxu0 0.0
    %1925 = vmatprep.subr.mxu0 0.0
    %1926 = vmatpush1.msra.mxu0 0.0
    %1927 = vmatprep.subr.mxu0 0.0
    %1928 = vmatpush1.msra.mxu0 0.0
    %1929 = vmatprep.subr.mxu0 0.0
    %1930 = vmatpush1.msra.mxu0 0.0
    %1931 = vmatprep.subr.mxu0 0.0
    %1932 = vmatpush1.msra.mxu0 0.0
    %1933 = vmatprep.subr.mxu0 0.0
    %1934 = vmatpush1.msra.mxu0 0.0
    %1935 = vmatprep.subr.mxu0 0.0
    %1936 = vmatpush1.msra.mxu0 0.0
    %1937 = vmatprep.subr.mxu0 0.0
    %1938 = vmatpush1.msra.mxu0 0.0
    %1939 = vmatprep.subr.mxu0 0.0
    %1940 = vmatpush1.msra.mxu0 0.0
    %1941 = vmatprep.subr.mxu0 0.0
    %1942 = vmatpush1.msra.mxu0 0.0
    %1943 = vmatprep.subr.mxu0 0.0
    %1944 = vmatpush1.msra.mxu0 0.0
    %1945 = vmatprep.subr.mxu0 0.0
    %1946 = vmatpush1.msra.mxu0 0.0
    %1947 = vmatprep.subr.mxu0 0.0
    %1948 = vmatpush1.msra.mxu0 0.0
    %1949 = vmatprep.subr.mxu0 0.0
    %1950 = vmatpush1.msra.mxu0 0.0
    %1951 = vmatprep.subr.mxu0 0.0
    %1952 = vmatpush1.msra.mxu0 0.0
    %1953 = vmatprep.subr.mxu0 0.0
    %1954 = vmatpush1.msra.mxu0 0.0
    %1955 = vmatprep.subr.mxu0 0.0
    %1956 = vmatpush1.msra.mxu0 0.0
    %1957 = vmatprep.subr.mxu0 0.0
    %1958 = vmatpush1.msra.mxu0 0.0
    %1959 = vmatprep.mubr.f32.mxu0 0.0
    %1960 = vmatmul.mubr.f32.gmra.mrb[0].mxu0 %v1890
    %v1961 = vpop.f32.mrb[0].mxu0
    %v1962 = vadd.f32 %v1887, %v1961
    %v1963 = vpop.f32.mrb[0].mxu0
    %1964 = vmatprep.mubr.f32.mxu0 0.0
    %1965 = vmatmul.mubr.f32.gmra.mrb[0].mxu0 %v1893
    %v1966 = vpop.f32.mrb[0].mxu0
    %v1967 = vadd.f32 %v1887, %v1966
    %v1968 = vpop.f32.mrb[0].mxu0
    %1969 = vdwg.mxu0
    %v1970 = vmul.f32 %v1962, 0.5
    %v1971 = vmul.f32 %v1967, 0.5
    %v1972 = vmul.f32 %v1962, 0.044715
    %v1973 = vmul.f32 %v1967, 0.044715
    %v1974 = vmul.f32 %v1972, %v1962
    %v1975 = vmul.f32 %v1973, %v1967
    %v1976 = vmul.f32 %v1974, %v1962
    %v1977 = vmul.f32 %v1975, %v1967
    %v1978 = vadd.f32 %v1962, %v1976
    %v1979 = vadd.f32 %v1967, %v1977
    %v1980 = vmul.f32 %v1978, 0.7978846
    %v1981 = vmul.f32 %v1979, 0.7978846
    %v1982 = vtanh.pop %v1980
    %v1983 = vtanh.pop %v1981
    %v1984 = vadd.f32 %v1982, 1.0
    %v1985 = vadd.f32 %v1983, 1.0
    %v1986 = vmul.f32 %v1970, %v1984
    %v1987 = vmul.f32 %v1971, %v1985
    %s1988 = scalar_lea.vmem %s13, 64
    %v1989 = vld [vmem:[%s1988] sm:$0xff]
    %v1990 = vld [vmem:[%s1988 + $0x8] sm:$0xff]
    %v1991 = vld [vmem:[%s1988 + $0x10] sm:$0xff]
    %v1992 = vld [vmem:[%s1988 + $0x18] sm:$0xff]
    %v1993 = vld [vmem:[%s1988 + $0x20] sm:$0xff]
    %v1994 = vld [vmem:[%s1988 + $0x28] sm:$0xff]
    %v1995 = vld [vmem:[%s1988 + $0x30] sm:$0xff]
    %v1996 = vld [vmem:[%s1988 + $0x38] sm:$0xff]
    %s1997 = scalar_lea.vmem %s14, 1
    %v1998 = vld [vmem:[%s1997] sm:$0x1]
    %v2000 = vlaneseq
    %v2001 = vshrl.u32 %v2000, 7
    %v2002 = vsub.s32 0, %v2001
    %v2003 = vrot.slane %v1998, %v2002
    %v2006 = vsel %vm1029, %v1986, 0
    %v2009 = vsel %vm1029, %v1987, 0
    %2011 = vmatprep.subr.mxu0 0.0
    %2012 = vmatpush1.msra.mxu0 %v1989
    %2013 = vmatprep.subr.mxu0 0.0
    %2014 = vmatpush1.msra.mxu0 %v1990
    %2015 = vmatprep.subr.mxu0 0.0
    %2016 = vmatpush1.msra.mxu0 %v1991
    %2017 = vmatprep.subr.mxu0 0.0
    %2018 = vmatpush1.msra.mxu0 %v1992
    %2019 = vmatprep.subr.mxu0 0.0
    %2020 = vmatpush1.msra.mxu0 %v1993
    %2021 = vmatprep.subr.mxu0 0.0
    %2022 = vmatpush1.msra.mxu0 %v1994
    %2023 = vmatprep.subr.mxu0 0.0
    %2024 = vmatpush1.msra.mxu0 %v1995
    %2025 = vmatprep.subr.mxu0 0.0
    %2026 = vmatpush1.msra.mxu0 %v1996
    %2027 = vmatprep.subr.mxu0 0.0
    %2028 = vmatpush1.msra.mxu0 0.0
    %2029 = vmatprep.subr.mxu0 0.0
    %2030 = vmatpush1.msra.mxu0 0.0
    %2031 = vmatprep.subr.mxu0 0.0
    %2032 = vmatpush1.msra.mxu0 0.0
    %2033 = vmatprep.subr.mxu0 0.0
    %2034 = vmatpush1.msra.mxu0 0.0
    %2035 = vmatprep.subr.mxu0 0.0
    %2036 = vmatpush1.msra.mxu0 0.0
    %2037 = vmatprep.subr.mxu0 0.0
    %2038 = vmatpush1.msra.mxu0 0.0
    %2039 = vmatprep.subr.mxu0 0.0
    %2040 = vmatpush1.msra.mxu0 0.0
    %2041 = vmatprep.subr.mxu0 0.0
    %2042 = vmatpush1.msra.mxu0 0.0
    %2043 = vmatprep.subr.mxu0 0.0
    %2044 = vmatpush1.msra.mxu0 0.0
    %2045 = vmatprep.subr.mxu0 0.0
    %2046 = vmatpush1.msra.mxu0 0.0
    %2047 = vmatprep.subr.mxu0 0.0
    %2048 = vmatpush1.msra.mxu0 0.0
    %2049 = vmatprep.subr.mxu0 0.0
    %2050 = vmatpush1.msra.mxu0 0.0
    %2051 = vmatprep.subr.mxu0 0.0
    %2052 = vmatpush1.msra.mxu0 0.0
    %2053 = vmatprep.subr.mxu0 0.0
    %2054 = vmatpush1.msra.mxu0 0.0
    %2055 = vmatprep.subr.mxu0 0.0
    %2056 = vmatpush1.msra.mxu0 0.0
    %2057 = vmatprep.subr.mxu0 0.0
    %2058 = vmatpush1.msra.mxu0 0.0
    %2059 = vmatprep.subr.mxu0 0.0
    %2060 = vmatpush1.msra.mxu0 0.0
    %2061 = vmatprep.subr.mxu0 0.0
    %2062 = vmatpush1.msra.mxu0 0.0
    %2063 = vmatprep.subr.mxu0 0.0
    %2064 = vmatpush1.msra.mxu0 0.0
    %2065 = vmatprep.subr.mxu0 0.0
    %2066 = vmatpush1.msra.mxu0 0.0
    %2067 = vmatprep.subr.mxu0 0.0
    %2068 = vmatpush1.msra.mxu0 0.0
    %2069 = vmatprep.subr.mxu0 0.0
    %2070 = vmatpush1.msra.mxu0 0.0
    %2071 = vmatprep.subr.mxu0 0.0
    %2072 = vmatpush1.msra.mxu0 0.0
    %2073 = vmatprep.subr.mxu0 0.0
    %2074 = vmatpush1.msra.mxu0 0.0
    %2075 = vmatprep.mubr.f32.mxu0 0.0
    %2076 = vmatmul.mubr.f32.gmra.mrb[0].mxu0 %v2006
    %v2077 = vpop.f32.mrb[0].mxu0
    %v2078 = vadd.f32 %v2003, %v2077
    %v2079 = vpop.f32.mrb[0].mxu0
    %2080 = vmatprep.mubr.f32.mxu0 0.0
    %2081 = vmatmul.mubr.f32.gmra.mrb[0].mxu0 %v2009
    %v2082 = vpop.f32.mrb[0].mxu0
    %v2083 = vadd.f32 %v2003, %v2082
    %v2084 = vpop.f32.mrb[0].mxu0
    %2085 = vdwg.mxu0
    %v2086 = vadd.f32 %v2078, %v1874
    %v2087 = vadd.f32 %v2083, %v1875
    %s2088 = scalar_lea.vmem %s15, 1
    %v2089 = vld [vmem:[%s2088] sm:$0x1]
    %s2090 = scalar_lea.vmem %s16, 1
    %v2091 = vld [vmem:[%s2090] sm:$0x1]
    %v2092 = vsel %vm144, %v2086, 0.0
    %2093 = vadd.xlane.f32.xlu0 %v2092
    %v2094 = vpop.xlane.xlu0 %2093
    %v2095 = vsel %vm144, %v2087, 0.0
    %2096 = vadd.xlane.f32.xlu0 %v2095
    %v2097 = vpop.xlane.xlu0 %2096
    %v2098 = vmul.f32 %v2094, %v151
    %v2099 = vmul.f32 %v2097, %v151
    %v2100 = vsub.f32 %v2086, %v2098
    %v2101 = vsub.f32 %v2087, %v2099
    %v2102 = vmul.f32 %v2100, %v2100
    %v2103 = vmul.f32 %v2101, %v2101
    %v2104 = vsel %vm144, %v2102, 0.0
    %2105 = vadd.xlane.f32.xlu0 %v2104
    %v2106 = vpop.xlane.xlu0 %2105
    %v2107 = vsel %vm144, %v2103, 0.0
    %2108 = vadd.xlane.f32.xlu0 %v2107
    %v2109 = vpop.xlane.xlu0 %2108
    %v2110 = vmul.f32 %v2106, %v151
    %v2111 = vmul.f32 %v2109, %v151
    %v2112 = vadd.f32 %v2110, 1e-12
    %v2113 = vadd.f32 %v2111, 1e-12
    %v2114 = vrsqrt.pop %v2112
    %v2115 = vrsqrt.pop %v2113
    %v2116 = vmul.f32 %v2100, %v2114
    %v2117 = vmul.f32 %v2101, %v2115
    %v2119 = vlaneseq
    %v2120 = vshrl.u32 %v2119, 7
    %v2121 = vsub.s32 0, %v2120
    %v2122 = vrot.slane %v2089, %v2121
    %v2124 = vmul.f32 %v2116, %v2122
    %v2125 = vmul.f32 %v2117, %v2122
    %v2127 = vlaneseq
    %v2128 = vshrl.u32 %v2127, 7
    %v2129 = vsub.s32 0, %v2128
    %v2130 = vrot.slane %v2091, %v2129
    %v2132 = vadd.f32 %v2124, %v2130
    %v2133 = vadd.f32 %v2125, %v2130
    %v2134 = vld [vmem:[#allocation5] sm:$0xff]
    %v2135 = vld [vmem:[#allocation5 + $0x8] sm:$0xff]
    %v2136 = vld [vmem:[#allocation5 + $0x10] sm:$0xff]
    %v2137 = vld [vmem:[#allocation5 + $0x18] sm:$0xff]
    %v2138 = vld [vmem:[#allocation5 + $0x20] sm:$0xff]
    %v2139 = vld [vmem:[#allocation5 + $0x28] sm:$0xff]
    %v2140 = vld [vmem:[#allocation5 + $0x30] sm:$0xff]
    %v2141 = vld [vmem:[#allocation5 + $0x38] sm:$0xff]
    %v2142 = vld [vmem:[%s4] sm:$0x3]
    %v2143 = vld [vmem:[#allocation7] sm:$0xff]
    %v2144 = vld [vmem:[#allocation7 + $0x8] sm:$0xff]
    %vm2145 = vcmask 64512
    %v2147 = vsel %vm2145, %v2142, 0
    %2149 = vmatprep.subr.mxu0 %v2144
    %2150 = vmatpush1.msra.mxu0 %v2143
    %2151 = vmatprep.subr.mxu0 0.0
    %2152 = vmatpush1.msra.mxu0 0.0
    %2153 = vmatprep.subr.mxu0 0.0
    %2154 = vmatpush1.msra.mxu0 0.0
    %2155 = vmatprep.subr.mxu0 0.0
    %2156 = vmatpush1.msra.mxu0 0.0
    %2157 = vmatprep.subr.mxu0 0.0
    %2158 = vmatpush1.msra.mxu0 0.0
    %2159 = vmatprep.subr.mxu0 0.0
    %2160 = vmatpush1.msra.mxu0 0.0
    %2161 = vmatprep.subr.mxu0 0.0
    %2162 = vmatpush1.msra.mxu0 0.0
    %2163 = vmatprep.subr.mxu0 0.0
    %2164 = vmatpush1.msra.mxu0 0.0
    %2165 = vmatprep.subr.mxu0 0.0
    %2166 = vmatpush1.msra.mxu0 0.0
    %2167 = vmatprep.subr.mxu0 0.0
    %2168 = vmatpush1.msra.mxu0 0.0
    %2169 = vmatprep.subr.mxu0 0.0
    %2170 = vmatpush1.msra.mxu0 0.0
    %2171 = vmatprep.subr.mxu0 0.0
    %2172 = vmatpush1.msra.mxu0 0.0
    %2173 = vmatprep.subr.mxu0 0.0
    %2174 = vmatpush1.msra.mxu0 0.0
    %2175 = vmatprep.subr.mxu0 0.0
    %2176 = vmatpush1.msra.mxu0 0.0
    %2177 = vmatprep.subr.mxu0 0.0
    %2178 = vmatpush1.msra.mxu0 0.0
    %2179 = vmatprep.subr.mxu0 0.0
    %2180 = vmatpush1.msra.mxu0 0.0
    %2181 = vmatprep.subr.mxu0 0.0
    %2182 = vmatpush1.msra.mxu0 0.0
    %2183 = vmatprep.subr.mxu0 0.0
    %2184 = vmatpush1.msra.mxu0 0.0
    %2185 = vmatprep.subr.mxu0 0.0
    %2186 = vmatpush1.msra.mxu0 0.0
    %2187 = vmatprep.subr.mxu0 0.0
    %2188 = vmatpush1.msra.mxu0 0.0
    %2189 = vmatprep.subr.mxu0 0.0
    %2190 = vmatpush1.msra.mxu0 0.0
    %2191 = vmatprep.subr.mxu0 0.0
    %2192 = vmatpush1.msra.mxu0 0.0
    %2193 = vmatprep.subr.mxu0 0.0
    %2194 = vmatpush1.msra.mxu0 0.0
    %2195 = vmatprep.subr.mxu0 0.0
    %2196 = vmatpush1.msra.mxu0 0.0
    %2197 = vmatprep.subr.mxu0 0.0
    %2198 = vmatpush1.msra.mxu0 0.0
    %2199 = vmatprep.subr.mxu0 0.0
    %2200 = vmatpush1.msra.mxu0 0.0
    %2201 = vmatprep.subr.mxu0 0.0
    %2202 = vmatpush1.msra.mxu0 0.0
    %2203 = vmatprep.subr.mxu0 0.0
    %2204 = vmatpush1.msra.mxu0 0.0
    %2205 = vmatprep.subr.mxu0 0.0
    %2206 = vmatpush1.msra.mxu0 0.0
    %2207 = vmatprep.subr.mxu0 0.0
    %2208 = vmatpush1.msra.mxu0 0.0
    %2209 = vmatprep.subr.mxu0 0.0
    %2210 = vmatpush1.msra.mxu0 0.0
    %2211 = vmatprep.subr.mxu0 0.0
    %2212 = vmatpush1.msra.mxu0 0.0
    %2213 = vmatprep.mubr.f32.mxu0 0.0
    %2214 = vmatmul.mubr.f32.gmra.mrb[0].mxu0 %v2147
    %v2215 = vpop.f32.mrb[0].mxu0
    %v2216 = vadd.f32 0.0, %v2215
    %v2217 = vpop.f32.mrb[0].mxu0
    %v2218 = vadd.f32 0.0, %v2217
    %2219 = vdwg.mxu0
    %v2222 = vrot.slane %v2133, 7
    %vm2223 = vcmask 1041409
    %v2224 = vsel %vm2223, %v2222, %v2132
    %v2225 = vsel %vm144, %v2224, 0
    %2227 = vmatprep.subr.mxu0 %v2135
    %2228 = vmatpush1.msra.mxu0 %v2134
    %2229 = vmatprep.subr.mxu0 %v2137
    %2230 = vmatpush1.msra.mxu0 %v2136
    %2231 = vmatprep.subr.mxu0 %v2139
    %2232 = vmatpush1.msra.mxu0 %v2138
    %2233 = vmatprep.subr.mxu0 %v2141
    %2234 = vmatpush1.msra.mxu0 %v2140
    %2235 = vmatprep.subr.mxu0 0.0
    %2236 = vmatpush1.msra.mxu0 0.0
    %2237 = vmatprep.subr.mxu0 0.0
    %2238 = vmatpush1.msra.mxu0 0.0
    %2239 = vmatprep.subr.mxu0 0.0
    %2240 = vmatpush1.msra.mxu0 0.0
    %2241 = vmatprep.subr.mxu0 0.0
    %2242 = vmatpush1.msra.mxu0 0.0
    %2243 = vmatprep.subr.mxu0 0.0
    %2244 = vmatpush1.msra.mxu0 0.0
    %2245 = vmatprep.subr.mxu0 0.0
    %2246 = vmatpush1.msra.mxu0 0.0
    %2247 = vmatprep.subr.mxu0 0.0
    %2248 = vmatpush1.msra.mxu0 0.0
    %2249 = vmatprep.subr.mxu0 0.0
    %2250 = vmatpush1.msra.mxu0 0.0
    %2251 = vmatprep.subr.mxu0 0.0
    %2252 = vmatpush1.msra.mxu0 0.0
    %2253 = vmatprep.subr.mxu0 0.0
    %2254 = vmatpush1.msra.mxu0 0.0
    %2255 = vmatprep.subr.mxu0 0.0
    %2256 = vmatpush1.msra.mxu0 0.0
    %2257 = vmatprep.subr.mxu0 0.0
    %2258 = vmatpush1.msra.mxu0 0.0
    %2259 = vmatprep.subr.mxu0 0.0
    %2260 = vmatpush1.msra.mxu0 0.0
    %2261 = vmatprep.subr.mxu0 0.0
    %2262 = vmatpush1.msra.mxu0 0.0
    %2263 = vmatprep.subr.mxu0 0.0
    %2264 = vmatpush1.msra.mxu0 0.0
    %2265 = vmatprep.subr.mxu0 0.0
    %2266 = vmatpush1.msra.mxu0 0.0
    %2267 = vmatprep.subr.mxu0 0.0
    %2268 = vmatpush1.msra.mxu0 0.0
    %2269 = vmatprep.subr.mxu0 0.0
    %2270 = vmatpush1.msra.mxu0 0.0
    %2271 = vmatprep.subr.mxu0 0.0
    %2272 = vmatpush1.msra.mxu0 0.0
    %2273 = vmatprep.subr.mxu0 0.0
    %2274 = vmatpush1.msra.mxu0 0.0
    %2275 = vmatprep.subr.mxu0 0.0
    %2276 = vmatpush1.msra.mxu0 0.0
    %2277 = vmatprep.subr.mxu0 0.0
    %2278 = vmatpush1.msra.mxu0 0.0
    %2279 = vmatprep.subr.mxu0 0.0
    %2280 = vmatpush1.msra.mxu0 0.0
    %2281 = vmatprep.subr.mxu0 0.0
    %2282 = vmatpush1.msra.mxu0 0.0
    %2283 = vmatprep.subr.mxu0 0.0
    %2284 = vmatpush1.msra.mxu0 0.0
    %2285 = vmatprep.subr.mxu0 0.0
    %2286 = vmatpush1.msra.mxu0 0.0
    %2287 = vmatprep.subr.mxu0 0.0
    %2288 = vmatpush1.msra.mxu0 0.0
    %2289 = vmatprep.subr.mxu0 0.0
    %2290 = vmatpush1.msra.mxu0 0.0
    %2291 = vmatprep.mubr.f32.mxu0 0.0
    %2292 = vmatmul.mubr.f32.gmra.mrb[0].mxu0 %v2225
    %v2293 = vpop.f32.mrb[0].mxu0
    %v2294 = vadd.f32 %v2216, %v2293
    %v2295 = vpop.f32.mrb[0].mxu0
    %v2296 = vadd.f32 %v2218, %v2295
    %2297 = vdwg.mxu0
    %v2298 = vld [vmem:[%s19] sm:$0x3]
    %v2300 = vlaneseq
    %v2301 = vshrl.u32 %v2300, 7
    %v2302 = vsub.s32 0, %v2301
    %v2303 = vrot.slane %v2298, %v2302
    %v2304 = vlaneseq
    %v2305 = vshrl.u32 %v2304, 7
    %v2306 = vsub.s32 1, %v2305
    %v2307 = vrot.slane %v2298, %v2306
    %v2310 = vadd.f32 %v2294, %v2303
    %v2311 = vadd.f32 %v2296, %v2307
    %v2312 = vmax.f32 %v2310, 0.0
    %v2313 = vmax.f32 %v2311, 0.0
    %v2314 = vld [vmem:[%s20] sm:$0xff]
    %v2315 = vld [vmem:[%s20 + $0x8] sm:$0xff]
    %v2316 = vld [vmem:[%s20 + $0x10] sm:$0xff]
    %v2317 = vld [vmem:[%s20 + $0x18] sm:$0xff]
    %v2318 = vld [vmem:[%s20 + $0x20] sm:$0xff]
    %v2319 = vld [vmem:[%s20 + $0x28] sm:$0xff]
    %v2320 = vld [vmem:[%s20 + $0x30] sm:$0xff]
    %v2321 = vld [vmem:[%s20 + $0x38] sm:$0xff]
    %v2322 = vld [vmem:[%s20 + $0x40] sm:$0xff]
    %v2323 = vld [vmem:[%s20 + $0x48] sm:$0xff]
    %v2324 = vld [vmem:[%s20 + $0x50] sm:$0xff]
    %v2325 = vld [vmem:[%s20 + $0x58] sm:$0xff]
    %v2326 = vld [vmem:[%s20 + $0x60] sm:$0xff]
    %v2327 = vld [vmem:[%s20 + $0x68] sm:$0xff]
    %v2328 = vld [vmem:[%s20 + $0x70] sm:$0xff]
    %v2329 = vld [vmem:[%s20 + $0x78] sm:$0xff]
    %v2330 = vld [vmem:[%s20 + $0x80] sm:$0xff]
    %v2331 = vld [vmem:[%s20 + $0x88] sm:$0xff]
    %v2332 = vld [vmem:[%s20 + $0x90] sm:$0xff]
    %v2333 = vld [vmem:[%s20 + $0x98] sm:$0xff]
    %v2334 = vld [vmem:[%s20 + $0xa0] sm:$0xff]
    %v2335 = vld [vmem:[%s20 + $0xa8] sm:$0xff]
    %v2336 = vld [vmem:[%s20 + $0xb0] sm:$0xff]
    %v2337 = vld [vmem:[%s20 + $0xb8] sm:$0xff]
    %v2338 = vld [vmem:[%s20 + $0xc0] sm:$0xff]
    %v2339 = vld [vmem:[%s20 + $0xc8] sm:$0xff]
    %v2340 = vld [vmem:[%s20 + $0xd0] sm:$0xff]
    %v2341 = vld [vmem:[%s20 + $0xd8] sm:$0xff]
    %v2342 = vld [vmem:[%s20 + $0xe0] sm:$0xff]
    %v2343 = vld [vmem:[%s20 + $0xe8] sm:$0xff]
    %v2344 = vld [vmem:[%s20 + $0xf0] sm:$0xff]
    %v2345 = vld [vmem:[%s20 + $0xf8] sm:$0xff]
    %v2346 = vld [vmem:[#allocation8] sm:$0x1]
    %v2348 = vlaneseq
    %v2349 = vshrl.u32 %v2348, 7
    %v2350 = vsub.s32 0, %v2349
    %v2351 = vrot.slane %v2346, %v2350
    %2353 = vmatprep.subr.mxu0 0.0
    %2354 = vmatpush1.msra.mxu0 %v2314
    %2355 = vmatprep.subr.mxu0 0.0
    %2356 = vmatpush1.msra.mxu0 %v2315
    %2357 = vmatprep.subr.mxu0 0.0
    %2358 = vmatpush1.msra.mxu0 %v2316
    %2359 = vmatprep.subr.mxu0 0.0
    %2360 = vmatpush1.msra.mxu0 %v2317
    %2361 = vmatprep.subr.mxu0 0.0
    %2362 = vmatpush1.msra.mxu0 %v2318
    %2363 = vmatprep.subr.mxu0 0.0
    %2364 = vmatpush1.msra.mxu0 %v2319
    %2365 = vmatprep.subr.mxu0 0.0
    %2366 = vmatpush1.msra.mxu0 %v2320
    %2367 = vmatprep.subr.mxu0 0.0
    %2368 = vmatpush1.msra.mxu0 %v2321
    %2369 = vmatprep.subr.mxu0 0.0
    %2370 = vmatpush1.msra.mxu0 %v2322
    %2371 = vmatprep.subr.mxu0 0.0
    %2372 = vmatpush1.msra.mxu0 %v2323
    %2373 = vmatprep.subr.mxu0 0.0
    %2374 = vmatpush1.msra.mxu0 %v2324
    %2375 = vmatprep.subr.mxu0 0.0
    %2376 = vmatpush1.msra.mxu0 %v2325
    %2377 = vmatprep.subr.mxu0 0.0
    %2378 = vmatpush1.msra.mxu0 %v2326
    %2379 = vmatprep.subr.mxu0 0.0
    %2380 = vmatpush1.msra.mxu0 %v2327
    %2381 = vmatprep.subr.mxu0 0.0
    %2382 = vmatpush1.msra.mxu0 %v2328
    %2383 = vmatprep.subr.mxu0 0.0
    %2384 = vmatpush1.msra.mxu0 %v2329
    %2385 = vmatprep.subr.mxu0 0.0
    %2386 = vmatpush1.msra.mxu0 %v2330
    %2387 = vmatprep.subr.mxu0 0.0
    %2388 = vmatpush1.msra.mxu0 %v2331
    %2389 = vmatprep.subr.mxu0 0.0
    %2390 = vmatpush1.msra.mxu0 %v2332
    %2391 = vmatprep.subr.mxu0 0.0
    %2392 = vmatpush1.msra.mxu0 %v2333
    %2393 = vmatprep.subr.mxu0 0.0
    %2394 = vmatpush1.msra.mxu0 %v2334
    %2395 = vmatprep.subr.mxu0 0.0
    %2396 = vmatpush1.msra.mxu0 %v2335
    %2397 = vmatprep.subr.mxu0 0.0
    %2398 = vmatpush1.msra.mxu0 %v2336
    %2399 = vmatprep.subr.mxu0 0.0
    %2400 = vmatpush1.msra.mxu0 %v2337
    %2401 = vmatprep.subr.mxu0 0.0
    %2402 = vmatpush1.msra.mxu0 %v2338
    %2403 = vmatprep.subr.mxu0 0.0
    %2404 = vmatpush1.msra.mxu0 %v2339
    %2405 = vmatprep.subr.mxu0 0.0
    %2406 = vmatpush1.msra.mxu0 %v2340
    %2407 = vmatprep.subr.mxu0 0.0
    %2408 = vmatpush1.msra.mxu0 %v2341
    %2409 = vmatprep.subr.mxu0 0.0
    %2410 = vmatpush1.msra.mxu0 %v2342
    %2411 = vmatprep.subr.mxu0 0.0
    %2412 = vmatpush1.msra.mxu0 %v2343
    %2413 = vmatprep.subr.mxu0 0.0
    %2414 = vmatpush1.msra.mxu0 %v2344
    %2415 = vmatprep.subr.mxu0 0.0
    %2416 = vmatpush1.msra.mxu0 %v2345
    %2417 = vmatprep.mubr.f32.mxu0 %v2313
    %2418 = vmatmul.mubr.f32.gmra.mrb[0].mxu0 %v2312
    %v2419 = vpop.f32.mrb[0].mxu0
    %v2420 = vadd.f32 %v2351, %v2419
    %v2421 = vpop.f32.mrb[0].mxu0
    %2422 = vdwg.mxu0
    %v2423 = vmax.f32 %v2420, 0.0
    %v2424 = vld [vmem:[%s22] sm:$0xff]
    %v2425 = vld [vmem:[%s22 + $0x8] sm:$0xff]
    %v2426 = vld [vmem:[%s22 + $0x10] sm:$0xff]
    %v2427 = vld [vmem:[%s22 + $0x18] sm:$0xff]
    %v2428 = vld [vmem:[%s22 + $0x20] sm:$0xff]
    %v2429 = vld [vmem:[%s22 + $0x28] sm:$0xff]
    %v2430 = vld [vmem:[%s22 + $0x30] sm:$0xff]
    %v2431 = vld [vmem:[%s22 + $0x38] sm:$0xff]
    %v2432 = vld [vmem:[%s22 + $0x40] sm:$0xff]
    %v2433 = vld [vmem:[%s22 + $0x48] sm:$0xff]
    %v2434 = vld [vmem:[%s22 + $0x50] sm:$0xff]
    %v2435 = vld [vmem:[%s22 + $0x58] sm:$0xff]
    %v2436 = vld [vmem:[%s22 + $0x60] sm:$0xff]
    %v2437 = vld [vmem:[%s22 + $0x68] sm:$0xff]
    %v2438 = vld [vmem:[%s22 + $0x70] sm:$0xff]
    %v2439 = vld [vmem:[%s22 + $0x78] sm:$0xff]
    %v2440 = vld [vmem:[#allocation10] sm:$0x1]
    %v2442 = vlaneseq
    %v2443 = vshrl.u32 %v2442, 7
    %v2444 = vsub.s32 0, %v2443
    %v2445 = vrot.slane %v2440, %v2444
    %2447 = vmatprep.subr.mxu0 0.0
    %2448 = vmatpush1.msra.mxu0 %v2424
    %2449 = vmatprep.subr.mxu0 0.0
    %2450 = vmatpush1.msra.mxu0 %v2425
    %2451 = vmatprep.subr.mxu0 0.0
    %2452 = vmatpush1.msra.mxu0 %v2426
    %2453 = vmatprep.subr.mxu0 0.0
    %2454 = vmatpush1.msra.mxu0 %v2427
    %2455 = vmatprep.subr.mxu0 0.0
    %2456 = vmatpush1.msra.mxu0 %v2428
    %2457 = vmatprep.subr.mxu0 0.0
    %2458 = vmatpush1.msra.mxu0 %v2429
    %2459 = vmatprep.subr.mxu0 0.0
    %2460 = vmatpush1.msra.mxu0 %v2430
    %2461 = vmatprep.subr.mxu0 0.0
    %2462 = vmatpush1.msra.mxu0 %v2431
    %2463 = vmatprep.subr.mxu0 0.0
    %2464 = vmatpush1.msra.mxu0 %v2432
    %2465 = vmatprep.subr.mxu0 0.0
    %2466 = vmatpush1.msra.mxu0 %v2433
    %2467 = vmatprep.subr.mxu0 0.0
    %2468 = vmatpush1.msra.mxu0 %v2434
    %2469 = vmatprep.subr.mxu0 0.0
    %2470 = vmatpush1.msra.mxu0 %v2435
    %2471 = vmatprep.subr.mxu0 0.0
    %2472 = vmatpush1.msra.mxu0 %v2436
    %2473 = vmatprep.subr.mxu0 0.0
    %2474 = vmatpush1.msra.mxu0 %v2437
    %2475 = vmatprep.subr.mxu0 0.0
    %2476 = vmatpush1.msra.mxu0 %v2438
    %2477 = vmatprep.subr.mxu0 0.0
    %2478 = vmatpush1.msra.mxu0 %v2439
    %2479 = vmatprep.subr.mxu0 0.0
    %2480 = vmatpush1.msra.mxu0 0.0
    %2481 = vmatprep.subr.mxu0 0.0
    %2482 = vmatpush1.msra.mxu0 0.0
    %2483 = vmatprep.subr.mxu0 0.0
    %2484 = vmatpush1.msra.mxu0 0.0
    %2485 = vmatprep.subr.mxu0 0.0
    %2486 = vmatpush1.msra.mxu0 0.0
    %2487 = vmatprep.subr.mxu0 0.0
    %2488 = vmatpush1.msra.mxu0 0.0
    %2489 = vmatprep.subr.mxu0 0.0
    %2490 = vmatpush1.msra.mxu0 0.0
    %2491 = vmatprep.subr.mxu0 0.0
    %2492 = vmatpush1.msra.mxu0 0.0
    %2493 = vmatprep.subr.mxu0 0.0
    %2494 = vmatpush1.msra.mxu0 0.0
    %2495 = vmatprep.subr.mxu0 0.0
    %2496 = vmatpush1.msra.mxu0 0.0
    %2497 = vmatprep.subr.mxu0 0.0
    %2498 = vmatpush1.msra.mxu0 0.0
    %2499 = vmatprep.subr.mxu0 0.0
    %2500 = vmatpush1.msra.mxu0 0.0
    %2501 = vmatprep.subr.mxu0 0.0
    %2502 = vmatpush1.msra.mxu0 0.0
    %2503 = vmatprep.subr.mxu0 0.0
    %2504 = vmatpush1.msra.mxu0 0.0
    %2505 = vmatprep.subr.mxu0 0.0
    %2506 = vmatpush1.msra.mxu0 0.0
    %2507 = vmatprep.subr.mxu0 0.0
    %2508 = vmatpush1.msra.mxu0 0.0
    %2509 = vmatprep.subr.mxu0 0.0
    %2510 = vmatpush1.msra.mxu0 0.0
    %2511 = vmatprep.mubr.f32.mxu0 0.0
    %2512 = vmatmul.mubr.f32.gmra.mrb[0].mxu0 %v2423
    %v2513 = vpop.f32.mrb[0].mxu0
    %v2514 = vadd.f32 %v2445, %v2513
    %v2515 = vpop.f32.mrb[0].mxu0
    %2516 = vdwg.mxu0
    %2517 = vst [vmem:[#allocation11] sm:$0x3] %v2514
    // Predicated region
    $region118: #{distilbert_with_features.1} parent=1 // pred_check
      _
    $region119: #{distilbert_with_features.1} parent=1 // pred_check_branch
      %2519 = sbr.rel (0) target = $region121
    $region120: #{distilbert_with_features.1} parent=1 // pred_region
      %s2521 = ssub.s32 32, 32
      %2522 = vsyncadd [#allocation4], %s2521
      %s2524 = sshll.u32 [#allocation11], 4
      %s2525 = int_to_ptr.vmem [resolvable:$true] %s2524
      %2527 = dma.vmem_to_hbm [thread:$0]  %s2525, 32, %s24, [#allocation4]
    $region121: #{distilbert_with_features.1} parent=1 // pred_fallthru
      _
    // Predicated region
    $region122: #{distilbert_with_features.1} parent=1 // pred_check
      _
    $region123: #{distilbert_with_features.1} parent=1 // pred_check_branch
      %2529 = sbr.rel (0) target = $region125
    $region124: #{distilbert_with_features.1} parent=1 // pred_region
      %2530 = dma.done [#allocation4], 32
    $region125: #{distilbert_with_features.1} parent=1 // pred_fallthru
      _
    %2531 = vsyncpa [#allocation3], 1
    %2532 = vsyncpa [#allocation6], 1
    %2533 = vsyncpa [#allocation9], 1
    %2534 = vsyncpa [#allocation4], 1

</llo_original>
